<compile_context>
chip_gen: v6e
topology: v6e:2x2x1
jax: 0.10.0
libtpu: 0.0.40
codegen_flags: <defaults>
</compile_context>

<pallas_src>
import functools

import jax
import jax.numpy as jnp
from jax.experimental import pallas as pl
from jax.experimental.pallas import tpu as pltpu

NORM_EPS = 1e-05


def _linformer_attn_kernel(x_ref, xkv_ref,
                           wq_ref, bq_ref,
                           wkv_ref, bkv_ref,
                           wp_ref, bp_ref,
                           o_ref,
                           ctx_ref,
                           *, num_heads, head_dim, dim):
    # x_ref:   (1, TQ, C) bf16  query tokens for this (batch, q-tile) step
    # xkv_ref: (1, Nk, C) bf16  (possibly spatially-reduced) key/value tokens
    x = x_ref[0]          # (TQ, C)
    xkv = xkv_ref[0]      # (Nk, C)

    # ---- projections (MXU, bf16 operands, f32 accumulation) ----
    # scale is already folded into wq/bq on the host.
    q = jnp.dot(x, wq_ref[...], preferred_element_type=jnp.float32) + bq_ref[...]
    # fused k|v projection: (Nk, C) @ (C, 2C)
    kv = jnp.dot(xkv, wkv_ref[...], preferred_element_type=jnp.float32) + bkv_ref[...]

    q = q.astype(jnp.bfloat16)
    kv = kv.astype(jnp.bfloat16)

    # ---- per-head attention (static loop, num_heads is small) ----
    for h in range(num_heads):
        lo = h * head_dim
        qh = q[:, lo:lo + head_dim]                    # (TQ, hd)
        kh = kv[:, lo:lo + head_dim]                   # (Nk, hd)
        vh = kv[:, dim + lo:dim + lo + head_dim]       # (Nk, hd)

        # scores: contraction over head_dim, no explicit transpose materialized
        s = jnp.einsum('nd,md->nm', qh, kh,
                       preferred_element_type=jnp.float32)        # (TQ, Nk) f32
        s = s - jnp.max(s, axis=-1, keepdims=True)                # stable softmax
        p = jnp.exp(s)
        l = jnp.sum(p, axis=-1, keepdims=True)                    # (TQ, 1)
        # attn_drop is nn.Dropout(0) -> identity
        ctx = jnp.dot(p.astype(jnp.bfloat16), vh,
                      preferred_element_type=jnp.float32)         # (TQ, hd) f32
        # normalize on the small context tensor via approx reciprocal (EUP slot)
        ctx = ctx * pl.reciprocal(l, approx=True)
        ctx_ref[:, lo:lo + head_dim] = ctx.astype(jnp.bfloat16)

    # ---- output projection on merged heads (single lane-dense matmul) ----
    out = jnp.dot(ctx_ref[...], wp_ref[...],
                  preferred_element_type=jnp.float32) + bp_ref[...]
    # proj_drop is nn.Dropout(0) -> identity
    o_ref[0] = out.astype(o_ref.dtype)


def _pick_q_tile(n):
    for t in (256, 128, 64, 32, 16, 8):
        if n % t == 0:
            return min(t, n)
    return n


def linformer_self_attention(x, params, *, head_dim=32, sr_ratio=1,
                             qk_scale=None, tq=None):
    B, N, C = x.shape
    num_heads = C // head_dim
    scale = qk_scale if qk_scale is not None else head_dim ** (-0.5)
    out_c = params["wp"].shape[1]

    # ---- spatial reduction glue (AvgPool1d + BatchNorm1d, training stats) ----
    if sr_ratio > 1:
        r2 = sr_ratio * sr_ratio
        Nk = N // r2
        pooled = x.reshape(B, Nk, r2, C).mean(axis=2)              # (B, Nk, C)
        mu = pooled.mean(axis=(0, 1))
        var = pooled.var(axis=(0, 1))                              # biased, as in BN training
        x_kv = (pooled - mu) / jnp.sqrt(var + NORM_EPS) \
               * params["bn_gamma"] + params["bn_beta"]
    else:
        Nk = N
        x_kv = x

    if tq is None:
        tq = _pick_q_tile(N)
    assert N % tq == 0, (N, tq)

    # ---- host-side param prep: fold scale into q, fuse k|v, cast to bf16 ----
    bf16 = jnp.bfloat16
    wq = (params["wq"] * scale).astype(bf16)
    bq = (params["bq"] * scale).astype(jnp.float32)
    wkv = jnp.concatenate([params["wk"], params["wv"]], axis=1).astype(bf16)
    bkv = jnp.concatenate([params["bk"], params["bv"]], axis=1).astype(jnp.float32)
    wp = params["wp"].astype(bf16)
    bp = params["bp"].astype(jnp.float32)
    xq_b = x.astype(bf16)
    xkv_b = x_kv.astype(bf16)

    kernel = functools.partial(_linformer_attn_kernel,
                               num_heads=num_heads, head_dim=head_dim, dim=C)

    # NOTE: constant-index weight specs are DMA'd only once (index map never
    # changes); their double-buffered VMEM footprint here is ~0.2 MiB, so an
    # explicit pl.Buffered(1) is unnecessary even on v7x's 64 MiB VMEM.
    def const2d(shape):
        return pl.BlockSpec(shape, lambda b, t: (0, 0))

    grid_spec = pltpu.PrefetchScalarGridSpec(
        num_scalar_prefetch=0,
        grid=(B, N // tq),
        in_specs=[
            pl.BlockSpec((1, tq, C), lambda b, t: (b, t, 0)),   # query tile
            pl.BlockSpec((1, Nk, C), lambda b, t: (b, 0, 0)),   # full kv tokens
            const2d((C, C)), const2d((1, C)),                   # q proj
            const2d((C, 2 * C)), const2d((1, 2 * C)),           # fused k|v proj
            const2d((C, out_c)), const2d((1, out_c)),           # out proj
        ],
        out_specs=pl.BlockSpec((1, tq, out_c), lambda b, t: (b, t, 0)),
        scratch_shapes=[pltpu.VMEM((tq, C), bf16)],             # merged-head context
    )

    return pl.pallas_call(
        kernel,
        out_shape=jax.ShapeDtypeStruct((B, N, out_c), x.dtype),
        grid_spec=grid_spec,
        compiler_params=pltpu.CompilerParams(
            dimension_semantics=("parallel", "parallel"),
            vmem_limit_bytes=32 * 1024 * 1024,
        ),
    )(xq_b, xkv_b, wq, bq, wkv, bkv, wp, bp)


def init_params(key, dim, outplanes, head_dim):
    """Deterministic param init mimicking nn.Linear default (uniform +-1/sqrt(fan_in))."""
    ks = jax.random.split(key, 8)

    def lin(kw, kb, fan_in, fan_out):
        bound = 1.0 / (fan_in ** 0.5)
        w = jax.random.uniform(kw, (fan_in, fan_out), jnp.float32, -bound, bound)
        b = jax.random.uniform(kb, (1, fan_out), jnp.float32, -bound, bound)
        return w, b

    wq, bq = lin(ks[0], ks[1], dim, dim)
    wk, bk = lin(ks[2], ks[3], dim, dim)
    wv, bv = lin(ks[4], ks[5], dim, dim)
    wp, bp = lin(ks[6], ks[7], dim, outplanes)
    return dict(wq=wq, bq=bq, wk=wk, bk=bk, wv=wv, bv=bv, wp=wp, bp=bp,
                bn_gamma=jnp.ones((dim,), jnp.float32),
                bn_beta=jnp.zeros((dim,), jnp.float32))


def reference(x, params, *, head_dim, sr_ratio, qk_scale=None):
    """Pure-JAX f32 reference reproducing the PyTorch forward."""
    B, N, C = x.shape
    H = C // head_dim
    scale = qk_scale if qk_scale is not None else head_dim ** (-0.5)

    q = x @ params["wq"] + params["bq"]
    if sr_ratio > 1:
        r2 = sr_ratio ** 2
        Nk = N // r2
        pooled = x.reshape(B, Nk, r2, C).mean(axis=2)
        mu = pooled.mean(axis=(0, 1))
        var = pooled.var(axis=(0, 1))
        x_ = (pooled - mu) / jnp.sqrt(var + NORM_EPS) * params["bn_gamma"] + params["bn_beta"]
    else:
        x_ = x
    k = x_ @ params["wk"] + params["bk"]
    v = x_ @ params["wv"] + params["bv"]

    q = q.reshape(B, N, H, head_dim).transpose(0, 2, 1, 3)       # (B,H,N,hd)
    k = k.reshape(B, -1, H, head_dim).transpose(0, 2, 3, 1)      # (B,H,hd,Nk)
    v = v.reshape(B, -1, H, head_dim).transpose(0, 2, 1, 3)      # (B,H,Nk,hd)

    attn = jax.nn.softmax((q @ k) * scale, axis=-1)
    out = (attn @ v).transpose(0, 2, 1, 3).reshape(B, N, C)
    return out @ params["wp"] + params["bp"]


if __name__ == "__main__":
    # Lane-dense small shapes: C multiple of 128, N multiple of sr_ratio**2
    # and of the query tile; head_dim=32 -> 4 heads, sr_ratio=2 -> Nk=128.
    B, N, C = 2, 512, 128
    HEAD_DIM = 32
    SR_RATIO = 2

    key = jax.random.PRNGKey(0)
    kx, kp = jax.random.split(key)
    x = jax.random.normal(kx, (B, N, C), jnp.float32)
    params = init_params(kp, dim=C, outplanes=C, head_dim=HEAD_DIM)

    out = linformer_self_attention(x, params, head_dim=HEAD_DIM, sr_ratio=SR_RATIO)
    out = jax.block_until_ready(out)

    ref = reference(x, params, head_dim=HEAD_DIM, sr_ratio=SR_RATIO)
    assert out.shape == (B, N, C), out.shape
    assert jnp.allclose(out, ref, atol=5e-2, rtol=5e-2), \
        f"max abs err = {jnp.max(jnp.abs(out - ref))}"

    print("KERNEL_OK")
</pallas_src>

<mosaic_0001>
module attributes {stable_mosaic.version = 11 : i64} {
  func.func @_linformer_attn_kernel(%arg0: i32, %arg1: i32, %arg2: memref<1x256x128xbf16, #tpu.memory_space<vmem>>, %arg3: memref<1x128x128xbf16, #tpu.memory_space<vmem>>, %arg4: memref<128x128xbf16, #tpu.memory_space<vmem>>, %arg5: memref<1x128xf32, #tpu.memory_space<vmem>>, %arg6: memref<128x256xbf16, #tpu.memory_space<vmem>>, %arg7: memref<1x256xf32, #tpu.memory_space<vmem>>, %arg8: memref<128x128xbf16, #tpu.memory_space<vmem>>, %arg9: memref<1x128xf32, #tpu.memory_space<vmem>>, %arg10: memref<1x256x128xf32, #tpu.memory_space<vmem>>, %arg11: memref<256x128xbf16, #tpu.memory_space<vmem>>) attributes {dimension_semantics = [#tpu.dimension_semantics<parallel>, #tpu.dimension_semantics<parallel>], iteration_bounds = array<i64: 2, 2>, scalar_prefetch = 0 : i64, scratch_operands = 1 : i64, tpu.core_type = #tpu.core_type<tc>, window_params = [{transform_indices = @transform_0, window_bounds = array<i64: 1, 256, 128>}, {transform_indices = @transform_1, window_bounds = array<i64: 1, 128, 128>}, {pipeline_mode = #tpu.pipeline_mode<synchronous>, transform_indices = @transform_2, window_bounds = array<i64: 128, 128>}, {pipeline_mode = #tpu.pipeline_mode<synchronous>, transform_indices = @transform_3, window_bounds = array<i64: 1, 128>}, {pipeline_mode = #tpu.pipeline_mode<synchronous>, transform_indices = @transform_4, window_bounds = array<i64: 128, 256>}, {pipeline_mode = #tpu.pipeline_mode<synchronous>, transform_indices = @transform_5, window_bounds = array<i64: 1, 256>}, {pipeline_mode = #tpu.pipeline_mode<synchronous>, transform_indices = @transform_6, window_bounds = array<i64: 128, 128>}, {pipeline_mode = #tpu.pipeline_mode<synchronous>, transform_indices = @transform_7, window_bounds = array<i64: 1, 128>}, {transform_indices = @transform_8, window_bounds = array<i64: 1, 256, 128>}]} {
    %c0 = arith.constant 0 : index
    %c0_0 = arith.constant 0 : index
    %c0_1 = arith.constant 0 : index
    %0 = vector.load %arg2[%c0, %c0_0, %c0_1] : memref<1x256x128xbf16, #tpu.memory_space<vmem>>, vector<1x256x128xbf16>
    %1 = vector.shape_cast %0 : vector<1x256x128xbf16> to vector<256x128xbf16>
    %c0_2 = arith.constant 0 : index
    %c0_3 = arith.constant 0 : index
    %c0_4 = arith.constant 0 : index
    %2 = vector.load %arg3[%c0_2, %c0_3, %c0_4] : memref<1x128x128xbf16, #tpu.memory_space<vmem>>, vector<1x128x128xbf16>
    %3 = vector.shape_cast %2 : vector<1x128x128xbf16> to vector<128x128xbf16>
    %c0_5 = arith.constant 0 : index
    %c0_6 = arith.constant 0 : index
    %4 = vector.load %arg4[%c0_5, %c0_6] : memref<128x128xbf16, #tpu.memory_space<vmem>>, vector<128x128xbf16>
    %cst = arith.constant dense<0.000000e+00> : vector<256x128xf32>
    %5 = tpu.matmul %1, %4, %cst {dimension_numbers = #tpu.dot_dimension_numbers<[1], [0], [0], [1], [0, 0, 1, 1], [], []>} : vector<256x128xbf16>, vector<128x128xbf16>, vector<256x128xf32> -> vector<256x128xf32>
    %c0_7 = arith.constant 0 : index
    %c0_8 = arith.constant 0 : index
    %6 = vector.load %arg5[%c0_7, %c0_8] : memref<1x128xf32, #tpu.memory_space<vmem>>, vector<1x128xf32>
    %7 = vector.broadcast %6 : vector<1x128xf32> to vector<256x128xf32>
    %8 = arith.addf %5, %7 : vector<256x128xf32>
    %c0_9 = arith.constant 0 : index
    %c0_10 = arith.constant 0 : index
    %9 = vector.load %arg6[%c0_9, %c0_10] : memref<128x256xbf16, #tpu.memory_space<vmem>>, vector<128x256xbf16>
    %cst_11 = arith.constant dense<0.000000e+00> : vector<128x256xf32>
    %10 = tpu.matmul %3, %9, %cst_11 {dimension_numbers = #tpu.dot_dimension_numbers<[1], [0], [0], [1], [0, 0, 1, 1], [], []>} : vector<128x128xbf16>, vector<128x256xbf16>, vector<128x256xf32> -> vector<128x256xf32>
    %c0_12 = arith.constant 0 : index
    %c0_13 = arith.constant 0 : index
    %11 = vector.load %arg7[%c0_12, %c0_13] : memref<1x256xf32, #tpu.memory_space<vmem>>, vector<1x256xf32>
    %12 = vector.broadcast %11 : vector<1x256xf32> to vector<128x256xf32>
    %13 = arith.addf %10, %12 : vector<128x256xf32>
    %14 = arith.truncf %8 : vector<256x128xf32> to vector<256x128xbf16>
    %15 = arith.truncf %13 : vector<128x256xf32> to vector<128x256xbf16>
    %16 = vector.extract_strided_slice %14 {offsets = [0, 0], sizes = [256, 32], strides = [1, 1]} : vector<256x128xbf16> to vector<256x32xbf16>
    %17 = vector.extract_strided_slice %15 {offsets = [0, 0], sizes = [128, 32], strides = [1, 1]} : vector<128x256xbf16> to vector<128x32xbf16>
    %18 = vector.extract_strided_slice %15 {offsets = [0, 128], sizes = [128, 32], strides = [1, 1]} : vector<128x256xbf16> to vector<128x32xbf16>
    "tpu.trace_start"() <{level = 10 : i32, message = "nd,md->nm"}> : () -> ()
    %cst_14 = arith.constant dense<0.000000e+00> : vector<256x128xf32>
    %19 = tpu.matmul %16, %17, %cst_14 {dimension_numbers = #tpu.dot_dimension_numbers<[1], [1], [0], [0], [0, 0, 1, 0], [], []>} : vector<256x32xbf16>, vector<128x32xbf16>, vector<256x128xf32> -> vector<256x128xf32>
    "tpu.trace_stop"() : () -> ()
    %cst_15 = arith.constant dense<0xFF800000> : vector<256xf32>
    %20 = vector.multi_reduction <maximumf>, %19, %cst_15 [1] : vector<256x128xf32> to vector<256xf32>
    %21 = vector.shape_cast %20 : vector<256xf32> to vector<256x1xf32>
    %22 = vector.broadcast %21 : vector<256x1xf32> to vector<256x128xf32>
    %23 = arith.subf %19, %22 : vector<256x128xf32>
    %24 = math.exp %23 : vector<256x128xf32>
    %cst_16 = arith.constant dense<0.000000e+00> : vector<256xf32>
    %25 = vector.multi_reduction <add>, %24, %cst_16 [1] : vector<256x128xf32> to vector<256xf32>
    %26 = vector.shape_cast %25 : vector<256xf32> to vector<256x1xf32>
    %27 = arith.truncf %24 : vector<256x128xf32> to vector<256x128xbf16>
    %cst_17 = arith.constant dense<0.000000e+00> : vector<256x32xf32>
    %28 = tpu.matmul %27, %18, %cst_17 {dimension_numbers = #tpu.dot_dimension_numbers<[1], [0], [0], [1], [0, 0, 1, 1], [], []>} : vector<256x128xbf16>, vector<128x32xbf16>, vector<256x32xf32> -> vector<256x32xf32>
    %29 = tpu.reciprocal %26 {approx = true} : vector<256x1xf32> -> vector<256x1xf32>
    %30 = vector.broadcast %29 : vector<256x1xf32> to vector<256x32xf32>
    %31 = arith.mulf %28, %30 : vector<256x32xf32>
    %32 = arith.truncf %31 : vector<256x32xf32> to vector<256x32xbf16>
    %c0_18 = arith.constant 0 : index
    %c0_19 = arith.constant 0 : index
    %33 = vector.load %arg11[%c0_18, %c0_19] : memref<256x128xbf16, #tpu.memory_space<vmem>>, vector<256x32xbf16>
    tpu.vector_store %arg11[%c0_18, %c0_19], %32 {strides = array<i32>} : memref<256x128xbf16, #tpu.memory_space<vmem>>, vector<256x32xbf16>,
    %34 = vector.extract_strided_slice %14 {offsets = [0, 32], sizes = [256, 32], strides = [1, 1]} : vector<256x128xbf16> to vector<256x32xbf16>
    %35 = vector.extract_strided_slice %15 {offsets = [0, 32], sizes = [128, 32], strides = [1, 1]} : vector<128x256xbf16> to vector<128x32xbf16>
    %36 = vector.extract_strided_slice %15 {offsets = [0, 160], sizes = [128, 32], strides = [1, 1]} : vector<128x256xbf16> to vector<128x32xbf16>
    "tpu.trace_start"() <{level = 10 : i32, message = "nd,md->nm"}> : () -> ()
    %cst_20 = arith.constant dense<0.000000e+00> : vector<256x128xf32>
    %37 = tpu.matmul %34, %35, %cst_20 {dimension_numbers = #tpu.dot_dimension_numbers<[1], [1], [0], [0], [0, 0, 1, 0], [], []>} : vector<256x32xbf16>, vector<128x32xbf16>, vector<256x128xf32> -> vector<256x128xf32>
    "tpu.trace_stop"() : () -> ()
    %cst_21 = arith.constant dense<0xFF800000> : vector<256xf32>
    %38 = vector.multi_reduction <maximumf>, %37, %cst_21 [1] : vector<256x128xf32> to vector<256xf32>
    %39 = vector.shape_cast %38 : vector<256xf32> to vector<256x1xf32>
    %40 = vector.broadcast %39 : vector<256x1xf32> to vector<256x128xf32>
    %41 = arith.subf %37, %40 : vector<256x128xf32>
    %42 = math.exp %41 : vector<256x128xf32>
    %cst_22 = arith.constant dense<0.000000e+00> : vector<256xf32>
    %43 = vector.multi_reduction <add>, %42, %cst_22 [1] : vector<256x128xf32> to vector<256xf32>
    %44 = vector.shape_cast %43 : vector<256xf32> to vector<256x1xf32>
    %45 = arith.truncf %42 : vector<256x128xf32> to vector<256x128xbf16>
    %cst_23 = arith.constant dense<0.000000e+00> : vector<256x32xf32>
    %46 = tpu.matmul %45, %36, %cst_23 {dimension_numbers = #tpu.dot_dimension_numbers<[1], [0], [0], [1], [0, 0, 1, 1], [], []>} : vector<256x128xbf16>, vector<128x32xbf16>, vector<256x32xf32> -> vector<256x32xf32>
    %47 = tpu.reciprocal %44 {approx = true} : vector<256x1xf32> -> vector<256x1xf32>
    %48 = vector.broadcast %47 : vector<256x1xf32> to vector<256x32xf32>
    %49 = arith.mulf %46, %48 : vector<256x32xf32>
    %50 = arith.truncf %49 : vector<256x32xf32> to vector<256x32xbf16>
    %c0_24 = arith.constant 0 : index
    %c32 = arith.constant 32 : index
    %51 = vector.load %arg11[%c0_24, %c32] : memref<256x128xbf16, #tpu.memory_space<vmem>>, vector<256x32xbf16>
    tpu.vector_store %arg11[%c0_24, %c32], %50 {strides = array<i32>} : memref<256x128xbf16, #tpu.memory_space<vmem>>, vector<256x32xbf16>,
    %52 = vector.extract_strided_slice %14 {offsets = [0, 64], sizes = [256, 32], strides = [1, 1]} : vector<256x128xbf16> to vector<256x32xbf16>
    %53 = vector.extract_strided_slice %15 {offsets = [0, 64], sizes = [128, 32], strides = [1, 1]} : vector<128x256xbf16> to vector<128x32xbf16>
    %54 = vector.extract_strided_slice %15 {offsets = [0, 192], sizes = [128, 32], strides = [1, 1]} : vector<128x256xbf16> to vector<128x32xbf16>
    "tpu.trace_start"() <{level = 10 : i32, message = "nd,md->nm"}> : () -> ()
    %cst_25 = arith.constant dense<0.000000e+00> : vector<256x128xf32>
    %55 = tpu.matmul %52, %53, %cst_25 {dimension_numbers = #tpu.dot_dimension_numbers<[1], [1], [0], [0], [0, 0, 1, 0], [], []>} : vector<256x32xbf16>, vector<128x32xbf16>, vector<256x128xf32> -> vector<256x128xf32>
    "tpu.trace_stop"() : () -> ()
    %cst_26 = arith.constant dense<0xFF800000> : vector<256xf32>
    %56 = vector.multi_reduction <maximumf>, %55, %cst_26 [1] : vector<256x128xf32> to vector<256xf32>
    %57 = vector.shape_cast %56 : vector<256xf32> to vector<256x1xf32>
    %58 = vector.broadcast %57 : vector<256x1xf32> to vector<256x128xf32>
    %59 = arith.subf %55, %58 : vector<256x128xf32>
    %60 = math.exp %59 : vector<256x128xf32>
    %cst_27 = arith.constant dense<0.000000e+00> : vector<256xf32>
    %61 = vector.multi_reduction <add>, %60, %cst_27 [1] : vector<256x128xf32> to vector<256xf32>
    %62 = vector.shape_cast %61 : vector<256xf32> to vector<256x1xf32>
    %63 = arith.truncf %60 : vector<256x128xf32> to vector<256x128xbf16>
    %cst_28 = arith.constant dense<0.000000e+00> : vector<256x32xf32>
    %64 = tpu.matmul %63, %54, %cst_28 {dimension_numbers = #tpu.dot_dimension_numbers<[1], [0], [0], [1], [0, 0, 1, 1], [], []>} : vector<256x128xbf16>, vector<128x32xbf16>, vector<256x32xf32> -> vector<256x32xf32>
    %65 = tpu.reciprocal %62 {approx = true} : vector<256x1xf32> -> vector<256x1xf32>
    %66 = vector.broadcast %65 : vector<256x1xf32> to vector<256x32xf32>
    %67 = arith.mulf %64, %66 : vector<256x32xf32>
    %68 = arith.truncf %67 : vector<256x32xf32> to vector<256x32xbf16>
    %c0_29 = arith.constant 0 : index
    %c64 = arith.constant 64 : index
    %69 = vector.load %arg11[%c0_29, %c64] : memref<256x128xbf16, #tpu.memory_space<vmem>>, vector<256x32xbf16>
    tpu.vector_store %arg11[%c0_29, %c64], %68 {strides = array<i32>} : memref<256x128xbf16, #tpu.memory_space<vmem>>, vector<256x32xbf16>,
    %70 = vector.extract_strided_slice %14 {offsets = [0, 96], sizes = [256, 32], strides = [1, 1]} : vector<256x128xbf16> to vector<256x32xbf16>
    %71 = vector.extract_strided_slice %15 {offsets = [0, 96], sizes = [128, 32], strides = [1, 1]} : vector<128x256xbf16> to vector<128x32xbf16>
    %72 = vector.extract_strided_slice %15 {offsets = [0, 224], sizes = [128, 32], strides = [1, 1]} : vector<128x256xbf16> to vector<128x32xbf16>
    "tpu.trace_start"() <{level = 10 : i32, message = "nd,md->nm"}> : () -> ()
    %cst_30 = arith.constant dense<0.000000e+00> : vector<256x128xf32>
    %73 = tpu.matmul %70, %71, %cst_30 {dimension_numbers = #tpu.dot_dimension_numbers<[1], [1], [0], [0], [0, 0, 1, 0], [], []>} : vector<256x32xbf16>, vector<128x32xbf16>, vector<256x128xf32> -> vector<256x128xf32>
    "tpu.trace_stop"() : () -> ()
    %cst_31 = arith.constant dense<0xFF800000> : vector<256xf32>
    %74 = vector.multi_reduction <maximumf>, %73, %cst_31 [1] : vector<256x128xf32> to vector<256xf32>
    %75 = vector.shape_cast %74 : vector<256xf32> to vector<256x1xf32>
    %76 = vector.broadcast %75 : vector<256x1xf32> to vector<256x128xf32>
    %77 = arith.subf %73, %76 : vector<256x128xf32>
    %78 = math.exp %77 : vector<256x128xf32>
    %cst_32 = arith.constant dense<0.000000e+00> : vector<256xf32>
    %79 = vector.multi_reduction <add>, %78, %cst_32 [1] : vector<256x128xf32> to vector<256xf32>
    %80 = vector.shape_cast %79 : vector<256xf32> to vector<256x1xf32>
    %81 = arith.truncf %78 : vector<256x128xf32> to vector<256x128xbf16>
    %cst_33 = arith.constant dense<0.000000e+00> : vector<256x32xf32>
    %82 = tpu.matmul %81, %72, %cst_33 {dimension_numbers = #tpu.dot_dimension_numbers<[1], [0], [0], [1], [0, 0, 1, 1], [], []>} : vector<256x128xbf16>, vector<128x32xbf16>, vector<256x32xf32> -> vector<256x32xf32>
    %83 = tpu.reciprocal %80 {approx = true} : vector<256x1xf32> -> vector<256x1xf32>
    %84 = vector.broadcast %83 : vector<256x1xf32> to vector<256x32xf32>
    %85 = arith.mulf %82, %84 : vector<256x32xf32>
    %86 = arith.truncf %85 : vector<256x32xf32> to vector<256x32xbf16>
    %c0_34 = arith.constant 0 : index
    %c96 = arith.constant 96 : index
    %87 = vector.load %arg11[%c0_34, %c96] : memref<256x128xbf16, #tpu.memory_space<vmem>>, vector<256x32xbf16>
    tpu.vector_store %arg11[%c0_34, %c96], %86 {strides = array<i32>} : memref<256x128xbf16, #tpu.memory_space<vmem>>, vector<256x32xbf16>,
    %c0_35 = arith.constant 0 : index
    %c0_36 = arith.constant 0 : index
    %88 = vector.load %arg11[%c0_35, %c0_36] : memref<256x128xbf16, #tpu.memory_space<vmem>>, vector<256x128xbf16>
    %c0_37 = arith.constant 0 : index
    %c0_38 = arith.constant 0 : index
    %89 = vector.load %arg8[%c0_37, %c0_38] : memref<128x128xbf16, #tpu.memory_space<vmem>>, vector<128x128xbf16>
    %cst_39 = arith.constant dense<0.000000e+00> : vector<256x128xf32>
    %90 = tpu.matmul %88, %89, %cst_39 {dimension_numbers = #tpu.dot_dimension_numbers<[1], [0], [0], [1], [0, 0, 1, 1], [], []>} : vector<256x128xbf16>, vector<128x128xbf16>, vector<256x128xf32> -> vector<256x128xf32>
    %c0_40 = arith.constant 0 : index
    %c0_41 = arith.constant 0 : index
    %91 = vector.load %arg9[%c0_40, %c0_41] : memref<1x128xf32, #tpu.memory_space<vmem>>, vector<1x128xf32>
    %92 = vector.broadcast %91 : vector<1x128xf32> to vector<256x128xf32>
    %93 = arith.addf %90, %92 : vector<256x128xf32>
    %c0_42 = arith.constant 0 : index
    %c0_43 = arith.constant 0 : index
    %c0_44 = arith.constant 0 : index
    %94 = vector.load %arg10[%c0_42, %c0_43, %c0_44] : memref<1x256x128xf32, #tpu.memory_space<vmem>>, vector<1x256x128xf32>
    %95 = vector.shape_cast %94 : vector<1x256x128xf32> to vector<256x128xf32>
    %96 = vector.shape_cast %93 : vector<256x128xf32> to vector<1x256x128xf32>
    tpu.vector_store %arg10[%c0_42, %c0_43, %c0_44], %96 {strides = array<i32>} : memref<1x256x128xf32, #tpu.memory_space<vmem>>, vector<1x256x128xf32>,
    return
  }
  func.func @transform_0(%arg0: i32, %arg1: i32) -> (i32, i32, i32) {
    %c0_i32 = arith.constant 0 : i32
    %c0_i32_0 = arith.constant 0 : i32
    return %arg0, %arg1, %c0_i32 : i32, i32, i32
  }
  func.func @transform_1(%arg0: i32, %arg1: i32) -> (i32, i32, i32) {
    %c0_i32 = arith.constant 0 : i32
    %c0_i32_0 = arith.constant 0 : i32
    %c0_i32_1 = arith.constant 0 : i32
    return %arg0, %c0_i32, %c0_i32_0 : i32, i32, i32
  }
  func.func @transform_2(%arg0: i32, %arg1: i32) -> (i32, i32) {
    %c0_i32 = arith.constant 0 : i32
    %c0_i32_0 = arith.constant 0 : i32
    %c0_i32_1 = arith.constant 0 : i32
    return %c0_i32, %c0_i32_0 : i32, i32
  }
  func.func @transform_3(%arg0: i32, %arg1: i32) -> (i32, i32) {
    %c0_i32 = arith.constant 0 : i32
    %c0_i32_0 = arith.constant 0 : i32
    %c0_i32_1 = arith.constant 0 : i32
    return %c0_i32, %c0_i32_0 : i32, i32
  }
  func.func @transform_4(%arg0: i32, %arg1: i32) -> (i32, i32) {
    %c0_i32 = arith.constant 0 : i32
    %c0_i32_0 = arith.constant 0 : i32
    %c0_i32_1 = arith.constant 0 : i32
    return %c0_i32, %c0_i32_0 : i32, i32
  }
  func.func @transform_5(%arg0: i32, %arg1: i32) -> (i32, i32) {
    %c0_i32 = arith.constant 0 : i32
    %c0_i32_0 = arith.constant 0 : i32
    %c0_i32_1 = arith.constant 0 : i32
    return %c0_i32, %c0_i32_0 : i32, i32
  }
  func.func @transform_6(%arg0: i32, %arg1: i32) -> (i32, i32) {
    %c0_i32 = arith.constant 0 : i32
    %c0_i32_0 = arith.constant 0 : i32
    %c0_i32_1 = arith.constant 0 : i32
    return %c0_i32, %c0_i32_0 : i32, i32
  }
  func.func @transform_7(%arg0: i32, %arg1: i32) -> (i32, i32) {
    %c0_i32 = arith.constant 0 : i32
    %c0_i32_0 = arith.constant 0 : i32
    %c0_i32_1 = arith.constant 0 : i32
    return %c0_i32, %c0_i32_0 : i32, i32
  }
  func.func @transform_8(%arg0: i32, %arg1: i32) -> (i32, i32, i32) {
    %c0_i32 = arith.constant 0 : i32
    %c0_i32_0 = arith.constant 0 : i32
    return %arg0, %arg1, %c0_i32 : i32, i32, i32
  }
}

</mosaic_0001>

<llo_original>
// kernel: tpu_custom_call.1
$region0: #{tpu_custom_call.1}
  #allocation0 [shape = 'u32[]', space=smem, size = 0x4, offset = 0x4, fixed_abs, tag = 'smem constant byte address 0x4 - core index']
  #allocation1 [shape = 'u32[144,128]{1,0:T(1,128)}', space=vmem, size = 0x12000, scoped, tag = 'internal scratch']
  #allocation2 [shape = 'bf16[256,128]{1,0:T(8,128)(2,1)}', space=vmem, size = 0x10000, scoped, tag = 'scratch operand']
  %s0 = inlined_call_operand.hbm [shape: bf16[2,512,128], index: 0, kind: input, shape index: {}]
  %s1 = inlined_call_operand.hbm [shape: bf16[2,128,128], index: 1, kind: input, shape index: {}]
  %s2 = inlined_call_operand.hbm [shape: bf16[128,128], index: 2, kind: input, shape index: {}]
  %s3 = inlined_call_operand.vmem [shape: f32[1,128], index: 3, kind: input, shape index: {}]
  %s4 = inlined_call_operand.hbm [shape: bf16[128,256], index: 4, kind: input, shape index: {}]
  %s5 = inlined_call_operand.vmem [shape: f32[1,256], index: 5, kind: input, shape index: {}]
  %s6 = inlined_call_operand.hbm [shape: bf16[128,128], index: 6, kind: input, shape index: {}]
  %s7 = inlined_call_operand.vmem [shape: f32[1,128], index: 7, kind: input, shape index: {}]
  %s8 = inlined_call_operand.hbm [shape: f32[2,512,128], index: 8, kind: output, shape index: {}]
  %s9 = sld [smem:[#allocation0]]
  $region85: #{tpu_custom_call.1} parent=0
    _
  %s11 = ssub.s32 1, %s9
  %s12 = scalar_select 0, %s11, %s9
  $region1: #{tpu_custom_call.1} parent=0
    #allocation3 [shape = 'u8[131072]{0}', space=vmem, size = 0x20000, scoped, tag = 'input window, operand 0']
    #allocation4 [shape = 's32[2]{0}', space=sflag, size = 0x8, scoped, tag = 'scoped memory for tpu_custom_call.1']
    #allocation5 [shape = 's32[2]{0}', space=sflag, size = 0x8, scoped, tag = 'scoped memory for tpu_custom_call.1']
    #allocation6 [shape = 'u8[65536]{0}', space=vmem, size = 0x10000, scoped, tag = 'input window, operand 1']
    #allocation7 [shape = 's32[2]{0}', space=sflag, size = 0x8, scoped, tag = 'scoped memory for tpu_custom_call.1']
    #allocation8 [shape = 'u8[32768]{0}', space=vmem, size = 0x8000, scoped, tag = 'input window, operand 2, single buffered']
    #allocation9 [shape = 'u8[65536]{0}', space=vmem, size = 0x10000, scoped, tag = 'input window, operand 4, single buffered']
    #allocation10 [shape = 's32[1]{0}', space=sflag, size = 0x4, scoped, tag = 'scoped memory for tpu_custom_call.1']
    #allocation11 [shape = 'u8[32768]{0}', space=vmem, size = 0x8000, scoped, tag = 'input window, operand 6, single buffered']
    #allocation12 [shape = 'u8[262144]{0}', space=vmem, size = 0x40000, scoped, tag = 'output window, operand 0']
    %13 = vsyncpa [#allocation4], 0
    %s14 = scalar_lea.sflag [#allocation4], 1
    %15 = vsyncpa %s14, 0
    %16 = vsyncpa [#allocation7], 0
    %s17 = scalar_lea.sflag [#allocation7], 1
    %18 = vsyncpa %s17, 0
    %19 = vsyncpa [#allocation10], 0
    %20 = vsyncpa [#allocation5], 0
    %s21 = scalar_lea.sflag [#allocation5], 1
    %22 = vsyncpa %s21, 0
    loop: start=0, step=1, limit=6
    $region2: #{tpu_custom_call.1} parent=1 // loop_pre_header
      _
    $region3: #{tpu_custom_call.1} parent=1 // loop_header
      %s24 = sphi 0, %s28
      %p25 = scmp.ge.s32.totalorder %s24, 6
      %s31 = sphi 0, %s43
      %s32 = sphi 0, %s39
      %s33 = sphi 0, %s31
      %s34 = sphi 0, %s32
      %s35 = sphi 0, %s33
      %s36 = sphi 0, %s34
      %s48 = sphi 0, %s50
      %s51 = sphi 0, %s48
      %s52 = sphi 0, %s51
      %s68 = sphi 0, %s52
      %s74 = sphi 0, %s76
      %s77 = sphi 0, %s74
      %s78 = sphi 0, %s77
      %s94 = sphi 0, %s78
      %s98 = sphi 0, %s98
      %s100 = sphi 0, %s98
      %s101 = sphi 0, %s100
      %s115 = sphi 0, %s101
      %s119 = sphi 0, %s119
      %s121 = sphi 0, %s119
      %s122 = sphi 0, %s121
      %s136 = sphi 0, %s122
      %s140 = sphi 0, %s140
      %s142 = sphi 0, %s140
      %s143 = sphi 0, %s142
      %s157 = sphi 0, %s143
      %s161 = sphi 0, %s161
      %s163 = sphi 0, %s161
      %s164 = sphi 0, %s163
      %s178 = sphi 0, %s164
      %s182 = sphi 0, %s182
      %s184 = sphi 0, %s182
      %s185 = sphi 0, %s184
      %s199 = sphi 0, %s185
      %s203 = sphi 0, %s203
      %s205 = sphi 0, %s203
      %s206 = sphi 0, %s205
      %s220 = sphi 0, %s206
      %s228 = sphi 0, %s230
      %s231 = sphi 0, %s228
      %s232 = sphi 0, %s231
      %s248 = sphi 0, %s232
    $region4: #{tpu_custom_call.1} parent=1 // loop_header_branch
      %27 = sbr.rel (%p25) target = $region8
    $region5: #{tpu_custom_call.1} parent=1 // loop_body
      %s29 = ssub.s32 %s24, 1
      %s30 = ssub.s32 %s24, 2
      %s37 = sadd.s32 1, %s32
      %p38 = scmp.ge.s32.totalorder %s37, 2
      %s39 = scalar_select %p38, 0, %s37
      %s40 = sadd.s32 1, %s31
      %s41 = scalar_select %p38, %s40, %s31
      %p42 = scmp.ge.s32.totalorder %s41, 2
      %s43 = scalar_select %p42, 0, %s41
      %s44 = ssub.s32 %s31, %s43
      %s45 = ssub.s32 %s32, %s39
      %s46 = sor.u32 %s44, %s45
      %p47 = scmp.eq.s32.totalorder %s46, 0
      %s49 = sadd.s32 %s48, 1
      %s50 = scalar_select %p47, %s48, %s49
      %p53 = pneg %p47
      %p54 = scmp.eq.s32.totalorder %s24, 3
      %p55 = por %p53, %p54
      %p56 = scmp.ne.s32.totalorder %s48, %s51
      %p57 = scmp.eq.s32.totalorder %s24, 0
      %p58 = por %p56, %p57
      %p59 = scmp.ne.s32.totalorder %s48, %s51
      %p60 = scmp.eq.s32.totalorder %s29, 3
      %p61 = por %p59, %p60
      %p62 = scmp.ne.s32.totalorder %s51, %s52
      %p63 = scmp.eq.s32.totalorder %s29, 0
      %p64 = por %p62, %p63
      %p65 = scmp.ne.s32.totalorder %s51, %s52
      %p66 = scmp.eq.s32.totalorder %s30, 3
      %p67 = por %p65, %p66
      %p69 = scmp.ne.s32.totalorder %s52, %s68
      %p70 = scmp.eq.s32.totalorder %s30, 0
      %p71 = por %p69, %p70
      %s72 = ssub.s32 %s31, %s43
      %p73 = scmp.eq.s32.totalorder %s72, 0
      %s75 = sadd.s32 %s74, 1
      %s76 = scalar_select %p73, %s74, %s75
      %p79 = pneg %p73
      %p80 = scmp.eq.s32.totalorder %s24, 3
      %p81 = por %p79, %p80
      %p82 = scmp.ne.s32.totalorder %s74, %s77
      %p83 = scmp.eq.s32.totalorder %s24, 0
      %p84 = por %p82, %p83
      %p85 = scmp.ne.s32.totalorder %s74, %s77
      %p86 = scmp.eq.s32.totalorder %s29, 3
      %p87 = por %p85, %p86
      %p88 = scmp.ne.s32.totalorder %s77, %s78
      %p89 = scmp.eq.s32.totalorder %s29, 0
      %p90 = por %p88, %p89
      %p91 = scmp.ne.s32.totalorder %s77, %s78
      %p92 = scmp.eq.s32.totalorder %s30, 3
      %p93 = por %p91, %p92
      %p95 = scmp.ne.s32.totalorder %s78, %s94
      %p96 = scmp.eq.s32.totalorder %s30, 0
      %p97 = por %p95, %p96
      %s99 = sadd.s32 %s98, 1
      %p102 = scmp.eq.s32.totalorder %s24, 3
      %p103 = scmp.ne.s32.totalorder %s98, %s100
      %p104 = scmp.eq.s32.totalorder %s24, 0
      %p105 = por %p103, %p104
      %p106 = scmp.ne.s32.totalorder %s98, %s100
      %p107 = scmp.eq.s32.totalorder %s29, 3
      %p108 = por %p106, %p107
      %p109 = scmp.ne.s32.totalorder %s100, %s101
      %p110 = scmp.eq.s32.totalorder %s29, 0
      %p111 = por %p109, %p110
      %p112 = scmp.ne.s32.totalorder %s100, %s101
      %p113 = scmp.eq.s32.totalorder %s30, 3
      %p114 = por %p112, %p113
      %p116 = scmp.ne.s32.totalorder %s101, %s115
      %p117 = scmp.eq.s32.totalorder %s30, 0
      %p118 = por %p116, %p117
      %s120 = sadd.s32 %s119, 1
      %p123 = scmp.eq.s32.totalorder %s24, 3
      %p124 = scmp.ne.s32.totalorder %s119, %s121
      %p125 = scmp.eq.s32.totalorder %s24, 0
      %p126 = por %p124, %p125
      %p127 = scmp.ne.s32.totalorder %s119, %s121
      %p128 = scmp.eq.s32.totalorder %s29, 3
      %p129 = por %p127, %p128
      %p130 = scmp.ne.s32.totalorder %s121, %s122
      %p131 = scmp.eq.s32.totalorder %s29, 0
      %p132 = por %p130, %p131
      %p133 = scmp.ne.s32.totalorder %s121, %s122
      %p134 = scmp.eq.s32.totalorder %s30, 3
      %p135 = por %p133, %p134
      %p137 = scmp.ne.s32.totalorder %s122, %s136
      %p138 = scmp.eq.s32.totalorder %s30, 0
      %p139 = por %p137, %p138
      %s141 = sadd.s32 %s140, 1
      %p144 = scmp.eq.s32.totalorder %s24, 3
      %p145 = scmp.ne.s32.totalorder %s140, %s142
      %p146 = scmp.eq.s32.totalorder %s24, 0
      %p147 = por %p145, %p146
      %p148 = scmp.ne.s32.totalorder %s140, %s142
      %p149 = scmp.eq.s32.totalorder %s29, 3
      %p150 = por %p148, %p149
      %p151 = scmp.ne.s32.totalorder %s142, %s143
      %p152 = scmp.eq.s32.totalorder %s29, 0
      %p153 = por %p151, %p152
      %p154 = scmp.ne.s32.totalorder %s142, %s143
      %p155 = scmp.eq.s32.totalorder %s30, 3
      %p156 = por %p154, %p155
      %p158 = scmp.ne.s32.totalorder %s143, %s157
      %p159 = scmp.eq.s32.totalorder %s30, 0
      %p160 = por %p158, %p159
      %s162 = sadd.s32 %s161, 1
      %p165 = scmp.eq.s32.totalorder %s24, 3
      %p166 = scmp.ne.s32.totalorder %s161, %s163
      %p167 = scmp.eq.s32.totalorder %s24, 0
      %p168 = por %p166, %p167
      %p169 = scmp.ne.s32.totalorder %s161, %s163
      %p170 = scmp.eq.s32.totalorder %s29, 3
      %p171 = por %p169, %p170
      %p172 = scmp.ne.s32.totalorder %s163, %s164
      %p173 = scmp.eq.s32.totalorder %s29, 0
      %p174 = por %p172, %p173
      %p175 = scmp.ne.s32.totalorder %s163, %s164
      %p176 = scmp.eq.s32.totalorder %s30, 3
      %p177 = por %p175, %p176
      %p179 = scmp.ne.s32.totalorder %s164, %s178
      %p180 = scmp.eq.s32.totalorder %s30, 0
      %p181 = por %p179, %p180
      %s183 = sadd.s32 %s182, 1
      %p186 = scmp.eq.s32.totalorder %s24, 3
      %p187 = scmp.ne.s32.totalorder %s182, %s184
      %p188 = scmp.eq.s32.totalorder %s24, 0
      %p189 = por %p187, %p188
      %p190 = scmp.ne.s32.totalorder %s182, %s184
      %p191 = scmp.eq.s32.totalorder %s29, 3
      %p192 = por %p190, %p191
      %p193 = scmp.ne.s32.totalorder %s184, %s185
      %p194 = scmp.eq.s32.totalorder %s29, 0
      %p195 = por %p193, %p194
      %p196 = scmp.ne.s32.totalorder %s184, %s185
      %p197 = scmp.eq.s32.totalorder %s30, 3
      %p198 = por %p196, %p197
      %p200 = scmp.ne.s32.totalorder %s185, %s199
      %p201 = scmp.eq.s32.totalorder %s30, 0
      %p202 = por %p200, %p201
      %s204 = sadd.s32 %s203, 1
      %p207 = scmp.eq.s32.totalorder %s24, 3
      %p208 = scmp.ne.s32.totalorder %s203, %s205
      %p209 = scmp.eq.s32.totalorder %s24, 0
      %p210 = por %p208, %p209
      %p211 = scmp.ne.s32.totalorder %s203, %s205
      %p212 = scmp.eq.s32.totalorder %s29, 3
      %p213 = por %p211, %p212
      %p214 = scmp.ne.s32.totalorder %s205, %s206
      %p215 = scmp.eq.s32.totalorder %s29, 0
      %p216 = por %p214, %p215
      %p217 = scmp.ne.s32.totalorder %s205, %s206
      %p218 = scmp.eq.s32.totalorder %s30, 3
      %p219 = por %p217, %p218
      %p221 = scmp.ne.s32.totalorder %s206, %s220
      %p222 = scmp.eq.s32.totalorder %s30, 0
      %p223 = por %p221, %p222
      %s224 = ssub.s32 %s31, %s43
      %s225 = ssub.s32 %s32, %s39
      %s226 = sor.u32 %s224, %s225
      %p227 = scmp.eq.s32.totalorder %s226, 0
      %s229 = sadd.s32 %s228, 1
      %s230 = scalar_select %p227, %s228, %s229
      %p233 = pneg %p227
      %p234 = scmp.eq.s32.totalorder %s24, 3
      %p235 = por %p233, %p234
      %p236 = scmp.ne.s32.totalorder %s228, %s231
      %p237 = scmp.eq.s32.totalorder %s24, 0
      %p238 = por %p236, %p237
      %p239 = scmp.ne.s32.totalorder %s228, %s231
      %p240 = scmp.eq.s32.totalorder %s29, 3
      %p241 = por %p239, %p240
      %p242 = scmp.ne.s32.totalorder %s231, %s232
      %p243 = scmp.eq.s32.totalorder %s29, 0
      %p244 = por %p242, %p243
      %p245 = scmp.ne.s32.totalorder %s231, %s232
      %p246 = scmp.eq.s32.totalorder %s30, 3
      %p247 = por %p245, %p246
      %p249 = scmp.ne.s32.totalorder %s232, %s248
      %p250 = scmp.eq.s32.totalorder %s30, 0
      %p251 = por %p249, %p250
      %p252 = scmp.le.s32.totalorder 1, %s24
      %p253 = scmp.lt.s32.totalorder %s24, 5
      %p254 = pnand %p252, %p253
      %p255 = pneg %p254
      // Predicated region
      $region9: #{tpu_custom_call.1} parent=5 // pred_check
        _
      $region10: #{tpu_custom_call.1} parent=5 // pred_check_branch
        %257 = sbr.rel (%p254) target = $region12
      $region11: #{tpu_custom_call.1} parent=5 // pred_region
        %s258 = ssub.s32 %s24, 1
        // Predicated region
        $region13: #{tpu_custom_call.1} parent=11 // pred_check
          %p259 = pneg %p111
        $region14: #{tpu_custom_call.1} parent=11 // pred_check_branch
          %261 = sbr.rel (%p259) target = $region16
        $region15: #{tpu_custom_call.1} parent=11 // pred_region
          %s263 = ssub.s32 1024, 1024
          %264 = vsyncadd [#allocation7], %s263
          %s265 = sshll.u32 [#allocation8], 4
          %s266 = int_to_ptr.vmem [resolvable:$true] %s265
          %271 = dma.hbm_to_vmem [thread:$0]  %s2, 1024, %s266, [#allocation7], 64, 64, 4
        $region16: #{tpu_custom_call.1} parent=11 // pred_fallthru
          _
        // Predicated region
        $region17: #{tpu_custom_call.1} parent=11 // pred_check
          %p272 = pneg %p132
        $region18: #{tpu_custom_call.1} parent=11 // pred_check_branch
          %274 = sbr.rel (%p272) target = $region20
        $region19: #{tpu_custom_call.1} parent=11 // pred_region
          _
        $region20: #{tpu_custom_call.1} parent=11 // pred_fallthru
          _
        // Predicated region
        $region21: #{tpu_custom_call.1} parent=11 // pred_check
          %p275 = pneg %p153
        $region22: #{tpu_custom_call.1} parent=11 // pred_check_branch
          %277 = sbr.rel (%p275) target = $region24
        $region23: #{tpu_custom_call.1} parent=11 // pred_region
          %s279 = ssub.s32 2048, 2048
          %280 = vsyncadd [#allocation10], %s279
          %s281 = sshll.u32 [#allocation9], 4
          %s282 = int_to_ptr.vmem [resolvable:$true] %s281
          %287 = dma.hbm_to_vmem [thread:$0]  %s4, 2048, %s282, [#allocation10], 128, 128, 8
        $region24: #{tpu_custom_call.1} parent=11 // pred_fallthru
          _
        // Predicated region
        $region25: #{tpu_custom_call.1} parent=11 // pred_check
          %p288 = pneg %p174
        $region26: #{tpu_custom_call.1} parent=11 // pred_check_branch
          %290 = sbr.rel (%p288) target = $region28
        $region27: #{tpu_custom_call.1} parent=11 // pred_region
          _
        $region28: #{tpu_custom_call.1} parent=11 // pred_fallthru
          _
        // Predicated region
        $region29: #{tpu_custom_call.1} parent=11 // pred_check
          %p291 = pneg %p195
        $region30: #{tpu_custom_call.1} parent=11 // pred_check_branch
          %293 = sbr.rel (%p291) target = $region32
        $region31: #{tpu_custom_call.1} parent=11 // pred_region
          %s295 = ssub.s32 1024, 1024
          %296 = vsyncadd [#allocation10], %s295
          %s297 = sshll.u32 [#allocation11], 4
          %s298 = int_to_ptr.vmem [resolvable:$true] %s297
          %303 = dma.hbm_to_vmem [thread:$0]  %s6, 1024, %s298, [#allocation10], 64, 64, 4
        $region32: #{tpu_custom_call.1} parent=11 // pred_fallthru
          _
        // Predicated region
        $region33: #{tpu_custom_call.1} parent=11 // pred_check
          %p304 = pneg %p216
        $region34: #{tpu_custom_call.1} parent=11 // pred_check_branch
          %306 = sbr.rel (%p304) target = $region36
        $region35: #{tpu_custom_call.1} parent=11 // pred_region
          _
        $region36: #{tpu_custom_call.1} parent=11 // pred_fallthru
          _
      $region12: #{tpu_custom_call.1} parent=5 // pred_fallthru
        _
      %p307 = scmp.lt.s32.totalorder %s24, 4
      // Predicated region
      $region37: #{tpu_custom_call.1} parent=5 // pred_check
        %p308 = pneg %p307
      $region38: #{tpu_custom_call.1} parent=5 // pred_check_branch
        %310 = sbr.rel (%p308) target = $region40
      $region39: #{tpu_custom_call.1} parent=5 // pred_region
        // Predicated region
        $region41: #{tpu_custom_call.1} parent=39 // pred_check
          %p311 = pneg %p58
        $region42: #{tpu_custom_call.1} parent=39 // pred_check_branch
          %313 = sbr.rel (%p311) target = $region44
        $region43: #{tpu_custom_call.1} parent=39 // pred_region
          %s314 = sand.u32 %s48, 1
          %s315 = scalar_lea.sflag [#allocation4], %s314
          %s316 = sand.u32 %s48, 1
          %s317 = smul.addr %s316, 128
          %s318 = scalar_lea.vmem [#allocation3], %s317
          %s319 = smul.u32 32, %s32
          %s321 = ssub.s32 2048, 2048
          %322 = vsyncadd %s315, %s321
          %s323 = smul.addr %s31, 64
          %s324 = sadd.s32 %s319, %s323
          %s325 = smul.addr %s324, 64
          %s326 = scalar_lea.hbm %s0, %s325
          %s327 = sshll.u32 %s318, 4
          %s328 = int_to_ptr.vmem [resolvable:$true] %s327
          %333 = dma.hbm_to_vmem [thread:$0]  %s326, 2048, %s328, %s315, 64, 64, 4
        $region44: #{tpu_custom_call.1} parent=39 // pred_fallthru
          _
        // Predicated region
        $region45: #{tpu_custom_call.1} parent=39 // pred_check
          %p334 = pneg %p84
        $region46: #{tpu_custom_call.1} parent=39 // pred_check_branch
          %336 = sbr.rel (%p334) target = $region48
        $region47: #{tpu_custom_call.1} parent=39 // pred_region
          %s337 = sand.u32 %s24, 1
          %s338 = scalar_lea.sflag [#allocation7], %s337
          %s339 = sand.u32 %s74, 1
          %s340 = smul.addr %s339, 64
          %s341 = scalar_lea.vmem [#allocation6], %s340
          %s343 = ssub.s32 1024, 1024
          %344 = vsyncadd %s338, %s343
          %s345 = smul.addr %s31, 16
          %s346 = smul.addr %s345, 64
          %s347 = scalar_lea.hbm %s1, %s346
          %s348 = sshll.u32 %s341, 4
          %s349 = int_to_ptr.vmem [resolvable:$true] %s348
          %354 = dma.hbm_to_vmem [thread:$0]  %s347, 1024, %s349, %s338, 64, 64, 4
        $region48: #{tpu_custom_call.1} parent=39 // pred_fallthru
          _
      $region40: #{tpu_custom_call.1} parent=5 // pred_fallthru
        _
      %p355 = scmp.le.s32.totalorder 1, %s24
      %p356 = scmp.lt.s32.totalorder %s24, 5
      %p357 = pnand %p355, %p356
      %p358 = pneg %p357
      // Predicated region
      $region49: #{tpu_custom_call.1} parent=5 // pred_check
        _
      $region50: #{tpu_custom_call.1} parent=5 // pred_check_branch
        %360 = sbr.rel (%p357) target = $region52
      $region51: #{tpu_custom_call.1} parent=5 // pred_region
        %s361 = ssub.s32 %s24, 1
        %s362 = sand.u32 %s51, 1
        %s363 = scalar_lea.sflag [#allocation4], %s362
        %s364 = sand.u32 %s51, 1
        %s365 = smul.addr %s364, 128
        %s366 = scalar_lea.vmem [#allocation3], %s365
        // Predicated region
        $region53: #{tpu_custom_call.1} parent=51 // pred_check
          %p367 = pneg %p64
        $region54: #{tpu_custom_call.1} parent=51 // pred_check_branch
          %369 = sbr.rel (%p367) target = $region56
        $region55: #{tpu_custom_call.1} parent=51 // pred_region
          %370 = dma.done %s363, 2048
        $region56: #{tpu_custom_call.1} parent=51 // pred_fallthru
          _
        %s371 = sand.u32 %s29, 1
        %s372 = scalar_lea.sflag [#allocation7], %s371
        %s373 = sand.u32 %s77, 1
        %s374 = smul.addr %s373, 64
        %s375 = scalar_lea.vmem [#allocation6], %s374
        // Predicated region
        $region57: #{tpu_custom_call.1} parent=51 // pred_check
          %p376 = pneg %p90
        $region58: #{tpu_custom_call.1} parent=51 // pred_check_branch
          %378 = sbr.rel (%p376) target = $region60
        $region59: #{tpu_custom_call.1} parent=51 // pred_region
          %379 = dma.done %s372, 1024
        $region60: #{tpu_custom_call.1} parent=51 // pred_fallthru
          _
        // Predicated region
        $region61: #{tpu_custom_call.1} parent=51 // pred_check
          %p380 = pneg %p111
        $region62: #{tpu_custom_call.1} parent=51 // pred_check_branch
          %382 = sbr.rel (%p380) target = $region64
        $region63: #{tpu_custom_call.1} parent=51 // pred_region
          %383 = dma.done [#allocation7], 1024
        $region64: #{tpu_custom_call.1} parent=51 // pred_fallthru
          _
        // Predicated region
        $region65: #{tpu_custom_call.1} parent=51 // pred_check
          %p384 = pneg %p153
        $region66: #{tpu_custom_call.1} parent=51 // pred_check_branch
          %386 = sbr.rel (%p384) target = $region68
        $region67: #{tpu_custom_call.1} parent=51 // pred_region
          %387 = dma.done [#allocation10], 2048
        $region68: #{tpu_custom_call.1} parent=51 // pred_fallthru
          _
        // Predicated region
        $region69: #{tpu_custom_call.1} parent=51 // pred_check
          %p388 = pneg %p195
        $region70: #{tpu_custom_call.1} parent=51 // pred_check_branch
          %390 = sbr.rel (%p388) target = $region72
        $region71: #{tpu_custom_call.1} parent=51 // pred_region
          %391 = dma.done [#allocation10], 1024
        $region72: #{tpu_custom_call.1} parent=51 // pred_fallthru
          _
        %s392 = sand.u32 %s51, 1
        %s393 = scalar_lea.sflag [#allocation4], %s392
        %s394 = sand.u32 %s51, 1
        %s395 = smul.addr %s394, 128
        %s396 = scalar_lea.vmem [#allocation3], %s395
        %p397 = pneg %p64
        %p398 = pneg %p61
        %s399 = sand.u32 %s29, 1
        %s400 = scalar_lea.sflag [#allocation7], %s399
        %s401 = sand.u32 %s77, 1
        %s402 = smul.addr %s401, 64
        %s403 = scalar_lea.vmem [#allocation6], %s402
        %p404 = pneg %p90
        %p405 = pneg %p87
        %p406 = pneg %p111
        %p407 = pneg %p108
        %p408 = pneg %p132
        %p409 = pneg %p129
        %p410 = pneg %p153
        %p411 = pneg %p150
        %p412 = pneg %p174
        %p413 = pneg %p171
        %p414 = pneg %p195
        %p415 = pneg %p192
        %p416 = pneg %p216
        %p417 = pneg %p213
        %p418 = pneg %p244
        %p419 = pneg %p241
        %s420 = sand.u32 %s231, 1
        %s421 = scalar_lea.sflag [#allocation5], %s420
        %s422 = sand.u32 %s231, 1
        %s423 = smul.addr %s422, 256
        %s424 = scalar_lea.vmem [#allocation12], %s423
        %s425 = smul.u32 32, %s34
        %s426 = smul.u32 32, %s34
        %v428 = vld [vmem:[%s366] sm:$0xf]
        %v429 = vld [vmem:[%s366 + $0x4] sm:$0xf]
        %v430 = vld [vmem:[%s366 + $0x8] sm:$0xf]
        %v431 = vld [vmem:[%s366 + $0xc] sm:$0xf]
        %v432 = vld [vmem:[%s366 + $0x10] sm:$0xf]
        %v433 = vld [vmem:[%s366 + $0x14] sm:$0xf]
        %v434 = vld [vmem:[%s366 + $0x18] sm:$0xf]
        %v435 = vld [vmem:[%s366 + $0x1c] sm:$0xf]
        %v436 = vld [vmem:[%s366 + $0x20] sm:$0xf]
        %v437 = vld [vmem:[%s366 + $0x24] sm:$0xf]
        %v438 = vld [vmem:[%s366 + $0x28] sm:$0xf]
        %v439 = vld [vmem:[%s366 + $0x2c] sm:$0xf]
        %v440 = vld [vmem:[%s366 + $0x30] sm:$0xf]
        %v441 = vld [vmem:[%s366 + $0x34] sm:$0xf]
        %v442 = vld [vmem:[%s366 + $0x38] sm:$0xf]
        %v443 = vld [vmem:[%s366 + $0x3c] sm:$0xf]
        %v444 = vld [vmem:[%s366 + $0x40] sm:$0xf]
        %v445 = vld [vmem:[%s366 + $0x44] sm:$0xf]
        %v446 = vld [vmem:[%s366 + $0x48] sm:$0xf]
        %v447 = vld [vmem:[%s366 + $0x4c] sm:$0xf]
        %v448 = vld [vmem:[%s366 + $0x50] sm:$0xf]
        %v449 = vld [vmem:[%s366 + $0x54] sm:$0xf]
        %v450 = vld [vmem:[%s366 + $0x58] sm:$0xf]
        %v451 = vld [vmem:[%s366 + $0x5c] sm:$0xf]
        %v452 = vld [vmem:[%s366 + $0x60] sm:$0xf]
        %v453 = vld [vmem:[%s366 + $0x64] sm:$0xf]
        %v454 = vld [vmem:[%s366 + $0x68] sm:$0xf]
        %v455 = vld [vmem:[%s366 + $0x6c] sm:$0xf]
        %v456 = vld [vmem:[%s366 + $0x70] sm:$0xf]
        %v457 = vld [vmem:[%s366 + $0x74] sm:$0xf]
        %v458 = vld [vmem:[%s366 + $0x78] sm:$0xf]
        %v459 = vld [vmem:[%s366 + $0x7c] sm:$0xf]
        %v460 = vld [vmem:[%s375] sm:$0xf]
        %v461 = vld [vmem:[%s375 + $0x4] sm:$0xf]
        %v462 = vld [vmem:[%s375 + $0x8] sm:$0xf]
        %v463 = vld [vmem:[%s375 + $0xc] sm:$0xf]
        %v464 = vld [vmem:[%s375 + $0x10] sm:$0xf]
        %v465 = vld [vmem:[%s375 + $0x14] sm:$0xf]
        %v466 = vld [vmem:[%s375 + $0x18] sm:$0xf]
        %v467 = vld [vmem:[%s375 + $0x1c] sm:$0xf]
        %v468 = vld [vmem:[%s375 + $0x20] sm:$0xf]
        %v469 = vld [vmem:[%s375 + $0x24] sm:$0xf]
        %v470 = vld [vmem:[%s375 + $0x28] sm:$0xf]
        %v471 = vld [vmem:[%s375 + $0x2c] sm:$0xf]
        %v472 = vld [vmem:[%s375 + $0x30] sm:$0xf]
        %v473 = vld [vmem:[%s375 + $0x34] sm:$0xf]
        %v474 = vld [vmem:[%s375 + $0x38] sm:$0xf]
        %v475 = vld [vmem:[%s375 + $0x3c] sm:$0xf]
        %v476 = vld [vmem:[#allocation8] sm:$0xf]
        %v477 = vld [vmem:[#allocation8 + $0x4] sm:$0xf]
        %v478 = vld [vmem:[#allocation8 + $0x8] sm:$0xf]
        %v479 = vld [vmem:[#allocation8 + $0xc] sm:$0xf]
        %v480 = vld [vmem:[#allocation8 + $0x10] sm:$0xf]
        %v481 = vld [vmem:[#allocation8 + $0x14] sm:$0xf]
        %v482 = vld [vmem:[#allocation8 + $0x18] sm:$0xf]
        %v483 = vld [vmem:[#allocation8 + $0x1c] sm:$0xf]
        %v484 = vld [vmem:[#allocation8 + $0x20] sm:$0xf]
        %v485 = vld [vmem:[#allocation8 + $0x24] sm:$0xf]
        %v486 = vld [vmem:[#allocation8 + $0x28] sm:$0xf]
        %v487 = vld [vmem:[#allocation8 + $0x2c] sm:$0xf]
        %v488 = vld [vmem:[#allocation8 + $0x30] sm:$0xf]
        %v489 = vld [vmem:[#allocation8 + $0x34] sm:$0xf]
        %v490 = vld [vmem:[#allocation8 + $0x38] sm:$0xf]
        %v491 = vld [vmem:[#allocation8 + $0x3c] sm:$0xf]
        %v492 = vld [vmem:[%s3] sm:$0x1]
        %v494 = vlaneseq
        %v495 = vshrl.u32 %v494, 7
        %v496 = vsub.s32 0, %v495
        %v497 = vrot.slane %v492, %v496
        %v531 = vunpack.c.l.b16 %v428
        %v532 = vunpack.c.l.b16 %v429
        %v533 = vunpack.c.l.b16 %v430
        %v534 = vunpack.c.l.b16 %v431
        %v535 = vunpack.c.l.b16 %v432
        %v536 = vunpack.c.l.b16 %v433
        %v537 = vunpack.c.l.b16 %v434
        %v538 = vunpack.c.l.b16 %v435
        %v539 = vunpack.c.l.b16 %v436
        %v540 = vunpack.c.l.b16 %v437
        %v541 = vunpack.c.l.b16 %v438
        %v542 = vunpack.c.l.b16 %v439
        %v543 = vunpack.c.l.b16 %v440
        %v544 = vunpack.c.l.b16 %v441
        %v545 = vunpack.c.l.b16 %v442
        %v546 = vunpack.c.l.b16 %v443
        %v547 = vunpack.c.l.b16 %v444
        %v548 = vunpack.c.l.b16 %v445
        %v549 = vunpack.c.l.b16 %v446
        %v550 = vunpack.c.l.b16 %v447
        %v551 = vunpack.c.l.b16 %v448
        %v552 = vunpack.c.l.b16 %v449
        %v553 = vunpack.c.l.b16 %v450
        %v554 = vunpack.c.l.b16 %v451
        %v555 = vunpack.c.l.b16 %v452
        %v556 = vunpack.c.l.b16 %v453
        %v557 = vunpack.c.l.b16 %v454
        %v558 = vunpack.c.l.b16 %v455
        %v559 = vunpack.c.l.b16 %v456
        %v560 = vunpack.c.l.b16 %v457
        %v561 = vunpack.c.l.b16 %v458
        %v562 = vunpack.c.l.b16 %v459
        %v563 = vpack.c.b16 %v532, %v531
        %v564 = vpack.c.b16 %v534, %v533
        %v565 = vpack.c.b16 %v536, %v535
        %v566 = vpack.c.b16 %v538, %v537
        %v567 = vpack.c.b16 %v540, %v539
        %v568 = vpack.c.b16 %v542, %v541
        %v569 = vpack.c.b16 %v544, %v543
        %v570 = vpack.c.b16 %v546, %v545
        %v571 = vpack.c.b16 %v548, %v547
        %v572 = vpack.c.b16 %v550, %v549
        %v573 = vpack.c.b16 %v552, %v551
        %v574 = vpack.c.b16 %v554, %v553
        %v575 = vpack.c.b16 %v556, %v555
        %v576 = vpack.c.b16 %v558, %v557
        %v577 = vpack.c.b16 %v560, %v559
        %v578 = vpack.c.b16 %v562, %v561
        %v611 = vunpack.c.l.b16 %v476
        %v612 = vunpack.c.l.b16 %v477
        %v613 = vunpack.c.l.b16 %v478
        %v614 = vunpack.c.l.b16 %v479
        %v615 = vunpack.c.l.b16 %v480
        %v616 = vunpack.c.l.b16 %v481
        %v617 = vunpack.c.l.b16 %v482
        %v618 = vunpack.c.l.b16 %v483
        %v619 = vunpack.c.l.b16 %v484
        %v620 = vunpack.c.l.b16 %v485
        %v621 = vunpack.c.l.b16 %v486
        %v622 = vunpack.c.l.b16 %v487
        %v623 = vunpack.c.l.b16 %v488
        %v624 = vunpack.c.l.b16 %v489
        %v625 = vunpack.c.l.b16 %v490
        %v626 = vunpack.c.l.b16 %v491
        %v627 = vpack.c.b16 %v612, %v611
        %v628 = vpack.c.b16 %v614, %v613
        %v629 = vpack.c.b16 %v616, %v615
        %v630 = vpack.c.b16 %v618, %v617
        %v631 = vpack.c.b16 %v620, %v619
        %v632 = vpack.c.b16 %v622, %v621
        %v633 = vpack.c.b16 %v624, %v623
        %v634 = vpack.c.b16 %v626, %v625
        %643 = vmatprep.subr.bf16.mxu0 0
        %644 = vmatpush1.bf16.msra.mxu0 %v634
        %645 = vmatprep.subr.bf16.mxu0 0
        %646 = vmatpush1.bf16.msra.mxu0 %v633
        %647 = vmatprep.subr.bf16.mxu0 0
        %648 = vmatpush1.bf16.msra.mxu0 %v632
        %649 = vmatprep.subr.bf16.mxu0 0
        %650 = vmatpush1.bf16.msra.mxu0 %v631
        %651 = vmatprep.subr.bf16.mxu0 0
        %652 = vmatpush1.bf16.msra.mxu0 %v630
        %653 = vmatprep.subr.bf16.mxu0 0
        %654 = vmatpush1.bf16.msra.mxu0 %v629
        %655 = vmatprep.subr.bf16.mxu0 0
        %656 = vmatpush1.bf16.msra.mxu0 %v628
        %657 = vmatprep.subr.bf16.mxu0 0
        %658 = vmatpush1.bf16.msra.mxu0 %v627
        %659 = vmatprep.subr.bf16.mxu0 0
        %660 = vmatpush2.bf16.msra.mxu0 0
        %661 = vmatprep.subr.bf16.mxu0 0
        %662 = vmatpush2.bf16.msra.mxu0 0
        %663 = vmatprep.subr.bf16.mxu0 0
        %664 = vmatpush2.bf16.msra.mxu0 0
        %665 = vmatprep.subr.bf16.mxu0 0
        %666 = vmatpush2.bf16.msra.mxu0 0
        %667 = vmatprep.subr.bf16.mxu0 0
        %668 = vmatpush2.bf16.msra.mxu0 0
        %669 = vmatprep.subr.bf16.mxu0 0
        %670 = vmatpush2.bf16.msra.mxu0 0
        %671 = vmatprep.subr.bf16.mxu0 0
        %672 = vmatpush2.bf16.msra.mxu0 0
        %673 = vmatprep.subr.bf16.mxu0 0
        %674 = vmatpush2.bf16.msra.mxu0 0
        %675 = vmatprep.mubr.bf16.mxu0 0
        %676 = vmatmul.mubr.bf16.gmra.mxu0 %v563
        %v677 = vpop.f32.mrf.mxu0
        %v678 = vadd.f32 %v497, %v677
        %v679 = vpop.f32.mrf.mxu0
        %v680 = vpop.f32.mrf.mxu0
        %v681 = vadd.f32 %v497, %v680
        %v682 = vpop.f32.mrf.mxu0
        %683 = vmatprep.mubr.bf16.mxu0 0
        %684 = vmatmul.mubr.bf16.gmra.mxu0 %v564
        %v685 = vpop.f32.mrf.mxu0
        %v686 = vadd.f32 %v497, %v685
        %v687 = vpop.f32.mrf.mxu0
        %v688 = vpop.f32.mrf.mxu0
        %v689 = vadd.f32 %v497, %v688
        %v690 = vpop.f32.mrf.mxu0
        %691 = vmatprep.mubr.bf16.mxu0 0
        %692 = vmatmul.mubr.bf16.gmra.mxu0 %v565
        %v693 = vpop.f32.mrf.mxu0
        %v694 = vadd.f32 %v497, %v693
        %v695 = vpop.f32.mrf.mxu0
        %v696 = vpop.f32.mrf.mxu0
        %v697 = vadd.f32 %v497, %v696
        %v698 = vpop.f32.mrf.mxu0
        %699 = vmatprep.mubr.bf16.mxu0 0
        %700 = vmatmul.mubr.bf16.gmra.mxu0 %v566
        %v701 = vpop.f32.mrf.mxu0
        %v702 = vadd.f32 %v497, %v701
        %v703 = vpop.f32.mrf.mxu0
        %v704 = vpop.f32.mrf.mxu0
        %v705 = vadd.f32 %v497, %v704
        %v706 = vpop.f32.mrf.mxu0
        %707 = vmatprep.mubr.bf16.mxu0 0
        %708 = vmatmul.mubr.bf16.gmra.mxu0 %v567
        %v709 = vpop.f32.mrf.mxu0
        %v710 = vadd.f32 %v497, %v709
        %v711 = vpop.f32.mrf.mxu0
        %v712 = vpop.f32.mrf.mxu0
        %v713 = vadd.f32 %v497, %v712
        %v714 = vpop.f32.mrf.mxu0
        %715 = vmatprep.mubr.bf16.mxu0 0
        %716 = vmatmul.mubr.bf16.gmra.mxu0 %v568
        %v717 = vpop.f32.mrf.mxu0
        %v718 = vadd.f32 %v497, %v717
        %v719 = vpop.f32.mrf.mxu0
        %v720 = vpop.f32.mrf.mxu0
        %v721 = vadd.f32 %v497, %v720
        %v722 = vpop.f32.mrf.mxu0
        %723 = vmatprep.mubr.bf16.mxu0 0
        %724 = vmatmul.mubr.bf16.gmra.mxu0 %v569
        %v725 = vpop.f32.mrf.mxu0
        %v726 = vadd.f32 %v497, %v725
        %v727 = vpop.f32.mrf.mxu0
        %v728 = vpop.f32.mrf.mxu0
        %v729 = vadd.f32 %v497, %v728
        %v730 = vpop.f32.mrf.mxu0
        %731 = vmatprep.mubr.bf16.mxu0 0
        %732 = vmatmul.mubr.bf16.gmra.mxu0 %v570
        %v733 = vpop.f32.mrf.mxu0
        %v734 = vadd.f32 %v497, %v733
        %v735 = vpop.f32.mrf.mxu0
        %v736 = vpop.f32.mrf.mxu0
        %v737 = vadd.f32 %v497, %v736
        %v738 = vpop.f32.mrf.mxu0
        %739 = vmatprep.mubr.bf16.mxu0 0
        %740 = vmatmul.mubr.bf16.gmra.mxu0 %v571
        %v741 = vpop.f32.mrf.mxu0
        %v742 = vadd.f32 %v497, %v741
        %v743 = vpop.f32.mrf.mxu0
        %v744 = vpop.f32.mrf.mxu0
        %v745 = vadd.f32 %v497, %v744
        %v746 = vpop.f32.mrf.mxu0
        %747 = vmatprep.mubr.bf16.mxu0 0
        %748 = vmatmul.mubr.bf16.gmra.mxu0 %v572
        %v749 = vpop.f32.mrf.mxu0
        %v750 = vadd.f32 %v497, %v749
        %v751 = vpop.f32.mrf.mxu0
        %v752 = vpop.f32.mrf.mxu0
        %v753 = vadd.f32 %v497, %v752
        %v754 = vpop.f32.mrf.mxu0
        %755 = vmatprep.mubr.bf16.mxu0 0
        %756 = vmatmul.mubr.bf16.gmra.mxu0 %v573
        %v757 = vpop.f32.mrf.mxu0
        %v758 = vadd.f32 %v497, %v757
        %v759 = vpop.f32.mrf.mxu0
        %v760 = vpop.f32.mrf.mxu0
        %v761 = vadd.f32 %v497, %v760
        %v762 = vpop.f32.mrf.mxu0
        %763 = vmatprep.mubr.bf16.mxu0 0
        %764 = vmatmul.mubr.bf16.gmra.mxu0 %v574
        %v765 = vpop.f32.mrf.mxu0
        %v766 = vadd.f32 %v497, %v765
        %v767 = vpop.f32.mrf.mxu0
        %v768 = vpop.f32.mrf.mxu0
        %v769 = vadd.f32 %v497, %v768
        %v770 = vpop.f32.mrf.mxu0
        %771 = vmatprep.mubr.bf16.mxu0 0
        %772 = vmatmul.mubr.bf16.gmra.mxu0 %v575
        %v773 = vpop.f32.mrf.mxu0
        %v774 = vadd.f32 %v497, %v773
        %v775 = vpop.f32.mrf.mxu0
        %v776 = vpop.f32.mrf.mxu0
        %v777 = vadd.f32 %v497, %v776
        %v778 = vpop.f32.mrf.mxu0
        %779 = vmatprep.mubr.bf16.mxu0 0
        %780 = vmatmul.mubr.bf16.gmra.mxu0 %v576
        %v781 = vpop.f32.mrf.mxu0
        %v782 = vadd.f32 %v497, %v781
        %v783 = vpop.f32.mrf.mxu0
        %v784 = vpop.f32.mrf.mxu0
        %v785 = vadd.f32 %v497, %v784
        %v786 = vpop.f32.mrf.mxu0
        %787 = vmatprep.mubr.bf16.mxu0 0
        %788 = vmatmul.mubr.bf16.gmra.mxu0 %v577
        %v789 = vpop.f32.mrf.mxu0
        %v790 = vadd.f32 %v497, %v789
        %v791 = vpop.f32.mrf.mxu0
        %v792 = vpop.f32.mrf.mxu0
        %v793 = vadd.f32 %v497, %v792
        %v794 = vpop.f32.mrf.mxu0
        %795 = vmatprep.mubr.bf16.mxu0 0
        %796 = vmatmul.mubr.bf16.gmra.mxu0 %v578
        %v797 = vpop.f32.mrf.mxu0
        %v798 = vadd.f32 %v497, %v797
        %v799 = vpop.f32.mrf.mxu0
        %v800 = vpop.f32.mrf.mxu0
        %v801 = vadd.f32 %v497, %v800
        %v802 = vpop.f32.mrf.mxu0
        %803 = vdwg.mxu0
        %v804 = vld [vmem:[#allocation9] sm:$0xff]
        %v805 = vld [vmem:[#allocation9 + $0x8] sm:$0xff]
        %v806 = vld [vmem:[#allocation9 + $0x10] sm:$0xff]
        %v807 = vld [vmem:[#allocation9 + $0x18] sm:$0xff]
        %v808 = vld [vmem:[#allocation9 + $0x20] sm:$0xff]
        %v809 = vld [vmem:[#allocation9 + $0x28] sm:$0xff]
        %v810 = vld [vmem:[#allocation9 + $0x30] sm:$0xff]
        %v811 = vld [vmem:[#allocation9 + $0x38] sm:$0xff]
        %v812 = vld [vmem:[#allocation9 + $0x40] sm:$0xff]
        %v813 = vld [vmem:[#allocation9 + $0x48] sm:$0xff]
        %v814 = vld [vmem:[#allocation9 + $0x50] sm:$0xff]
        %v815 = vld [vmem:[#allocation9 + $0x58] sm:$0xff]
        %v816 = vld [vmem:[#allocation9 + $0x60] sm:$0xff]
        %v817 = vld [vmem:[#allocation9 + $0x68] sm:$0xff]
        %v818 = vld [vmem:[#allocation9 + $0x70] sm:$0xff]
        %v819 = vld [vmem:[#allocation9 + $0x78] sm:$0xff]
        %v820 = vld [vmem:[%s5] sm:$0x3]
        %v822 = vlaneseq
        %v823 = vshrl.u32 %v822, 7
        %v824 = vsub.s32 0, %v823
        %v825 = vrot.slane %v820, %v824
        %v826 = vlaneseq
        %v827 = vshrl.u32 %v826, 7
        %v828 = vsub.s32 1, %v827
        %v829 = vrot.slane %v820, %v828
        %v848 = vunpack.c.l.b16 %v460
        %v849 = vunpack.c.l.b16 %v461
        %v850 = vunpack.c.l.b16 %v462
        %v851 = vunpack.c.l.b16 %v463
        %v852 = vunpack.c.l.b16 %v464
        %v853 = vunpack.c.l.b16 %v465
        %v854 = vunpack.c.l.b16 %v466
        %v855 = vunpack.c.l.b16 %v467
        %v856 = vunpack.c.l.b16 %v468
        %v857 = vunpack.c.l.b16 %v469
        %v858 = vunpack.c.l.b16 %v470
        %v859 = vunpack.c.l.b16 %v471
        %v860 = vunpack.c.l.b16 %v472
        %v861 = vunpack.c.l.b16 %v473
        %v862 = vunpack.c.l.b16 %v474
        %v863 = vunpack.c.l.b16 %v475
        %v864 = vpack.c.b16 %v849, %v848
        %v865 = vpack.c.b16 %v851, %v850
        %v866 = vpack.c.b16 %v853, %v852
        %v867 = vpack.c.b16 %v855, %v854
        %v868 = vpack.c.b16 %v857, %v856
        %v869 = vpack.c.b16 %v859, %v858
        %v870 = vpack.c.b16 %v861, %v860
        %v871 = vpack.c.b16 %v863, %v862
        %v896 = vunpack.c.l.b16 %v804
        %v897 = vunpack.c.h.b16 %v804
        %v898 = vunpack.c.l.b16 %v805
        %v899 = vunpack.c.h.b16 %v805
        %v900 = vunpack.c.l.b16 %v806
        %v901 = vunpack.c.h.b16 %v806
        %v902 = vunpack.c.l.b16 %v807
        %v903 = vunpack.c.h.b16 %v807
        %v904 = vunpack.c.l.b16 %v808
        %v905 = vunpack.c.h.b16 %v808
        %v906 = vunpack.c.l.b16 %v809
        %v907 = vunpack.c.h.b16 %v809
        %v908 = vunpack.c.l.b16 %v810
        %v909 = vunpack.c.h.b16 %v810
        %v910 = vunpack.c.l.b16 %v811
        %v911 = vunpack.c.h.b16 %v811
        %v912 = vunpack.c.l.b16 %v812
        %v913 = vunpack.c.h.b16 %v812
        %v914 = vunpack.c.l.b16 %v813
        %v915 = vunpack.c.h.b16 %v813
        %v916 = vunpack.c.l.b16 %v814
        %v917 = vunpack.c.h.b16 %v814
        %v918 = vunpack.c.l.b16 %v815
        %v919 = vunpack.c.h.b16 %v815
        %v920 = vunpack.c.l.b16 %v816
        %v921 = vunpack.c.h.b16 %v816
        %v922 = vunpack.c.l.b16 %v817
        %v923 = vunpack.c.h.b16 %v817
        %v924 = vunpack.c.l.b16 %v818
        %v925 = vunpack.c.h.b16 %v818
        %v926 = vunpack.c.l.b16 %v819
        %v927 = vunpack.c.h.b16 %v819
        %v928 = vpack.c.b16 %v898, %v896
        %v929 = vpack.c.b16 %v899, %v897
        %v930 = vpack.c.b16 %v902, %v900
        %v931 = vpack.c.b16 %v903, %v901
        %v932 = vpack.c.b16 %v906, %v904
        %v933 = vpack.c.b16 %v907, %v905
        %v934 = vpack.c.b16 %v910, %v908
        %v935 = vpack.c.b16 %v911, %v909
        %v936 = vpack.c.b16 %v914, %v912
        %v937 = vpack.c.b16 %v915, %v913
        %v938 = vpack.c.b16 %v918, %v916
        %v939 = vpack.c.b16 %v919, %v917
        %v940 = vpack.c.b16 %v922, %v920
        %v941 = vpack.c.b16 %v923, %v921
        %v942 = vpack.c.b16 %v926, %v924
        %v943 = vpack.c.b16 %v927, %v925
        %960 = vmatprep.subr.bf16.mxu0 %v943
        %961 = vmatpush1.bf16.msra.mxu0 %v942
        %962 = vmatprep.subr.bf16.mxu0 %v941
        %963 = vmatpush1.bf16.msra.mxu0 %v940
        %964 = vmatprep.subr.bf16.mxu0 %v939
        %965 = vmatpush1.bf16.msra.mxu0 %v938
        %966 = vmatprep.subr.bf16.mxu0 %v937
        %967 = vmatpush1.bf16.msra.mxu0 %v936
        %968 = vmatprep.subr.bf16.mxu0 %v935
        %969 = vmatpush1.bf16.msra.mxu0 %v934
        %970 = vmatprep.subr.bf16.mxu0 %v933
        %971 = vmatpush1.bf16.msra.mxu0 %v932
        %972 = vmatprep.subr.bf16.mxu0 %v931
        %973 = vmatpush1.bf16.msra.mxu0 %v930
        %974 = vmatprep.subr.bf16.mxu0 %v929
        %975 = vmatpush1.bf16.msra.mxu0 %v928
        %976 = vmatprep.subr.bf16.mxu0 0
        %977 = vmatpush2.bf16.msra.mxu0 0
        %978 = vmatprep.subr.bf16.mxu0 0
        %979 = vmatpush2.bf16.msra.mxu0 0
        %980 = vmatprep.subr.bf16.mxu0 0
        %981 = vmatpush2.bf16.msra.mxu0 0
        %982 = vmatprep.subr.bf16.mxu0 0
        %983 = vmatpush2.bf16.msra.mxu0 0
        %984 = vmatprep.subr.bf16.mxu0 0
        %985 = vmatpush2.bf16.msra.mxu0 0
        %986 = vmatprep.subr.bf16.mxu0 0
        %987 = vmatpush2.bf16.msra.mxu0 0
        %988 = vmatprep.subr.bf16.mxu0 0
        %989 = vmatpush2.bf16.msra.mxu0 0
        %990 = vmatprep.subr.bf16.mxu0 0
        %991 = vmatpush2.bf16.msra.mxu0 0
        %992 = vmatprep.mubr.bf16.mxu0 0
        %993 = vmatmul.mubr.bf16.gmra.mxu0 %v864
        %v994 = vpop.f32.mrf.mxu0
        %v995 = vadd.f32 %v825, %v994
        %v996 = vpop.f32.mrf.mxu0
        %v997 = vadd.f32 %v829, %v996
        %v998 = vpop.f32.mrf.mxu0
        %v999 = vadd.f32 %v825, %v998
        %v1000 = vpop.f32.mrf.mxu0
        %v1001 = vadd.f32 %v829, %v1000
        %1002 = vmatprep.mubr.bf16.mxu0 0
        %1003 = vmatmul.mubr.bf16.gmra.mxu0 %v865
        %v1004 = vpop.f32.mrf.mxu0
        %v1005 = vadd.f32 %v825, %v1004
        %v1006 = vpop.f32.mrf.mxu0
        %v1007 = vadd.f32 %v829, %v1006
        %v1008 = vpop.f32.mrf.mxu0
        %v1009 = vadd.f32 %v825, %v1008
        %v1010 = vpop.f32.mrf.mxu0
        %v1011 = vadd.f32 %v829, %v1010
        %1012 = vmatprep.mubr.bf16.mxu0 0
        %1013 = vmatmul.mubr.bf16.gmra.mxu0 %v866
        %v1014 = vpop.f32.mrf.mxu0
        %v1015 = vadd.f32 %v825, %v1014
        %v1016 = vpop.f32.mrf.mxu0
        %v1017 = vadd.f32 %v829, %v1016
        %v1018 = vpop.f32.mrf.mxu0
        %v1019 = vadd.f32 %v825, %v1018
        %v1020 = vpop.f32.mrf.mxu0
        %v1021 = vadd.f32 %v829, %v1020
        %1022 = vmatprep.mubr.bf16.mxu0 0
        %1023 = vmatmul.mubr.bf16.gmra.mxu0 %v867
        %v1024 = vpop.f32.mrf.mxu0
        %v1025 = vadd.f32 %v825, %v1024
        %v1026 = vpop.f32.mrf.mxu0
        %v1027 = vadd.f32 %v829, %v1026
        %v1028 = vpop.f32.mrf.mxu0
        %v1029 = vadd.f32 %v825, %v1028
        %v1030 = vpop.f32.mrf.mxu0
        %v1031 = vadd.f32 %v829, %v1030
        %1032 = vmatprep.mubr.bf16.mxu0 0
        %1033 = vmatmul.mubr.bf16.gmra.mxu0 %v868
        %v1034 = vpop.f32.mrf.mxu0
        %v1035 = vadd.f32 %v825, %v1034
        %v1036 = vpop.f32.mrf.mxu0
        %v1037 = vadd.f32 %v829, %v1036
        %v1038 = vpop.f32.mrf.mxu0
        %v1039 = vadd.f32 %v825, %v1038
        %v1040 = vpop.f32.mrf.mxu0
        %v1041 = vadd.f32 %v829, %v1040
        %1042 = vmatprep.mubr.bf16.mxu0 0
        %1043 = vmatmul.mubr.bf16.gmra.mxu0 %v869
        %v1044 = vpop.f32.mrf.mxu0
        %v1045 = vadd.f32 %v825, %v1044
        %v1046 = vpop.f32.mrf.mxu0
        %v1047 = vadd.f32 %v829, %v1046
        %v1048 = vpop.f32.mrf.mxu0
        %v1049 = vadd.f32 %v825, %v1048
        %v1050 = vpop.f32.mrf.mxu0
        %v1051 = vadd.f32 %v829, %v1050
        %1052 = vmatprep.mubr.bf16.mxu0 0
        %1053 = vmatmul.mubr.bf16.gmra.mxu0 %v870
        %v1054 = vpop.f32.mrf.mxu0
        %v1055 = vadd.f32 %v825, %v1054
        %v1056 = vpop.f32.mrf.mxu0
        %v1057 = vadd.f32 %v829, %v1056
        %v1058 = vpop.f32.mrf.mxu0
        %v1059 = vadd.f32 %v825, %v1058
        %v1060 = vpop.f32.mrf.mxu0
        %v1061 = vadd.f32 %v829, %v1060
        %1062 = vmatprep.mubr.bf16.mxu0 0
        %1063 = vmatmul.mubr.bf16.gmra.mxu0 %v871
        %v1064 = vpop.f32.mrf.mxu0
        %v1065 = vadd.f32 %v825, %v1064
        %v1066 = vpop.f32.mrf.mxu0
        %v1067 = vadd.f32 %v829, %v1066
        %v1068 = vpop.f32.mrf.mxu0
        %v1069 = vadd.f32 %v825, %v1068
        %v1070 = vpop.f32.mrf.mxu0
        %v1071 = vadd.f32 %v829, %v1070
        %1072 = vdwg.mxu0
        %v1073 = vpack.c.bf16 %v681, %v678
        %v1074 = vpack.c.bf16 %v689, %v686
        %v1075 = vpack.c.bf16 %v697, %v694
        %v1076 = vpack.c.bf16 %v705, %v702
        %v1077 = vpack.c.bf16 %v713, %v710
        %v1078 = vpack.c.bf16 %v721, %v718
        %v1079 = vpack.c.bf16 %v729, %v726
        %v1080 = vpack.c.bf16 %v737, %v734
        %v1081 = vpack.c.bf16 %v745, %v742
        %v1082 = vpack.c.bf16 %v753, %v750
        %v1083 = vpack.c.bf16 %v761, %v758
        %v1084 = vpack.c.bf16 %v769, %v766
        %v1085 = vpack.c.bf16 %v777, %v774
        %v1086 = vpack.c.bf16 %v785, %v782
        %v1087 = vpack.c.bf16 %v793, %v790
        %v1088 = vpack.c.bf16 %v801, %v798
        %v1089 = vpack.c.bf16 %v999, %v995
        %v1090 = vpack.c.bf16 %v1001, %v997
        %v1091 = vpack.c.bf16 %v1009, %v1005
        %v1092 = vpack.c.bf16 %v1011, %v1007
        %v1093 = vpack.c.bf16 %v1019, %v1015
        %v1094 = vpack.c.bf16 %v1021, %v1017
        %v1095 = vpack.c.bf16 %v1029, %v1025
        %v1096 = vpack.c.bf16 %v1031, %v1027
        %v1097 = vpack.c.bf16 %v1039, %v1035
        %v1098 = vpack.c.bf16 %v1041, %v1037
        %v1099 = vpack.c.bf16 %v1049, %v1045
        %v1100 = vpack.c.bf16 %v1051, %v1047
        %v1101 = vpack.c.bf16 %v1059, %v1055
        %v1102 = vpack.c.bf16 %v1061, %v1057
        %v1103 = vpack.c.bf16 %v1069, %v1065
        %v1104 = vpack.c.bf16 %v1071, %v1067
        %vm1105 = vcmask 261120
        %v1107 = vsel %vm1105, %v1073, 0
        %v1110 = vsel %vm1105, %v1074, 0
        %v1113 = vsel %vm1105, %v1075, 0
        %v1116 = vsel %vm1105, %v1076, 0
        %v1119 = vsel %vm1105, %v1077, 0
        %v1122 = vsel %vm1105, %v1078, 0
        %v1125 = vsel %vm1105, %v1079, 0
        %v1128 = vsel %vm1105, %v1080, 0
        %v1131 = vsel %vm1105, %v1081, 0
        %v1134 = vsel %vm1105, %v1082, 0
        %v1137 = vsel %vm1105, %v1083, 0
        %v1140 = vsel %vm1105, %v1084, 0
        %v1143 = vsel %vm1105, %v1085, 0
        %v1146 = vsel %vm1105, %v1086, 0
        %v1149 = vsel %vm1105, %v1087, 0
        %v1152 = vsel %vm1105, %v1088, 0
        %v1155 = vsel %vm1105, %v1089, 0
        %v1158 = vsel %vm1105, %v1091, 0
        %v1161 = vsel %vm1105, %v1093, 0
        %v1164 = vsel %vm1105, %v1095, 0
        %v1167 = vsel %vm1105, %v1097, 0
        %v1170 = vsel %vm1105, %v1099, 0
        %v1173 = vsel %vm1105, %v1101, 0
        %v1176 = vsel %vm1105, %v1103, 0
        %1178 = vmatprep.subr.bf16.mxu0 0
        %1179 = vmatpush1.bf16.xpose.msra.mxu0 %v1176
        %1180 = vmatprep.subr.bf16.mxu0 0
        %1181 = vmatpush1.bf16.xpose.msra.mxu0 %v1173
        %1182 = vmatprep.subr.bf16.mxu0 0
        %1183 = vmatpush1.bf16.xpose.msra.mxu0 %v1170
        %1184 = vmatprep.subr.bf16.mxu0 0
        %1185 = vmatpush1.bf16.xpose.msra.mxu0 %v1167
        %1186 = vmatprep.subr.bf16.mxu0 0
        %1187 = vmatpush1.bf16.xpose.msra.mxu0 %v1164
        %1188 = vmatprep.subr.bf16.mxu0 0
        %1189 = vmatpush1.bf16.xpose.msra.mxu0 %v1161
        %1190 = vmatprep.subr.bf16.mxu0 0
        %1191 = vmatpush1.bf16.xpose.msra.mxu0 %v1158
        %1192 = vmatprep.subr.bf16.mxu0 0
        %1193 = vmatpush1.bf16.xpose.msra.mxu0 %v1155
        %1194 = vmatprep.subr.bf16.mxu0 0
        %1195 = vmatpush2.bf16.xpose.msra.mxu0 0
        %1196 = vmatprep.subr.bf16.mxu0 0
        %1197 = vmatpush2.bf16.xpose.msra.mxu0 0
        %1198 = vmatprep.subr.bf16.mxu0 0
        %1199 = vmatpush2.bf16.xpose.msra.mxu0 0
        %1200 = vmatprep.subr.bf16.mxu0 0
        %1201 = vmatpush2.bf16.xpose.msra.mxu0 0
        %1202 = vmatprep.subr.bf16.mxu0 0
        %1203 = vmatpush2.bf16.xpose.msra.mxu0 0
        %1204 = vmatprep.subr.bf16.mxu0 0
        %1205 = vmatpush2.bf16.xpose.msra.mxu0 0
        %1206 = vmatprep.subr.bf16.mxu0 0
        %1207 = vmatpush2.bf16.xpose.msra.mxu0 0
        %1208 = vmatprep.subr.bf16.mxu0 0
        %1209 = vmatpush2.bf16.xpose.msra.mxu0 0
        %1210 = vmatprep.mubr.bf16.mxu0 0
        %1211 = vmatmul.mubr.bf16.gmra.mxu0 %v1107
        %v1212 = vpop.f32.mrf.mxu0
        %v1213 = vadd.f32 0.0, %v1212
        %v1214 = vpop.f32.mrf.mxu0
        %v1215 = vpop.f32.mrf.mxu0
        %v1216 = vadd.f32 0.0, %v1215
        %v1217 = vpop.f32.mrf.mxu0
        %1218 = vmatprep.mubr.bf16.mxu0 0
        %1219 = vmatmul.mubr.bf16.gmra.mxu0 %v1110
        %v1220 = vpop.f32.mrf.mxu0
        %v1221 = vadd.f32 0.0, %v1220
        %v1222 = vpop.f32.mrf.mxu0
        %v1223 = vpop.f32.mrf.mxu0
        %v1224 = vadd.f32 0.0, %v1223
        %v1225 = vpop.f32.mrf.mxu0
        %1226 = vmatprep.mubr.bf16.mxu0 0
        %1227 = vmatmul.mubr.bf16.gmra.mxu0 %v1113
        %v1228 = vpop.f32.mrf.mxu0
        %v1229 = vadd.f32 0.0, %v1228
        %v1230 = vpop.f32.mrf.mxu0
        %v1231 = vpop.f32.mrf.mxu0
        %v1232 = vadd.f32 0.0, %v1231
        %v1233 = vpop.f32.mrf.mxu0
        %1234 = vmatprep.mubr.bf16.mxu0 0
        %1235 = vmatmul.mubr.bf16.gmra.mxu0 %v1116
        %v1236 = vpop.f32.mrf.mxu0
        %v1237 = vadd.f32 0.0, %v1236
        %v1238 = vpop.f32.mrf.mxu0
        %v1239 = vpop.f32.mrf.mxu0
        %v1240 = vadd.f32 0.0, %v1239
        %v1241 = vpop.f32.mrf.mxu0
        %1242 = vmatprep.mubr.bf16.mxu0 0
        %1243 = vmatmul.mubr.bf16.gmra.mxu0 %v1119
        %v1244 = vpop.f32.mrf.mxu0
        %v1245 = vadd.f32 0.0, %v1244
        %v1246 = vpop.f32.mrf.mxu0
        %v1247 = vpop.f32.mrf.mxu0
        %v1248 = vadd.f32 0.0, %v1247
        %v1249 = vpop.f32.mrf.mxu0
        %1250 = vmatprep.mubr.bf16.mxu0 0
        %1251 = vmatmul.mubr.bf16.gmra.mxu0 %v1122
        %v1252 = vpop.f32.mrf.mxu0
        %v1253 = vadd.f32 0.0, %v1252
        %v1254 = vpop.f32.mrf.mxu0
        %v1255 = vpop.f32.mrf.mxu0
        %v1256 = vadd.f32 0.0, %v1255
        %v1257 = vpop.f32.mrf.mxu0
        %1258 = vmatprep.mubr.bf16.mxu0 0
        %1259 = vmatmul.mubr.bf16.gmra.mxu0 %v1125
        %v1260 = vpop.f32.mrf.mxu0
        %v1261 = vadd.f32 0.0, %v1260
        %v1262 = vpop.f32.mrf.mxu0
        %v1263 = vpop.f32.mrf.mxu0
        %v1264 = vadd.f32 0.0, %v1263
        %v1265 = vpop.f32.mrf.mxu0
        %1266 = vmatprep.mubr.bf16.mxu0 0
        %1267 = vmatmul.mubr.bf16.gmra.mxu0 %v1128
        %v1268 = vpop.f32.mrf.mxu0
        %v1269 = vadd.f32 0.0, %v1268
        %v1270 = vpop.f32.mrf.mxu0
        %v1271 = vpop.f32.mrf.mxu0
        %v1272 = vadd.f32 0.0, %v1271
        %v1273 = vpop.f32.mrf.mxu0
        %1274 = vmatprep.mubr.bf16.mxu0 0
        %1275 = vmatmul.mubr.bf16.gmra.mxu0 %v1131
        %v1276 = vpop.f32.mrf.mxu0
        %v1277 = vadd.f32 0.0, %v1276
        %v1278 = vpop.f32.mrf.mxu0
        %v1279 = vpop.f32.mrf.mxu0
        %v1280 = vadd.f32 0.0, %v1279
        %v1281 = vpop.f32.mrf.mxu0
        %1282 = vmatprep.mubr.bf16.mxu0 0
        %1283 = vmatmul.mubr.bf16.gmra.mxu0 %v1134
        %v1284 = vpop.f32.mrf.mxu0
        %v1285 = vadd.f32 0.0, %v1284
        %v1286 = vpop.f32.mrf.mxu0
        %v1287 = vpop.f32.mrf.mxu0
        %v1288 = vadd.f32 0.0, %v1287
        %v1289 = vpop.f32.mrf.mxu0
        %1290 = vmatprep.mubr.bf16.mxu0 0
        %1291 = vmatmul.mubr.bf16.gmra.mxu0 %v1137
        %v1292 = vpop.f32.mrf.mxu0
        %v1293 = vadd.f32 0.0, %v1292
        %v1294 = vpop.f32.mrf.mxu0
        %v1295 = vpop.f32.mrf.mxu0
        %v1296 = vadd.f32 0.0, %v1295
        %v1297 = vpop.f32.mrf.mxu0
        %1298 = vmatprep.mubr.bf16.mxu0 0
        %1299 = vmatmul.mubr.bf16.gmra.mxu0 %v1140
        %v1300 = vpop.f32.mrf.mxu0
        %v1301 = vadd.f32 0.0, %v1300
        %v1302 = vpop.f32.mrf.mxu0
        %v1303 = vpop.f32.mrf.mxu0
        %v1304 = vadd.f32 0.0, %v1303
        %v1305 = vpop.f32.mrf.mxu0
        %1306 = vmatprep.mubr.bf16.mxu0 0
        %1307 = vmatmul.mubr.bf16.gmra.mxu0 %v1143
        %v1308 = vpop.f32.mrf.mxu0
        %v1309 = vadd.f32 0.0, %v1308
        %v1310 = vpop.f32.mrf.mxu0
        %v1311 = vpop.f32.mrf.mxu0
        %v1312 = vadd.f32 0.0, %v1311
        %v1313 = vpop.f32.mrf.mxu0
        %1314 = vmatprep.mubr.bf16.mxu0 0
        %1315 = vmatmul.mubr.bf16.gmra.mxu0 %v1146
        %v1316 = vpop.f32.mrf.mxu0
        %v1317 = vadd.f32 0.0, %v1316
        %v1318 = vpop.f32.mrf.mxu0
        %v1319 = vpop.f32.mrf.mxu0
        %v1320 = vadd.f32 0.0, %v1319
        %v1321 = vpop.f32.mrf.mxu0
        %1322 = vmatprep.mubr.bf16.mxu0 0
        %1323 = vmatmul.mubr.bf16.gmra.mxu0 %v1149
        %v1324 = vpop.f32.mrf.mxu0
        %v1325 = vadd.f32 0.0, %v1324
        %v1326 = vpop.f32.mrf.mxu0
        %v1327 = vpop.f32.mrf.mxu0
        %v1328 = vadd.f32 0.0, %v1327
        %v1329 = vpop.f32.mrf.mxu0
        %1330 = vmatprep.mubr.bf16.mxu0 0
        %1331 = vmatmul.mubr.bf16.gmra.mxu0 %v1152
        %v1332 = vpop.f32.mrf.mxu0
        %v1333 = vadd.f32 0.0, %v1332
        %v1334 = vpop.f32.mrf.mxu0
        %v1335 = vpop.f32.mrf.mxu0
        %v1336 = vadd.f32 0.0, %v1335
        %v1337 = vpop.f32.mrf.mxu0
        %1338 = vdwg.mxu0
        %1339 = vmax.xlane.f32.xlu0 %v1213
        %v1340 = vpop.xlane.xlu0 %1339
        %1341 = vmax.xlane.f32.xlu0 %v1216
        %v1342 = vpop.xlane.xlu0 %1341
        %1343 = vmax.xlane.f32.xlu0 %v1221
        %v1344 = vpop.xlane.xlu0 %1343
        %1345 = vmax.xlane.f32.xlu0 %v1224
        %v1346 = vpop.xlane.xlu0 %1345
        %1347 = vmax.xlane.f32.xlu0 %v1229
        %v1348 = vpop.xlane.xlu0 %1347
        %1349 = vmax.xlane.f32.xlu0 %v1232
        %v1350 = vpop.xlane.xlu0 %1349
        %1351 = vmax.xlane.f32.xlu0 %v1237
        %v1352 = vpop.xlane.xlu0 %1351
        %1353 = vmax.xlane.f32.xlu0 %v1240
        %v1354 = vpop.xlane.xlu0 %1353
        %1355 = vmax.xlane.f32.xlu0 %v1245
        %v1356 = vpop.xlane.xlu0 %1355
        %1357 = vmax.xlane.f32.xlu0 %v1248
        %v1358 = vpop.xlane.xlu0 %1357
        %1359 = vmax.xlane.f32.xlu0 %v1253
        %v1360 = vpop.xlane.xlu0 %1359
        %1361 = vmax.xlane.f32.xlu0 %v1256
        %v1362 = vpop.xlane.xlu0 %1361
        %1363 = vmax.xlane.f32.xlu0 %v1261
        %v1364 = vpop.xlane.xlu0 %1363
        %1365 = vmax.xlane.f32.xlu0 %v1264
        %v1366 = vpop.xlane.xlu0 %1365
        %1367 = vmax.xlane.f32.xlu0 %v1269
        %v1368 = vpop.xlane.xlu0 %1367
        %1369 = vmax.xlane.f32.xlu0 %v1272
        %v1370 = vpop.xlane.xlu0 %1369
        %1371 = vmax.xlane.f32.xlu0 %v1277
        %v1372 = vpop.xlane.xlu0 %1371
        %1373 = vmax.xlane.f32.xlu0 %v1280
        %v1374 = vpop.xlane.xlu0 %1373
        %1375 = vmax.xlane.f32.xlu0 %v1285
        %v1376 = vpop.xlane.xlu0 %1375
        %1377 = vmax.xlane.f32.xlu0 %v1288
        %v1378 = vpop.xlane.xlu0 %1377
        %1379 = vmax.xlane.f32.xlu0 %v1293
        %v1380 = vpop.xlane.xlu0 %1379
        %1381 = vmax.xlane.f32.xlu0 %v1296
        %v1382 = vpop.xlane.xlu0 %1381
        %1383 = vmax.xlane.f32.xlu0 %v1301
        %v1384 = vpop.xlane.xlu0 %1383
        %1385 = vmax.xlane.f32.xlu0 %v1304
        %v1386 = vpop.xlane.xlu0 %1385
        %1387 = vmax.xlane.f32.xlu0 %v1309
        %v1388 = vpop.xlane.xlu0 %1387
        %1389 = vmax.xlane.f32.xlu0 %v1312
        %v1390 = vpop.xlane.xlu0 %1389
        %1391 = vmax.xlane.f32.xlu0 %v1317
        %v1392 = vpop.xlane.xlu0 %1391
        %1393 = vmax.xlane.f32.xlu0 %v1320
        %v1394 = vpop.xlane.xlu0 %1393
        %1395 = vmax.xlane.f32.xlu0 %v1325
        %v1396 = vpop.xlane.xlu0 %1395
        %1397 = vmax.xlane.f32.xlu0 %v1328
        %v1398 = vpop.xlane.xlu0 %1397
        %1399 = vmax.xlane.f32.xlu0 %v1333
        %v1400 = vpop.xlane.xlu0 %1399
        %1401 = vmax.xlane.f32.xlu0 %v1336
        %v1402 = vpop.xlane.xlu0 %1401
        %v1403 = vsub.f32 %v1213, %v1340
        %v1404 = vsub.f32 %v1216, %v1342
        %v1405 = vsub.f32 %v1221, %v1344
        %v1406 = vsub.f32 %v1224, %v1346
        %v1407 = vsub.f32 %v1229, %v1348
        %v1408 = vsub.f32 %v1232, %v1350
        %v1409 = vsub.f32 %v1237, %v1352
        %v1410 = vsub.f32 %v1240, %v1354
        %v1411 = vsub.f32 %v1245, %v1356
        %v1412 = vsub.f32 %v1248, %v1358
        %v1413 = vsub.f32 %v1253, %v1360
        %v1414 = vsub.f32 %v1256, %v1362
        %v1415 = vsub.f32 %v1261, %v1364
        %v1416 = vsub.f32 %v1264, %v1366
        %v1417 = vsub.f32 %v1269, %v1368
        %v1418 = vsub.f32 %v1272, %v1370
        %v1419 = vsub.f32 %v1277, %v1372
        %v1420 = vsub.f32 %v1280, %v1374
        %v1421 = vsub.f32 %v1285, %v1376
        %v1422 = vsub.f32 %v1288, %v1378
        %v1423 = vsub.f32 %v1293, %v1380
        %v1424 = vsub.f32 %v1296, %v1382
        %v1425 = vsub.f32 %v1301, %v1384
        %v1426 = vsub.f32 %v1304, %v1386
        %v1427 = vsub.f32 %v1309, %v1388
        %v1428 = vsub.f32 %v1312, %v1390
        %v1429 = vsub.f32 %v1317, %v1392
        %v1430 = vsub.f32 %v1320, %v1394
        %v1431 = vsub.f32 %v1325, %v1396
        %v1432 = vsub.f32 %v1328, %v1398
        %v1433 = vsub.f32 %v1333, %v1400
        %v1434 = vsub.f32 %v1336, %v1402
        %v1435 = vmul.f32 %v1403, 1.442695
        %v1436 = vpow.pop %v1435
        %v1437 = vmul.f32 %v1404, 1.442695
        %v1438 = vpow.pop %v1437
        %v1439 = vmul.f32 %v1405, 1.442695
        %v1440 = vpow.pop %v1439
        %v1441 = vmul.f32 %v1406, 1.442695
        %v1442 = vpow.pop %v1441
        %v1443 = vmul.f32 %v1407, 1.442695
        %v1444 = vpow.pop %v1443
        %v1445 = vmul.f32 %v1408, 1.442695
        %v1446 = vpow.pop %v1445
        %v1447 = vmul.f32 %v1409, 1.442695
        %v1448 = vpow.pop %v1447
        %v1449 = vmul.f32 %v1410, 1.442695
        %v1450 = vpow.pop %v1449
        %v1451 = vmul.f32 %v1411, 1.442695
        %v1452 = vpow.pop %v1451
        %v1453 = vmul.f32 %v1412, 1.442695
        %v1454 = vpow.pop %v1453
        %v1455 = vmul.f32 %v1413, 1.442695
        %v1456 = vpow.pop %v1455
        %v1457 = vmul.f32 %v1414, 1.442695
        %v1458 = vpow.pop %v1457
        %v1459 = vmul.f32 %v1415, 1.442695
        %v1460 = vpow.pop %v1459
        %v1461 = vmul.f32 %v1416, 1.442695
        %v1462 = vpow.pop %v1461
        %v1463 = vmul.f32 %v1417, 1.442695
        %v1464 = vpow.pop %v1463
        %v1465 = vmul.f32 %v1418, 1.442695
        %v1466 = vpow.pop %v1465
        %v1467 = vmul.f32 %v1419, 1.442695
        %v1468 = vpow.pop %v1467
        %v1469 = vmul.f32 %v1420, 1.442695
        %v1470 = vpow.pop %v1469
        %v1471 = vmul.f32 %v1421, 1.442695
        %v1472 = vpow.pop %v1471
        %v1473 = vmul.f32 %v1422, 1.442695
        %v1474 = vpow.pop %v1473
        %v1475 = vmul.f32 %v1423, 1.442695
        %v1476 = vpow.pop %v1475
        %v1477 = vmul.f32 %v1424, 1.442695
        %v1478 = vpow.pop %v1477
        %v1479 = vmul.f32 %v1425, 1.442695
        %v1480 = vpow.pop %v1479
        %v1481 = vmul.f32 %v1426, 1.442695
        %v1482 = vpow.pop %v1481
        %v1483 = vmul.f32 %v1427, 1.442695
        %v1484 = vpow.pop %v1483
        %v1485 = vmul.f32 %v1428, 1.442695
        %v1486 = vpow.pop %v1485
        %v1487 = vmul.f32 %v1429, 1.442695
        %v1488 = vpow.pop %v1487
        %v1489 = vmul.f32 %v1430, 1.442695
        %v1490 = vpow.pop %v1489
        %v1491 = vmul.f32 %v1431, 1.442695
        %v1492 = vpow.pop %v1491
        %v1493 = vmul.f32 %v1432, 1.442695
        %v1494 = vpow.pop %v1493
        %v1495 = vmul.f32 %v1433, 1.442695
        %v1496 = vpow.pop %v1495
        %v1497 = vmul.f32 %v1434, 1.442695
        %v1498 = vpow.pop %v1497
        %1499 = vadd.xlane.f32.xlu0 %v1436
        %v1500 = vpop.xlane.xlu0 %1499
        %1501 = vadd.xlane.f32.xlu0 %v1438
        %v1502 = vpop.xlane.xlu0 %1501
        %1503 = vadd.xlane.f32.xlu0 %v1440
        %v1504 = vpop.xlane.xlu0 %1503
        %1505 = vadd.xlane.f32.xlu0 %v1442
        %v1506 = vpop.xlane.xlu0 %1505
        %1507 = vadd.xlane.f32.xlu0 %v1444
        %v1508 = vpop.xlane.xlu0 %1507
        %1509 = vadd.xlane.f32.xlu0 %v1446
        %v1510 = vpop.xlane.xlu0 %1509
        %1511 = vadd.xlane.f32.xlu0 %v1448
        %v1512 = vpop.xlane.xlu0 %1511
        %1513 = vadd.xlane.f32.xlu0 %v1450
        %v1514 = vpop.xlane.xlu0 %1513
        %1515 = vadd.xlane.f32.xlu0 %v1452
        %v1516 = vpop.xlane.xlu0 %1515
        %1517 = vadd.xlane.f32.xlu0 %v1454
        %v1518 = vpop.xlane.xlu0 %1517
        %1519 = vadd.xlane.f32.xlu0 %v1456
        %v1520 = vpop.xlane.xlu0 %1519
        %1521 = vadd.xlane.f32.xlu0 %v1458
        %v1522 = vpop.xlane.xlu0 %1521
        %1523 = vadd.xlane.f32.xlu0 %v1460
        %v1524 = vpop.xlane.xlu0 %1523
        %1525 = vadd.xlane.f32.xlu0 %v1462
        %v1526 = vpop.xlane.xlu0 %1525
        %1527 = vadd.xlane.f32.xlu0 %v1464
        %v1528 = vpop.xlane.xlu0 %1527
        %1529 = vadd.xlane.f32.xlu0 %v1466
        %v1530 = vpop.xlane.xlu0 %1529
        %1531 = vadd.xlane.f32.xlu0 %v1468
        %v1532 = vpop.xlane.xlu0 %1531
        %1533 = vadd.xlane.f32.xlu0 %v1470
        %v1534 = vpop.xlane.xlu0 %1533
        %1535 = vadd.xlane.f32.xlu0 %v1472
        %v1536 = vpop.xlane.xlu0 %1535
        %1537 = vadd.xlane.f32.xlu0 %v1474
        %v1538 = vpop.xlane.xlu0 %1537
        %1539 = vadd.xlane.f32.xlu0 %v1476
        %v1540 = vpop.xlane.xlu0 %1539
        %1541 = vadd.xlane.f32.xlu0 %v1478
        %v1542 = vpop.xlane.xlu0 %1541
        %1543 = vadd.xlane.f32.xlu0 %v1480
        %v1544 = vpop.xlane.xlu0 %1543
        %1545 = vadd.xlane.f32.xlu0 %v1482
        %v1546 = vpop.xlane.xlu0 %1545
        %1547 = vadd.xlane.f32.xlu0 %v1484
        %v1548 = vpop.xlane.xlu0 %1547
        %1549 = vadd.xlane.f32.xlu0 %v1486
        %v1550 = vpop.xlane.xlu0 %1549
        %1551 = vadd.xlane.f32.xlu0 %v1488
        %v1552 = vpop.xlane.xlu0 %1551
        %1553 = vadd.xlane.f32.xlu0 %v1490
        %v1554 = vpop.xlane.xlu0 %1553
        %1555 = vadd.xlane.f32.xlu0 %v1492
        %v1556 = vpop.xlane.xlu0 %1555
        %1557 = vadd.xlane.f32.xlu0 %v1494
        %v1558 = vpop.xlane.xlu0 %1557
        %1559 = vadd.xlane.f32.xlu0 %v1496
        %v1560 = vpop.xlane.xlu0 %1559
        %1561 = vadd.xlane.f32.xlu0 %v1498
        %v1562 = vpop.xlane.xlu0 %1561
        %v1563 = vpack.c.bf16 %v1438, %v1436
        %v1564 = vpack.c.bf16 %v1442, %v1440
        %v1565 = vpack.c.bf16 %v1446, %v1444
        %v1566 = vpack.c.bf16 %v1450, %v1448
        %v1567 = vpack.c.bf16 %v1454, %v1452
        %v1568 = vpack.c.bf16 %v1458, %v1456
        %v1569 = vpack.c.bf16 %v1462, %v1460
        %v1570 = vpack.c.bf16 %v1466, %v1464
        %v1571 = vpack.c.bf16 %v1470, %v1468
        %v1572 = vpack.c.bf16 %v1474, %v1472
        %v1573 = vpack.c.bf16 %v1478, %v1476
        %v1574 = vpack.c.bf16 %v1482, %v1480
        %v1575 = vpack.c.bf16 %v1486, %v1484
        %v1576 = vpack.c.bf16 %v1490, %v1488
        %v1577 = vpack.c.bf16 %v1494, %v1492
        %v1578 = vpack.c.bf16 %v1498, %v1496
        %1579 = vmatprep.subr.bf16.mxu0 0
        %1580 = vmatpush1.bf16.msra.mxu0 %v1104
        %1581 = vmatprep.subr.bf16.mxu0 0
        %1582 = vmatpush1.bf16.msra.mxu0 %v1102
        %1583 = vmatprep.subr.bf16.mxu0 0
        %1584 = vmatpush1.bf16.msra.mxu0 %v1100
        %1585 = vmatprep.subr.bf16.mxu0 0
        %1586 = vmatpush1.bf16.msra.mxu0 %v1098
        %1587 = vmatprep.subr.bf16.mxu0 0
        %1588 = vmatpush1.bf16.msra.mxu0 %v1096
        %1589 = vmatprep.subr.bf16.mxu0 0
        %1590 = vmatpush1.bf16.msra.mxu0 %v1094
        %1591 = vmatprep.subr.bf16.mxu0 0
        %1592 = vmatpush1.bf16.msra.mxu0 %v1092
        %1593 = vmatprep.subr.bf16.mxu0 0
        %1594 = vmatpush1.bf16.msra.mxu0 %v1090
        %1595 = vmatprep.subr.bf16.mxu0 0
        %1596 = vmatpush2.bf16.msra.mxu0 0
        %1597 = vmatprep.subr.bf16.mxu0 0
        %1598 = vmatpush2.bf16.msra.mxu0 0
        %1599 = vmatprep.subr.bf16.mxu0 0
        %1600 = vmatpush2.bf16.msra.mxu0 0
        %1601 = vmatprep.subr.bf16.mxu0 0
        %1602 = vmatpush2.bf16.msra.mxu0 0
        %1603 = vmatprep.subr.bf16.mxu0 0
        %1604 = vmatpush2.bf16.msra.mxu0 0
        %1605 = vmatprep.subr.bf16.mxu0 0
        %1606 = vmatpush2.bf16.msra.mxu0 0
        %1607 = vmatprep.subr.bf16.mxu0 0
        %1608 = vmatpush2.bf16.msra.mxu0 0
        %1609 = vmatprep.subr.bf16.mxu0 0
        %1610 = vmatpush2.bf16.msra.mxu0 0
        %1611 = vmatprep.mubr.bf16.mxu0 0
        %1612 = vmatmul.mubr.bf16.gmra.mxu0 %v1563
        %v1613 = vpop.f32.mrf.mxu0
        %v1614 = vadd.f32 0.0, %v1613
        %v1615 = vpop.f32.mrf.mxu0
        %v1616 = vpop.f32.mrf.mxu0
        %v1617 = vadd.f32 0.0, %v1616
        %v1618 = vpop.f32.mrf.mxu0
        %1619 = vmatprep.mubr.bf16.mxu0 0
        %1620 = vmatmul.mubr.bf16.gmra.mxu0 %v1564
        %v1621 = vpop.f32.mrf.mxu0
        %v1622 = vadd.f32 0.0, %v1621
        %v1623 = vpop.f32.mrf.mxu0
        %v1624 = vpop.f32.mrf.mxu0
        %v1625 = vadd.f32 0.0, %v1624
        %v1626 = vpop.f32.mrf.mxu0
        %1627 = vmatprep.mubr.bf16.mxu0 0
        %1628 = vmatmul.mubr.bf16.gmra.mxu0 %v1565
        %v1629 = vpop.f32.mrf.mxu0
        %v1630 = vadd.f32 0.0, %v1629
        %v1631 = vpop.f32.mrf.mxu0
        %v1632 = vpop.f32.mrf.mxu0
        %v1633 = vadd.f32 0.0, %v1632
        %v1634 = vpop.f32.mrf.mxu0
        %1635 = vmatprep.mubr.bf16.mxu0 0
        %1636 = vmatmul.mubr.bf16.gmra.mxu0 %v1566
        %v1637 = vpop.f32.mrf.mxu0
        %v1638 = vadd.f32 0.0, %v1637
        %v1639 = vpop.f32.mrf.mxu0
        %v1640 = vpop.f32.mrf.mxu0
        %v1641 = vadd.f32 0.0, %v1640
        %v1642 = vpop.f32.mrf.mxu0
        %1643 = vmatprep.mubr.bf16.mxu0 0
        %1644 = vmatmul.mubr.bf16.gmra.mxu0 %v1567
        %v1645 = vpop.f32.mrf.mxu0
        %v1646 = vadd.f32 0.0, %v1645
        %v1647 = vpop.f32.mrf.mxu0
        %v1648 = vpop.f32.mrf.mxu0
        %v1649 = vadd.f32 0.0, %v1648
        %v1650 = vpop.f32.mrf.mxu0
        %1651 = vmatprep.mubr.bf16.mxu0 0
        %1652 = vmatmul.mubr.bf16.gmra.mxu0 %v1568
        %v1653 = vpop.f32.mrf.mxu0
        %v1654 = vadd.f32 0.0, %v1653
        %v1655 = vpop.f32.mrf.mxu0
        %v1656 = vpop.f32.mrf.mxu0
        %v1657 = vadd.f32 0.0, %v1656
        %v1658 = vpop.f32.mrf.mxu0
        %1659 = vmatprep.mubr.bf16.mxu0 0
        %1660 = vmatmul.mubr.bf16.gmra.mxu0 %v1569
        %v1661 = vpop.f32.mrf.mxu0
        %v1662 = vadd.f32 0.0, %v1661
        %v1663 = vpop.f32.mrf.mxu0
        %v1664 = vpop.f32.mrf.mxu0
        %v1665 = vadd.f32 0.0, %v1664
        %v1666 = vpop.f32.mrf.mxu0
        %1667 = vmatprep.mubr.bf16.mxu0 0
        %1668 = vmatmul.mubr.bf16.gmra.mxu0 %v1570
        %v1669 = vpop.f32.mrf.mxu0
        %v1670 = vadd.f32 0.0, %v1669
        %v1671 = vpop.f32.mrf.mxu0
        %v1672 = vpop.f32.mrf.mxu0
        %v1673 = vadd.f32 0.0, %v1672
        %v1674 = vpop.f32.mrf.mxu0
        %1675 = vmatprep.mubr.bf16.mxu0 0
        %1676 = vmatmul.mubr.bf16.gmra.mxu0 %v1571
        %v1677 = vpop.f32.mrf.mxu0
        %v1678 = vadd.f32 0.0, %v1677
        %v1679 = vpop.f32.mrf.mxu0
        %v1680 = vpop.f32.mrf.mxu0
        %v1681 = vadd.f32 0.0, %v1680
        %v1682 = vpop.f32.mrf.mxu0
        %1683 = vmatprep.mubr.bf16.mxu0 0
        %1684 = vmatmul.mubr.bf16.gmra.mxu0 %v1572
        %v1685 = vpop.f32.mrf.mxu0
        %v1686 = vadd.f32 0.0, %v1685
        %v1687 = vpop.f32.mrf.mxu0
        %v1688 = vpop.f32.mrf.mxu0
        %v1689 = vadd.f32 0.0, %v1688
        %v1690 = vpop.f32.mrf.mxu0
        %1691 = vmatprep.mubr.bf16.mxu0 0
        %1692 = vmatmul.mubr.bf16.gmra.mxu0 %v1573
        %v1693 = vpop.f32.mrf.mxu0
        %v1694 = vadd.f32 0.0, %v1693
        %v1695 = vpop.f32.mrf.mxu0
        %v1696 = vpop.f32.mrf.mxu0
        %v1697 = vadd.f32 0.0, %v1696
        %v1698 = vpop.f32.mrf.mxu0
        %1699 = vmatprep.mubr.bf16.mxu0 0
        %1700 = vmatmul.mubr.bf16.gmra.mxu0 %v1574
        %v1701 = vpop.f32.mrf.mxu0
        %v1702 = vadd.f32 0.0, %v1701
        %v1703 = vpop.f32.mrf.mxu0
        %v1704 = vpop.f32.mrf.mxu0
        %v1705 = vadd.f32 0.0, %v1704
        %v1706 = vpop.f32.mrf.mxu0
        %1707 = vmatprep.mubr.bf16.mxu0 0
        %1708 = vmatmul.mubr.bf16.gmra.mxu0 %v1575
        %v1709 = vpop.f32.mrf.mxu0
        %v1710 = vadd.f32 0.0, %v1709
        %v1711 = vpop.f32.mrf.mxu0
        %v1712 = vpop.f32.mrf.mxu0
        %v1713 = vadd.f32 0.0, %v1712
        %v1714 = vpop.f32.mrf.mxu0
        %1715 = vmatprep.mubr.bf16.mxu0 0
        %1716 = vmatmul.mubr.bf16.gmra.mxu0 %v1576
        %v1717 = vpop.f32.mrf.mxu0
        %v1718 = vadd.f32 0.0, %v1717
        %v1719 = vpop.f32.mrf.mxu0
        %v1720 = vpop.f32.mrf.mxu0
        %v1721 = vadd.f32 0.0, %v1720
        %v1722 = vpop.f32.mrf.mxu0
        %1723 = vmatprep.mubr.bf16.mxu0 0
        %1724 = vmatmul.mubr.bf16.gmra.mxu0 %v1577
        %v1725 = vpop.f32.mrf.mxu0
        %v1726 = vadd.f32 0.0, %v1725
        %v1727 = vpop.f32.mrf.mxu0
        %v1728 = vpop.f32.mrf.mxu0
        %v1729 = vadd.f32 0.0, %v1728
        %v1730 = vpop.f32.mrf.mxu0
        %1731 = vmatprep.mubr.bf16.mxu0 0
        %1732 = vmatmul.mubr.bf16.gmra.mxu0 %v1578
        %v1733 = vpop.f32.mrf.mxu0
        %v1734 = vadd.f32 0.0, %v1733
        %v1735 = vpop.f32.mrf.mxu0
        %v1736 = vpop.f32.mrf.mxu0
        %v1737 = vadd.f32 0.0, %v1736
        %v1738 = vpop.f32.mrf.mxu0
        %1739 = vdwg.mxu0
        %v1740 = vrcp.pop %v1500
        %v1741 = vrcp.pop %v1502
        %v1742 = vrcp.pop %v1504
        %v1743 = vrcp.pop %v1506
        %v1744 = vrcp.pop %v1508
        %v1745 = vrcp.pop %v1510
        %v1746 = vrcp.pop %v1512
        %v1747 = vrcp.pop %v1514
        %v1748 = vrcp.pop %v1516
        %v1749 = vrcp.pop %v1518
        %v1750 = vrcp.pop %v1520
        %v1751 = vrcp.pop %v1522
        %v1752 = vrcp.pop %v1524
        %v1753 = vrcp.pop %v1526
        %v1754 = vrcp.pop %v1528
        %v1755 = vrcp.pop %v1530
        %v1756 = vrcp.pop %v1532
        %v1757 = vrcp.pop %v1534
        %v1758 = vrcp.pop %v1536
        %v1759 = vrcp.pop %v1538
        %v1760 = vrcp.pop %v1540
        %v1761 = vrcp.pop %v1542
        %v1762 = vrcp.pop %v1544
        %v1763 = vrcp.pop %v1546
        %v1764 = vrcp.pop %v1548
        %v1765 = vrcp.pop %v1550
        %v1766 = vrcp.pop %v1552
        %v1767 = vrcp.pop %v1554
        %v1768 = vrcp.pop %v1556
        %v1769 = vrcp.pop %v1558
        %v1770 = vrcp.pop %v1560
        %v1771 = vrcp.pop %v1562
        %v1772 = vmul.f32 %v1614, %v1740
        %v1773 = vmul.f32 %v1617, %v1741
        %v1774 = vmul.f32 %v1622, %v1742
        %v1775 = vmul.f32 %v1625, %v1743
        %v1776 = vmul.f32 %v1630, %v1744
        %v1777 = vmul.f32 %v1633, %v1745
        %v1778 = vmul.f32 %v1638, %v1746
        %v1779 = vmul.f32 %v1641, %v1747
        %v1780 = vmul.f32 %v1646, %v1748
        %v1781 = vmul.f32 %v1649, %v1749
        %v1782 = vmul.f32 %v1654, %v1750
        %v1783 = vmul.f32 %v1657, %v1751
        %v1784 = vmul.f32 %v1662, %v1752
        %v1785 = vmul.f32 %v1665, %v1753
        %v1786 = vmul.f32 %v1670, %v1754
        %v1787 = vmul.f32 %v1673, %v1755
        %v1788 = vmul.f32 %v1678, %v1756
        %v1789 = vmul.f32 %v1681, %v1757
        %v1790 = vmul.f32 %v1686, %v1758
        %v1791 = vmul.f32 %v1689, %v1759
        %v1792 = vmul.f32 %v1694, %v1760
        %v1793 = vmul.f32 %v1697, %v1761
        %v1794 = vmul.f32 %v1702, %v1762
        %v1795 = vmul.f32 %v1705, %v1763
        %v1796 = vmul.f32 %v1710, %v1764
        %v1797 = vmul.f32 %v1713, %v1765
        %v1798 = vmul.f32 %v1718, %v1766
        %v1799 = vmul.f32 %v1721, %v1767
        %v1800 = vmul.f32 %v1726, %v1768
        %v1801 = vmul.f32 %v1729, %v1769
        %v1802 = vmul.f32 %v1734, %v1770
        %v1803 = vmul.f32 %v1737, %v1771
        %v1804 = vpack.c.bf16 %v1773, %v1772
        %v1805 = vpack.c.bf16 %v1775, %v1774
        %v1806 = vpack.c.bf16 %v1777, %v1776
        %v1807 = vpack.c.bf16 %v1779, %v1778
        %v1808 = vpack.c.bf16 %v1781, %v1780
        %v1809 = vpack.c.bf16 %v1783, %v1782
        %v1810 = vpack.c.bf16 %v1785, %v1784
        %v1811 = vpack.c.bf16 %v1787, %v1786
        %v1812 = vpack.c.bf16 %v1789, %v1788
        %v1813 = vpack.c.bf16 %v1791, %v1790
        %v1814 = vpack.c.bf16 %v1793, %v1792
        %v1815 = vpack.c.bf16 %v1795, %v1794
        %v1816 = vpack.c.bf16 %v1797, %v1796
        %v1817 = vpack.c.bf16 %v1799, %v1798
        %v1818 = vpack.c.bf16 %v1801, %v1800
        %v1819 = vpack.c.bf16 %v1803, %v1802
        %v1836 = vunpack.c.l.b16 %v1804
        %v1837 = vunpack.c.h.b16 %v1804
        %v1838 = vunpack.c.l.b16 %v1805
        %v1839 = vunpack.c.h.b16 %v1805
        %v1840 = vunpack.c.l.b16 %v1806
        %v1841 = vunpack.c.h.b16 %v1806
        %v1842 = vunpack.c.l.b16 %v1807
        %v1843 = vunpack.c.h.b16 %v1807
        %v1844 = vunpack.c.l.b16 %v1808
        %v1845 = vunpack.c.h.b16 %v1808
        %v1846 = vunpack.c.l.b16 %v1809
        %v1847 = vunpack.c.h.b16 %v1809
        %v1848 = vunpack.c.l.b16 %v1810
        %v1849 = vunpack.c.h.b16 %v1810
        %v1850 = vunpack.c.l.b16 %v1811
        %v1851 = vunpack.c.h.b16 %v1811
        %v1852 = vunpack.c.l.b16 %v1812
        %v1853 = vunpack.c.h.b16 %v1812
        %v1854 = vunpack.c.l.b16 %v1813
        %v1855 = vunpack.c.h.b16 %v1813
        %v1856 = vunpack.c.l.b16 %v1814
        %v1857 = vunpack.c.h.b16 %v1814
        %v1858 = vunpack.c.l.b16 %v1815
        %v1859 = vunpack.c.h.b16 %v1815
        %v1860 = vunpack.c.l.b16 %v1816
        %v1861 = vunpack.c.h.b16 %v1816
        %v1862 = vunpack.c.l.b16 %v1817
        %v1863 = vunpack.c.h.b16 %v1817
        %v1864 = vunpack.c.l.b16 %v1818
        %v1865 = vunpack.c.h.b16 %v1818
        %v1866 = vunpack.c.l.b16 %v1819
        %v1867 = vunpack.c.h.b16 %v1819
        %v1868 = vpack.c.b16 %v1836, %v1836
        %v1869 = vpack.c.b16 %v1837, %v1837
        %v1870 = vpack.c.b16 %v1838, %v1838
        %v1871 = vpack.c.b16 %v1839, %v1839
        %v1872 = vpack.c.b16 %v1840, %v1840
        %v1873 = vpack.c.b16 %v1841, %v1841
        %v1874 = vpack.c.b16 %v1842, %v1842
        %v1875 = vpack.c.b16 %v1843, %v1843
        %v1876 = vpack.c.b16 %v1844, %v1844
        %v1877 = vpack.c.b16 %v1845, %v1845
        %v1878 = vpack.c.b16 %v1846, %v1846
        %v1879 = vpack.c.b16 %v1847, %v1847
        %v1880 = vpack.c.b16 %v1848, %v1848
        %v1881 = vpack.c.b16 %v1849, %v1849
        %v1882 = vpack.c.b16 %v1850, %v1850
        %v1883 = vpack.c.b16 %v1851, %v1851
        %v1884 = vpack.c.b16 %v1852, %v1852
        %v1885 = vpack.c.b16 %v1853, %v1853
        %v1886 = vpack.c.b16 %v1854, %v1854
        %v1887 = vpack.c.b16 %v1855, %v1855
        %v1888 = vpack.c.b16 %v1856, %v1856
        %v1889 = vpack.c.b16 %v1857, %v1857
        %v1890 = vpack.c.b16 %v1858, %v1858
        %v1891 = vpack.c.b16 %v1859, %v1859
        %v1892 = vpack.c.b16 %v1860, %v1860
        %v1893 = vpack.c.b16 %v1861, %v1861
        %v1894 = vpack.c.b16 %v1862, %v1862
        %v1895 = vpack.c.b16 %v1863, %v1863
        %v1896 = vpack.c.b16 %v1864, %v1864
        %v1897 = vpack.c.b16 %v1865, %v1865
        %v1898 = vpack.c.b16 %v1866, %v1866
        %v1899 = vpack.c.b16 %v1867, %v1867
        %vm1932 = vcmask 257024
        %1933 = vst.msk [vmem:[#allocation2] sm:$0xf] %vm1932, %v1868
        %1934 = vst.msk [vmem:[#allocation2 + $0x4] sm:$0xf] %vm1932, %v1869
        %1935 = vst.msk [vmem:[#allocation2 + $0x8] sm:$0xf] %vm1932, %v1870
        %1936 = vst.msk [vmem:[#allocation2 + $0xc] sm:$0xf] %vm1932, %v1871
        %1937 = vst.msk [vmem:[#allocation2 + $0x10] sm:$0xf] %vm1932, %v1872
        %1938 = vst.msk [vmem:[#allocation2 + $0x14] sm:$0xf] %vm1932, %v1873
        %1939 = vst.msk [vmem:[#allocation2 + $0x18] sm:$0xf] %vm1932, %v1874
        %1940 = vst.msk [vmem:[#allocation2 + $0x1c] sm:$0xf] %vm1932, %v1875
        %1941 = vst.msk [vmem:[#allocation2 + $0x20] sm:$0xf] %vm1932, %v1876
        %1942 = vst.msk [vmem:[#allocation2 + $0x24] sm:$0xf] %vm1932, %v1877
        %1943 = vst.msk [vmem:[#allocation2 + $0x28] sm:$0xf] %vm1932, %v1878
        %1944 = vst.msk [vmem:[#allocation2 + $0x2c] sm:$0xf] %vm1932, %v1879
        %1945 = vst.msk [vmem:[#allocation2 + $0x30] sm:$0xf] %vm1932, %v1880
        %1946 = vst.msk [vmem:[#allocation2 + $0x34] sm:$0xf] %vm1932, %v1881
        %1947 = vst.msk [vmem:[#allocation2 + $0x38] sm:$0xf] %vm1932, %v1882
        %1948 = vst.msk [vmem:[#allocation2 + $0x3c] sm:$0xf] %vm1932, %v1883
        %1949 = vst.msk [vmem:[#allocation2 + $0x40] sm:$0xf] %vm1932, %v1884
        %1950 = vst.msk [vmem:[#allocation2 + $0x44] sm:$0xf] %vm1932, %v1885
        %1951 = vst.msk [vmem:[#allocation2 + $0x48] sm:$0xf] %vm1932, %v1886
        %1952 = vst.msk [vmem:[#allocation2 + $0x4c] sm:$0xf] %vm1932, %v1887
        %1953 = vst.msk [vmem:[#allocation2 + $0x50] sm:$0xf] %vm1932, %v1888
        %1954 = vst.msk [vmem:[#allocation2 + $0x54] sm:$0xf] %vm1932, %v1889
        %1955 = vst.msk [vmem:[#allocation2 + $0x58] sm:$0xf] %vm1932, %v1890
        %1956 = vst.msk [vmem:[#allocation2 + $0x5c] sm:$0xf] %vm1932, %v1891
        %1957 = vst.msk [vmem:[#allocation2 + $0x60] sm:$0xf] %vm1932, %v1892
        %1958 = vst.msk [vmem:[#allocation2 + $0x64] sm:$0xf] %vm1932, %v1893
        %1959 = vst.msk [vmem:[#allocation2 + $0x68] sm:$0xf] %vm1932, %v1894
        %1960 = vst.msk [vmem:[#allocation2 + $0x6c] sm:$0xf] %vm1932, %v1895
        %1961 = vst.msk [vmem:[#allocation2 + $0x70] sm:$0xf] %vm1932, %v1896
        %1962 = vst.msk [vmem:[#allocation2 + $0x74] sm:$0xf] %vm1932, %v1897
        %1963 = vst.msk [vmem:[#allocation2 + $0x78] sm:$0xf] %vm1932, %v1898
        %1964 = vst.msk [vmem:[#allocation2 + $0x7c] sm:$0xf] %vm1932, %v1899
        %1981 = vrot.lane.b32.xlu0 %v1073, 96
        %v1982 = vpop.permute.xlu0 %1981
        %1983 = vrot.lane.b32.xlu0 %v1074, 96
        %v1984 = vpop.permute.xlu0 %1983
        %1985 = vrot.lane.b32.xlu0 %v1075, 96
        %v1986 = vpop.permute.xlu0 %1985
        %1987 = vrot.lane.b32.xlu0 %v1076, 96
        %v1988 = vpop.permute.xlu0 %1987
        %1989 = vrot.lane.b32.xlu0 %v1077, 96
        %v1990 = vpop.permute.xlu0 %1989
        %1991 = vrot.lane.b32.xlu0 %v1078, 96
        %v1992 = vpop.permute.xlu0 %1991
        %1993 = vrot.lane.b32.xlu0 %v1079, 96
        %v1994 = vpop.permute.xlu0 %1993
        %1995 = vrot.lane.b32.xlu0 %v1080, 96
        %v1996 = vpop.permute.xlu0 %1995
        %1997 = vrot.lane.b32.xlu0 %v1081, 96
        %v1998 = vpop.permute.xlu0 %1997
        %1999 = vrot.lane.b32.xlu0 %v1082, 96
        %v2000 = vpop.permute.xlu0 %1999
        %2001 = vrot.lane.b32.xlu0 %v1083, 96
        %v2002 = vpop.permute.xlu0 %2001
        %2003 = vrot.lane.b32.xlu0 %v1084, 96
        %v2004 = vpop.permute.xlu0 %2003
        %2005 = vrot.lane.b32.xlu0 %v1085, 96
        %v2006 = vpop.permute.xlu0 %2005
        %2007 = vrot.lane.b32.xlu0 %v1086, 96
        %v2008 = vpop.permute.xlu0 %2007
        %2009 = vrot.lane.b32.xlu0 %v1087, 96
        %v2010 = vpop.permute.xlu0 %2009
        %2011 = vrot.lane.b32.xlu0 %v1088, 96
        %v2012 = vpop.permute.xlu0 %2011
        %2021 = vrot.lane.b32.xlu0 %v1089, 96
        %v2022 = vpop.permute.xlu0 %2021
        %2023 = vrot.lane.b32.xlu0 %v1091, 96
        %v2024 = vpop.permute.xlu0 %2023
        %2025 = vrot.lane.b32.xlu0 %v1093, 96
        %v2026 = vpop.permute.xlu0 %2025
        %2027 = vrot.lane.b32.xlu0 %v1095, 96
        %v2028 = vpop.permute.xlu0 %2027
        %2029 = vrot.lane.b32.xlu0 %v1097, 96
        %v2030 = vpop.permute.xlu0 %2029
        %2031 = vrot.lane.b32.xlu0 %v1099, 96
        %v2032 = vpop.permute.xlu0 %2031
        %2033 = vrot.lane.b32.xlu0 %v1101, 96
        %v2034 = vpop.permute.xlu0 %2033
        %2035 = vrot.lane.b32.xlu0 %v1103, 96
        %v2036 = vpop.permute.xlu0 %2035
        %v2038 = vsel %vm1105, %v1982, 0
        %v2041 = vsel %vm1105, %v1984, 0
        %v2044 = vsel %vm1105, %v1986, 0
        %v2047 = vsel %vm1105, %v1988, 0
        %v2050 = vsel %vm1105, %v1990, 0
        %v2053 = vsel %vm1105, %v1992, 0
        %v2056 = vsel %vm1105, %v1994, 0
        %v2059 = vsel %vm1105, %v1996, 0
        %v2062 = vsel %vm1105, %v1998, 0
        %v2065 = vsel %vm1105, %v2000, 0
        %v2068 = vsel %vm1105, %v2002, 0
        %v2071 = vsel %vm1105, %v2004, 0
        %v2074 = vsel %vm1105, %v2006, 0
        %v2077 = vsel %vm1105, %v2008, 0
        %v2080 = vsel %vm1105, %v2010, 0
        %v2083 = vsel %vm1105, %v2012, 0
        %v2086 = vsel %vm1105, %v2022, 0
        %v2089 = vsel %vm1105, %v2024, 0
        %v2092 = vsel %vm1105, %v2026, 0
        %v2095 = vsel %vm1105, %v2028, 0
        %v2098 = vsel %vm1105, %v2030, 0
        %v2101 = vsel %vm1105, %v2032, 0
        %v2104 = vsel %vm1105, %v2034, 0
        %v2107 = vsel %vm1105, %v2036, 0
        %2109 = vmatprep.subr.bf16.mxu0 0
        %2110 = vmatpush1.bf16.xpose.msra.mxu0 %v2107
        %2111 = vmatprep.subr.bf16.mxu0 0
        %2112 = vmatpush1.bf16.xpose.msra.mxu0 %v2104
        %2113 = vmatprep.subr.bf16.mxu0 0
        %2114 = vmatpush1.bf16.xpose.msra.mxu0 %v2101
        %2115 = vmatprep.subr.bf16.mxu0 0
        %2116 = vmatpush1.bf16.xpose.msra.mxu0 %v2098
        %2117 = vmatprep.subr.bf16.mxu0 0
        %2118 = vmatpush1.bf16.xpose.msra.mxu0 %v2095
        %2119 = vmatprep.subr.bf16.mxu0 0
        %2120 = vmatpush1.bf16.xpose.msra.mxu0 %v2092
        %2121 = vmatprep.subr.bf16.mxu0 0
        %2122 = vmatpush1.bf16.xpose.msra.mxu0 %v2089
        %2123 = vmatprep.subr.bf16.mxu0 0
        %2124 = vmatpush1.bf16.xpose.msra.mxu0 %v2086
        %2125 = vmatprep.subr.bf16.mxu0 0
        %2126 = vmatpush2.bf16.xpose.msra.mxu0 0
        %2127 = vmatprep.subr.bf16.mxu0 0
        %2128 = vmatpush2.bf16.xpose.msra.mxu0 0
        %2129 = vmatprep.subr.bf16.mxu0 0
        %2130 = vmatpush2.bf16.xpose.msra.mxu0 0
        %2131 = vmatprep.subr.bf16.mxu0 0
        %2132 = vmatpush2.bf16.xpose.msra.mxu0 0
        %2133 = vmatprep.subr.bf16.mxu0 0
        %2134 = vmatpush2.bf16.xpose.msra.mxu0 0
        %2135 = vmatprep.subr.bf16.mxu0 0
        %2136 = vmatpush2.bf16.xpose.msra.mxu0 0
        %2137 = vmatprep.subr.bf16.mxu0 0
        %2138 = vmatpush2.bf16.xpose.msra.mxu0 0
        %2139 = vmatprep.subr.bf16.mxu0 0
        %2140 = vmatpush2.bf16.xpose.msra.mxu0 0
        %2141 = vmatprep.mubr.bf16.mxu0 0
        %2142 = vmatmul.mubr.bf16.gmra.mxu0 %v2038
        %v2143 = vpop.f32.mrf.mxu0
        %v2144 = vadd.f32 0.0, %v2143
        %v2145 = vpop.f32.mrf.mxu0
        %v2146 = vpop.f32.mrf.mxu0
        %v2147 = vadd.f32 0.0, %v2146
        %v2148 = vpop.f32.mrf.mxu0
        %2149 = vmatprep.mubr.bf16.mxu0 0
        %2150 = vmatmul.mubr.bf16.gmra.mxu0 %v2041
        %v2151 = vpop.f32.mrf.mxu0
        %v2152 = vadd.f32 0.0, %v2151
        %v2153 = vpop.f32.mrf.mxu0
        %v2154 = vpop.f32.mrf.mxu0
        %v2155 = vadd.f32 0.0, %v2154
        %v2156 = vpop.f32.mrf.mxu0
        %2157 = vmatprep.mubr.bf16.mxu0 0
        %2158 = vmatmul.mubr.bf16.gmra.mxu0 %v2044
        %v2159 = vpop.f32.mrf.mxu0
        %v2160 = vadd.f32 0.0, %v2159
        %v2161 = vpop.f32.mrf.mxu0
        %v2162 = vpop.f32.mrf.mxu0
        %v2163 = vadd.f32 0.0, %v2162
        %v2164 = vpop.f32.mrf.mxu0
        %2165 = vmatprep.mubr.bf16.mxu0 0
        %2166 = vmatmul.mubr.bf16.gmra.mxu0 %v2047
        %v2167 = vpop.f32.mrf.mxu0
        %v2168 = vadd.f32 0.0, %v2167
        %v2169 = vpop.f32.mrf.mxu0
        %v2170 = vpop.f32.mrf.mxu0
        %v2171 = vadd.f32 0.0, %v2170
        %v2172 = vpop.f32.mrf.mxu0
        %2173 = vmatprep.mubr.bf16.mxu0 0
        %2174 = vmatmul.mubr.bf16.gmra.mxu0 %v2050
        %v2175 = vpop.f32.mrf.mxu0
        %v2176 = vadd.f32 0.0, %v2175
        %v2177 = vpop.f32.mrf.mxu0
        %v2178 = vpop.f32.mrf.mxu0
        %v2179 = vadd.f32 0.0, %v2178
        %v2180 = vpop.f32.mrf.mxu0
        %2181 = vmatprep.mubr.bf16.mxu0 0
        %2182 = vmatmul.mubr.bf16.gmra.mxu0 %v2053
        %v2183 = vpop.f32.mrf.mxu0
        %v2184 = vadd.f32 0.0, %v2183
        %v2185 = vpop.f32.mrf.mxu0
        %v2186 = vpop.f32.mrf.mxu0
        %v2187 = vadd.f32 0.0, %v2186
        %v2188 = vpop.f32.mrf.mxu0
        %2189 = vmatprep.mubr.bf16.mxu0 0
        %2190 = vmatmul.mubr.bf16.gmra.mxu0 %v2056
        %v2191 = vpop.f32.mrf.mxu0
        %v2192 = vadd.f32 0.0, %v2191
        %v2193 = vpop.f32.mrf.mxu0
        %v2194 = vpop.f32.mrf.mxu0
        %v2195 = vadd.f32 0.0, %v2194
        %v2196 = vpop.f32.mrf.mxu0
        %2197 = vmatprep.mubr.bf16.mxu0 0
        %2198 = vmatmul.mubr.bf16.gmra.mxu0 %v2059
        %v2199 = vpop.f32.mrf.mxu0
        %v2200 = vadd.f32 0.0, %v2199
        %v2201 = vpop.f32.mrf.mxu0
        %v2202 = vpop.f32.mrf.mxu0
        %v2203 = vadd.f32 0.0, %v2202
        %v2204 = vpop.f32.mrf.mxu0
        %2205 = vmatprep.mubr.bf16.mxu0 0
        %2206 = vmatmul.mubr.bf16.gmra.mxu0 %v2062
        %v2207 = vpop.f32.mrf.mxu0
        %v2208 = vadd.f32 0.0, %v2207
        %v2209 = vpop.f32.mrf.mxu0
        %v2210 = vpop.f32.mrf.mxu0
        %v2211 = vadd.f32 0.0, %v2210
        %v2212 = vpop.f32.mrf.mxu0
        %2213 = vmatprep.mubr.bf16.mxu0 0
        %2214 = vmatmul.mubr.bf16.gmra.mxu0 %v2065
        %v2215 = vpop.f32.mrf.mxu0
        %v2216 = vadd.f32 0.0, %v2215
        %v2217 = vpop.f32.mrf.mxu0
        %v2218 = vpop.f32.mrf.mxu0
        %v2219 = vadd.f32 0.0, %v2218
        %v2220 = vpop.f32.mrf.mxu0
        %2221 = vmatprep.mubr.bf16.mxu0 0
        %2222 = vmatmul.mubr.bf16.gmra.mxu0 %v2068
        %v2223 = vpop.f32.mrf.mxu0
        %v2224 = vadd.f32 0.0, %v2223
        %v2225 = vpop.f32.mrf.mxu0
        %v2226 = vpop.f32.mrf.mxu0
        %v2227 = vadd.f32 0.0, %v2226
        %v2228 = vpop.f32.mrf.mxu0
        %2229 = vmatprep.mubr.bf16.mxu0 0
        %2230 = vmatmul.mubr.bf16.gmra.mxu0 %v2071
        %v2231 = vpop.f32.mrf.mxu0
        %v2232 = vadd.f32 0.0, %v2231
        %v2233 = vpop.f32.mrf.mxu0
        %v2234 = vpop.f32.mrf.mxu0
        %v2235 = vadd.f32 0.0, %v2234
        %v2236 = vpop.f32.mrf.mxu0
        %2237 = vmatprep.mubr.bf16.mxu0 0
        %2238 = vmatmul.mubr.bf16.gmra.mxu0 %v2074
        %v2239 = vpop.f32.mrf.mxu0
        %v2240 = vadd.f32 0.0, %v2239
        %v2241 = vpop.f32.mrf.mxu0
        %v2242 = vpop.f32.mrf.mxu0
        %v2243 = vadd.f32 0.0, %v2242
        %v2244 = vpop.f32.mrf.mxu0
        %2245 = vmatprep.mubr.bf16.mxu0 0
        %2246 = vmatmul.mubr.bf16.gmra.mxu0 %v2077
        %v2247 = vpop.f32.mrf.mxu0
        %v2248 = vadd.f32 0.0, %v2247
        %v2249 = vpop.f32.mrf.mxu0
        %v2250 = vpop.f32.mrf.mxu0
        %v2251 = vadd.f32 0.0, %v2250
        %v2252 = vpop.f32.mrf.mxu0
        %2253 = vmatprep.mubr.bf16.mxu0 0
        %2254 = vmatmul.mubr.bf16.gmra.mxu0 %v2080
        %v2255 = vpop.f32.mrf.mxu0
        %v2256 = vadd.f32 0.0, %v2255
        %v2257 = vpop.f32.mrf.mxu0
        %v2258 = vpop.f32.mrf.mxu0
        %v2259 = vadd.f32 0.0, %v2258
        %v2260 = vpop.f32.mrf.mxu0
        %2261 = vmatprep.mubr.bf16.mxu0 0
        %2262 = vmatmul.mubr.bf16.gmra.mxu0 %v2083
        %v2263 = vpop.f32.mrf.mxu0
        %v2264 = vadd.f32 0.0, %v2263
        %v2265 = vpop.f32.mrf.mxu0
        %v2266 = vpop.f32.mrf.mxu0
        %v2267 = vadd.f32 0.0, %v2266
        %v2268 = vpop.f32.mrf.mxu0
        %2269 = vdwg.mxu0
        %2270 = vmax.xlane.f32.xlu0 %v2144
        %v2271 = vpop.xlane.xlu0 %2270
        %2272 = vmax.xlane.f32.xlu0 %v2147
        %v2273 = vpop.xlane.xlu0 %2272
        %2274 = vmax.xlane.f32.xlu0 %v2152
        %v2275 = vpop.xlane.xlu0 %2274
        %2276 = vmax.xlane.f32.xlu0 %v2155
        %v2277 = vpop.xlane.xlu0 %2276
        %2278 = vmax.xlane.f32.xlu0 %v2160
        %v2279 = vpop.xlane.xlu0 %2278
        %2280 = vmax.xlane.f32.xlu0 %v2163
        %v2281 = vpop.xlane.xlu0 %2280
        %2282 = vmax.xlane.f32.xlu0 %v2168
        %v2283 = vpop.xlane.xlu0 %2282
        %2284 = vmax.xlane.f32.xlu0 %v2171
        %v2285 = vpop.xlane.xlu0 %2284
        %2286 = vmax.xlane.f32.xlu0 %v2176
        %v2287 = vpop.xlane.xlu0 %2286
        %2288 = vmax.xlane.f32.xlu0 %v2179
        %v2289 = vpop.xlane.xlu0 %2288
        %2290 = vmax.xlane.f32.xlu0 %v2184
        %v2291 = vpop.xlane.xlu0 %2290
        %2292 = vmax.xlane.f32.xlu0 %v2187
        %v2293 = vpop.xlane.xlu0 %2292
        %2294 = vmax.xlane.f32.xlu0 %v2192
        %v2295 = vpop.xlane.xlu0 %2294
        %2296 = vmax.xlane.f32.xlu0 %v2195
        %v2297 = vpop.xlane.xlu0 %2296
        %2298 = vmax.xlane.f32.xlu0 %v2200
        %v2299 = vpop.xlane.xlu0 %2298
        %2300 = vmax.xlane.f32.xlu0 %v2203
        %v2301 = vpop.xlane.xlu0 %2300
        %2302 = vmax.xlane.f32.xlu0 %v2208
        %v2303 = vpop.xlane.xlu0 %2302
        %2304 = vmax.xlane.f32.xlu0 %v2211
        %v2305 = vpop.xlane.xlu0 %2304
        %2306 = vmax.xlane.f32.xlu0 %v2216
        %v2307 = vpop.xlane.xlu0 %2306
        %2308 = vmax.xlane.f32.xlu0 %v2219
        %v2309 = vpop.xlane.xlu0 %2308
        %2310 = vmax.xlane.f32.xlu0 %v2224
        %v2311 = vpop.xlane.xlu0 %2310
        %2312 = vmax.xlane.f32.xlu0 %v2227
        %v2313 = vpop.xlane.xlu0 %2312
        %2314 = vmax.xlane.f32.xlu0 %v2232
        %v2315 = vpop.xlane.xlu0 %2314
        %2316 = vmax.xlane.f32.xlu0 %v2235
        %v2317 = vpop.xlane.xlu0 %2316
        %2318 = vmax.xlane.f32.xlu0 %v2240
        %v2319 = vpop.xlane.xlu0 %2318
        %2320 = vmax.xlane.f32.xlu0 %v2243
        %v2321 = vpop.xlane.xlu0 %2320
        %2322 = vmax.xlane.f32.xlu0 %v2248
        %v2323 = vpop.xlane.xlu0 %2322
        %2324 = vmax.xlane.f32.xlu0 %v2251
        %v2325 = vpop.xlane.xlu0 %2324
        %2326 = vmax.xlane.f32.xlu0 %v2256
        %v2327 = vpop.xlane.xlu0 %2326
        %2328 = vmax.xlane.f32.xlu0 %v2259
        %v2329 = vpop.xlane.xlu0 %2328
        %2330 = vmax.xlane.f32.xlu0 %v2264
        %v2331 = vpop.xlane.xlu0 %2330
        %2332 = vmax.xlane.f32.xlu0 %v2267
        %v2333 = vpop.xlane.xlu0 %2332
        %v2334 = vsub.f32 %v2144, %v2271
        %v2335 = vsub.f32 %v2147, %v2273
        %v2336 = vsub.f32 %v2152, %v2275
        %v2337 = vsub.f32 %v2155, %v2277
        %v2338 = vsub.f32 %v2160, %v2279
        %v2339 = vsub.f32 %v2163, %v2281
        %v2340 = vsub.f32 %v2168, %v2283
        %v2341 = vsub.f32 %v2171, %v2285
        %v2342 = vsub.f32 %v2176, %v2287
        %v2343 = vsub.f32 %v2179, %v2289
        %v2344 = vsub.f32 %v2184, %v2291
        %v2345 = vsub.f32 %v2187, %v2293
        %v2346 = vsub.f32 %v2192, %v2295
        %v2347 = vsub.f32 %v2195, %v2297
        %v2348 = vsub.f32 %v2200, %v2299
        %v2349 = vsub.f32 %v2203, %v2301
        %v2350 = vsub.f32 %v2208, %v2303
        %v2351 = vsub.f32 %v2211, %v2305
        %v2352 = vsub.f32 %v2216, %v2307
        %v2353 = vsub.f32 %v2219, %v2309
        %v2354 = vsub.f32 %v2224, %v2311
        %v2355 = vsub.f32 %v2227, %v2313
        %v2356 = vsub.f32 %v2232, %v2315
        %v2357 = vsub.f32 %v2235, %v2317
        %v2358 = vsub.f32 %v2240, %v2319
        %v2359 = vsub.f32 %v2243, %v2321
        %v2360 = vsub.f32 %v2248, %v2323
        %v2361 = vsub.f32 %v2251, %v2325
        %v2362 = vsub.f32 %v2256, %v2327
        %v2363 = vsub.f32 %v2259, %v2329
        %v2364 = vsub.f32 %v2264, %v2331
        %v2365 = vsub.f32 %v2267, %v2333
        %v2366 = vmul.f32 %v2334, 1.442695
        %v2367 = vpow.pop %v2366
        %v2368 = vmul.f32 %v2335, 1.442695
        %v2369 = vpow.pop %v2368
        %v2370 = vmul.f32 %v2336, 1.442695
        %v2371 = vpow.pop %v2370
        %v2372 = vmul.f32 %v2337, 1.442695
        %v2373 = vpow.pop %v2372
        %v2374 = vmul.f32 %v2338, 1.442695
        %v2375 = vpow.pop %v2374
        %v2376 = vmul.f32 %v2339, 1.442695
        %v2377 = vpow.pop %v2376
        %v2378 = vmul.f32 %v2340, 1.442695
        %v2379 = vpow.pop %v2378
        %v2380 = vmul.f32 %v2341, 1.442695
        %v2381 = vpow.pop %v2380
        %v2382 = vmul.f32 %v2342, 1.442695
        %v2383 = vpow.pop %v2382
        %v2384 = vmul.f32 %v2343, 1.442695
        %v2385 = vpow.pop %v2384
        %v2386 = vmul.f32 %v2344, 1.442695
        %v2387 = vpow.pop %v2386
        %v2388 = vmul.f32 %v2345, 1.442695
        %v2389 = vpow.pop %v2388
        %v2390 = vmul.f32 %v2346, 1.442695
        %v2391 = vpow.pop %v2390
        %v2392 = vmul.f32 %v2347, 1.442695
        %v2393 = vpow.pop %v2392
        %v2394 = vmul.f32 %v2348, 1.442695
        %v2395 = vpow.pop %v2394
        %v2396 = vmul.f32 %v2349, 1.442695
        %v2397 = vpow.pop %v2396
        %v2398 = vmul.f32 %v2350, 1.442695
        %v2399 = vpow.pop %v2398
        %v2400 = vmul.f32 %v2351, 1.442695
        %v2401 = vpow.pop %v2400
        %v2402 = vmul.f32 %v2352, 1.442695
        %v2403 = vpow.pop %v2402
        %v2404 = vmul.f32 %v2353, 1.442695
        %v2405 = vpow.pop %v2404
        %v2406 = vmul.f32 %v2354, 1.442695
        %v2407 = vpow.pop %v2406
        %v2408 = vmul.f32 %v2355, 1.442695
        %v2409 = vpow.pop %v2408
        %v2410 = vmul.f32 %v2356, 1.442695
        %v2411 = vpow.pop %v2410
        %v2412 = vmul.f32 %v2357, 1.442695
        %v2413 = vpow.pop %v2412
        %v2414 = vmul.f32 %v2358, 1.442695
        %v2415 = vpow.pop %v2414
        %v2416 = vmul.f32 %v2359, 1.442695
        %v2417 = vpow.pop %v2416
        %v2418 = vmul.f32 %v2360, 1.442695
        %v2419 = vpow.pop %v2418
        %v2420 = vmul.f32 %v2361, 1.442695
        %v2421 = vpow.pop %v2420
        %v2422 = vmul.f32 %v2362, 1.442695
        %v2423 = vpow.pop %v2422
        %v2424 = vmul.f32 %v2363, 1.442695
        %v2425 = vpow.pop %v2424
        %v2426 = vmul.f32 %v2364, 1.442695
        %v2427 = vpow.pop %v2426
        %v2428 = vmul.f32 %v2365, 1.442695
        %v2429 = vpow.pop %v2428
        %2430 = vadd.xlane.f32.xlu0 %v2367
        %v2431 = vpop.xlane.xlu0 %2430
        %2432 = vadd.xlane.f32.xlu0 %v2369
        %v2433 = vpop.xlane.xlu0 %2432
        %2434 = vadd.xlane.f32.xlu0 %v2371
        %v2435 = vpop.xlane.xlu0 %2434
        %2436 = vadd.xlane.f32.xlu0 %v2373
        %v2437 = vpop.xlane.xlu0 %2436
        %2438 = vadd.xlane.f32.xlu0 %v2375
        %v2439 = vpop.xlane.xlu0 %2438
        %2440 = vadd.xlane.f32.xlu0 %v2377
        %v2441 = vpop.xlane.xlu0 %2440
        %2442 = vadd.xlane.f32.xlu0 %v2379
        %v2443 = vpop.xlane.xlu0 %2442
        %2444 = vadd.xlane.f32.xlu0 %v2381
        %v2445 = vpop.xlane.xlu0 %2444
        %2446 = vadd.xlane.f32.xlu0 %v2383
        %v2447 = vpop.xlane.xlu0 %2446
        %2448 = vadd.xlane.f32.xlu0 %v2385
        %v2449 = vpop.xlane.xlu0 %2448
        %2450 = vadd.xlane.f32.xlu0 %v2387
        %v2451 = vpop.xlane.xlu0 %2450
        %2452 = vadd.xlane.f32.xlu0 %v2389
        %v2453 = vpop.xlane.xlu0 %2452
        %2454 = vadd.xlane.f32.xlu0 %v2391
        %v2455 = vpop.xlane.xlu0 %2454
        %2456 = vadd.xlane.f32.xlu0 %v2393
        %v2457 = vpop.xlane.xlu0 %2456
        %2458 = vadd.xlane.f32.xlu0 %v2395
        %v2459 = vpop.xlane.xlu0 %2458
        %2460 = vadd.xlane.f32.xlu0 %v2397
        %v2461 = vpop.xlane.xlu0 %2460
        %2462 = vadd.xlane.f32.xlu0 %v2399
        %v2463 = vpop.xlane.xlu0 %2462
        %2464 = vadd.xlane.f32.xlu0 %v2401
        %v2465 = vpop.xlane.xlu0 %2464
        %2466 = vadd.xlane.f32.xlu0 %v2403
        %v2467 = vpop.xlane.xlu0 %2466
        %2468 = vadd.xlane.f32.xlu0 %v2405
        %v2469 = vpop.xlane.xlu0 %2468
        %2470 = vadd.xlane.f32.xlu0 %v2407
        %v2471 = vpop.xlane.xlu0 %2470
        %2472 = vadd.xlane.f32.xlu0 %v2409
        %v2473 = vpop.xlane.xlu0 %2472
        %2474 = vadd.xlane.f32.xlu0 %v2411
        %v2475 = vpop.xlane.xlu0 %2474
        %2476 = vadd.xlane.f32.xlu0 %v2413
        %v2477 = vpop.xlane.xlu0 %2476
        %2478 = vadd.xlane.f32.xlu0 %v2415
        %v2479 = vpop.xlane.xlu0 %2478
        %2480 = vadd.xlane.f32.xlu0 %v2417
        %v2481 = vpop.xlane.xlu0 %2480
        %2482 = vadd.xlane.f32.xlu0 %v2419
        %v2483 = vpop.xlane.xlu0 %2482
        %2484 = vadd.xlane.f32.xlu0 %v2421
        %v2485 = vpop.xlane.xlu0 %2484
        %2486 = vadd.xlane.f32.xlu0 %v2423
        %v2487 = vpop.xlane.xlu0 %2486
        %2488 = vadd.xlane.f32.xlu0 %v2425
        %v2489 = vpop.xlane.xlu0 %2488
        %2490 = vadd.xlane.f32.xlu0 %v2427
        %v2491 = vpop.xlane.xlu0 %2490
        %2492 = vadd.xlane.f32.xlu0 %v2429
        %v2493 = vpop.xlane.xlu0 %2492
        %v2494 = vpack.c.bf16 %v2369, %v2367
        %v2495 = vpack.c.bf16 %v2373, %v2371
        %v2496 = vpack.c.bf16 %v2377, %v2375
        %v2497 = vpack.c.bf16 %v2381, %v2379
        %v2498 = vpack.c.bf16 %v2385, %v2383
        %v2499 = vpack.c.bf16 %v2389, %v2387
        %v2500 = vpack.c.bf16 %v2393, %v2391
        %v2501 = vpack.c.bf16 %v2397, %v2395
        %v2502 = vpack.c.bf16 %v2401, %v2399
        %v2503 = vpack.c.bf16 %v2405, %v2403
        %v2504 = vpack.c.bf16 %v2409, %v2407
        %v2505 = vpack.c.bf16 %v2413, %v2411
        %v2506 = vpack.c.bf16 %v2417, %v2415
        %v2507 = vpack.c.bf16 %v2421, %v2419
        %v2508 = vpack.c.bf16 %v2425, %v2423
        %v2509 = vpack.c.bf16 %v2429, %v2427
        %2518 = vrot.lane.b32.xlu0 %v1090, 96
        %v2519 = vpop.permute.xlu0 %2518
        %2520 = vrot.lane.b32.xlu0 %v1092, 96
        %v2521 = vpop.permute.xlu0 %2520
        %2522 = vrot.lane.b32.xlu0 %v1094, 96
        %v2523 = vpop.permute.xlu0 %2522
        %2524 = vrot.lane.b32.xlu0 %v1096, 96
        %v2525 = vpop.permute.xlu0 %2524
        %2526 = vrot.lane.b32.xlu0 %v1098, 96
        %v2527 = vpop.permute.xlu0 %2526
        %2528 = vrot.lane.b32.xlu0 %v1100, 96
        %v2529 = vpop.permute.xlu0 %2528
        %2530 = vrot.lane.b32.xlu0 %v1102, 96
        %v2531 = vpop.permute.xlu0 %2530
        %2532 = vrot.lane.b32.xlu0 %v1104, 96
        %v2533 = vpop.permute.xlu0 %2532
        %2542 = vmatprep.subr.bf16.mxu0 0
        %2543 = vmatpush1.bf16.msra.mxu0 %v2533
        %2544 = vmatprep.subr.bf16.mxu0 0
        %2545 = vmatpush1.bf16.msra.mxu0 %v2531
        %2546 = vmatprep.subr.bf16.mxu0 0
        %2547 = vmatpush1.bf16.msra.mxu0 %v2529
        %2548 = vmatprep.subr.bf16.mxu0 0
        %2549 = vmatpush1.bf16.msra.mxu0 %v2527
        %2550 = vmatprep.subr.bf16.mxu0 0
        %2551 = vmatpush1.bf16.msra.mxu0 %v2525
        %2552 = vmatprep.subr.bf16.mxu0 0
        %2553 = vmatpush1.bf16.msra.mxu0 %v2523
        %2554 = vmatprep.subr.bf16.mxu0 0
        %2555 = vmatpush1.bf16.msra.mxu0 %v2521
        %2556 = vmatprep.subr.bf16.mxu0 0
        %2557 = vmatpush1.bf16.msra.mxu0 %v2519
        %2558 = vmatprep.subr.bf16.mxu0 0
        %2559 = vmatpush2.bf16.msra.mxu0 0
        %2560 = vmatprep.subr.bf16.mxu0 0
        %2561 = vmatpush2.bf16.msra.mxu0 0
        %2562 = vmatprep.subr.bf16.mxu0 0
        %2563 = vmatpush2.bf16.msra.mxu0 0
        %2564 = vmatprep.subr.bf16.mxu0 0
        %2565 = vmatpush2.bf16.msra.mxu0 0
        %2566 = vmatprep.subr.bf16.mxu0 0
        %2567 = vmatpush2.bf16.msra.mxu0 0
        %2568 = vmatprep.subr.bf16.mxu0 0
        %2569 = vmatpush2.bf16.msra.mxu0 0
        %2570 = vmatprep.subr.bf16.mxu0 0
        %2571 = vmatpush2.bf16.msra.mxu0 0
        %2572 = vmatprep.subr.bf16.mxu0 0
        %2573 = vmatpush2.bf16.msra.mxu0 0
        %2574 = vmatprep.mubr.bf16.mxu0 0
        %2575 = vmatmul.mubr.bf16.gmra.mxu0 %v2494
        %v2576 = vpop.f32.mrf.mxu0
        %v2577 = vadd.f32 0.0, %v2576
        %v2578 = vpop.f32.mrf.mxu0
        %v2579 = vpop.f32.mrf.mxu0
        %v2580 = vadd.f32 0.0, %v2579
        %v2581 = vpop.f32.mrf.mxu0
        %2582 = vmatprep.mubr.bf16.mxu0 0
        %2583 = vmatmul.mubr.bf16.gmra.mxu0 %v2495
        %v2584 = vpop.f32.mrf.mxu0
        %v2585 = vadd.f32 0.0, %v2584
        %v2586 = vpop.f32.mrf.mxu0
        %v2587 = vpop.f32.mrf.mxu0
        %v2588 = vadd.f32 0.0, %v2587
        %v2589 = vpop.f32.mrf.mxu0
        %2590 = vmatprep.mubr.bf16.mxu0 0
        %2591 = vmatmul.mubr.bf16.gmra.mxu0 %v2496
        %v2592 = vpop.f32.mrf.mxu0
        %v2593 = vadd.f32 0.0, %v2592
        %v2594 = vpop.f32.mrf.mxu0
        %v2595 = vpop.f32.mrf.mxu0
        %v2596 = vadd.f32 0.0, %v2595
        %v2597 = vpop.f32.mrf.mxu0
        %2598 = vmatprep.mubr.bf16.mxu0 0
        %2599 = vmatmul.mubr.bf16.gmra.mxu0 %v2497
        %v2600 = vpop.f32.mrf.mxu0
        %v2601 = vadd.f32 0.0, %v2600
        %v2602 = vpop.f32.mrf.mxu0
        %v2603 = vpop.f32.mrf.mxu0
        %v2604 = vadd.f32 0.0, %v2603
        %v2605 = vpop.f32.mrf.mxu0
        %2606 = vmatprep.mubr.bf16.mxu0 0
        %2607 = vmatmul.mubr.bf16.gmra.mxu0 %v2498
        %v2608 = vpop.f32.mrf.mxu0
        %v2609 = vadd.f32 0.0, %v2608
        %v2610 = vpop.f32.mrf.mxu0
        %v2611 = vpop.f32.mrf.mxu0
        %v2612 = vadd.f32 0.0, %v2611
        %v2613 = vpop.f32.mrf.mxu0
        %2614 = vmatprep.mubr.bf16.mxu0 0
        %2615 = vmatmul.mubr.bf16.gmra.mxu0 %v2499
        %v2616 = vpop.f32.mrf.mxu0
        %v2617 = vadd.f32 0.0, %v2616
        %v2618 = vpop.f32.mrf.mxu0
        %v2619 = vpop.f32.mrf.mxu0
        %v2620 = vadd.f32 0.0, %v2619
        %v2621 = vpop.f32.mrf.mxu0
        %2622 = vmatprep.mubr.bf16.mxu0 0
        %2623 = vmatmul.mubr.bf16.gmra.mxu0 %v2500
        %v2624 = vpop.f32.mrf.mxu0
        %v2625 = vadd.f32 0.0, %v2624
        %v2626 = vpop.f32.mrf.mxu0
        %v2627 = vpop.f32.mrf.mxu0
        %v2628 = vadd.f32 0.0, %v2627
        %v2629 = vpop.f32.mrf.mxu0
        %2630 = vmatprep.mubr.bf16.mxu0 0
        %2631 = vmatmul.mubr.bf16.gmra.mxu0 %v2501
        %v2632 = vpop.f32.mrf.mxu0
        %v2633 = vadd.f32 0.0, %v2632
        %v2634 = vpop.f32.mrf.mxu0
        %v2635 = vpop.f32.mrf.mxu0
        %v2636 = vadd.f32 0.0, %v2635
        %v2637 = vpop.f32.mrf.mxu0
        %2638 = vmatprep.mubr.bf16.mxu0 0
        %2639 = vmatmul.mubr.bf16.gmra.mxu0 %v2502
        %v2640 = vpop.f32.mrf.mxu0
        %v2641 = vadd.f32 0.0, %v2640
        %v2642 = vpop.f32.mrf.mxu0
        %v2643 = vpop.f32.mrf.mxu0
        %v2644 = vadd.f32 0.0, %v2643
        %v2645 = vpop.f32.mrf.mxu0
        %2646 = vmatprep.mubr.bf16.mxu0 0
        %2647 = vmatmul.mubr.bf16.gmra.mxu0 %v2503
        %v2648 = vpop.f32.mrf.mxu0
        %v2649 = vadd.f32 0.0, %v2648
        %v2650 = vpop.f32.mrf.mxu0
        %v2651 = vpop.f32.mrf.mxu0
        %v2652 = vadd.f32 0.0, %v2651
        %v2653 = vpop.f32.mrf.mxu0
        %2654 = vmatprep.mubr.bf16.mxu0 0
        %2655 = vmatmul.mubr.bf16.gmra.mxu0 %v2504
        %v2656 = vpop.f32.mrf.mxu0
        %v2657 = vadd.f32 0.0, %v2656
        %v2658 = vpop.f32.mrf.mxu0
        %v2659 = vpop.f32.mrf.mxu0
        %v2660 = vadd.f32 0.0, %v2659
        %v2661 = vpop.f32.mrf.mxu0
        %2662 = vmatprep.mubr.bf16.mxu0 0
        %2663 = vmatmul.mubr.bf16.gmra.mxu0 %v2505
        %v2664 = vpop.f32.mrf.mxu0
        %v2665 = vadd.f32 0.0, %v2664
        %v2666 = vpop.f32.mrf.mxu0
        %v2667 = vpop.f32.mrf.mxu0
        %v2668 = vadd.f32 0.0, %v2667
        %v2669 = vpop.f32.mrf.mxu0
        %2670 = vmatprep.mubr.bf16.mxu0 0
        %2671 = vmatmul.mubr.bf16.gmra.mxu0 %v2506
        %v2672 = vpop.f32.mrf.mxu0
        %v2673 = vadd.f32 0.0, %v2672
        %v2674 = vpop.f32.mrf.mxu0
        %v2675 = vpop.f32.mrf.mxu0
        %v2676 = vadd.f32 0.0, %v2675
        %v2677 = vpop.f32.mrf.mxu0
        %2678 = vmatprep.mubr.bf16.mxu0 0
        %2679 = vmatmul.mubr.bf16.gmra.mxu0 %v2507
        %v2680 = vpop.f32.mrf.mxu0
        %v2681 = vadd.f32 0.0, %v2680
        %v2682 = vpop.f32.mrf.mxu0
        %v2683 = vpop.f32.mrf.mxu0
        %v2684 = vadd.f32 0.0, %v2683
        %v2685 = vpop.f32.mrf.mxu0
        %2686 = vmatprep.mubr.bf16.mxu0 0
        %2687 = vmatmul.mubr.bf16.gmra.mxu0 %v2508
        %v2688 = vpop.f32.mrf.mxu0
        %v2689 = vadd.f32 0.0, %v2688
        %v2690 = vpop.f32.mrf.mxu0
        %v2691 = vpop.f32.mrf.mxu0
        %v2692 = vadd.f32 0.0, %v2691
        %v2693 = vpop.f32.mrf.mxu0
        %2694 = vmatprep.mubr.bf16.mxu0 0
        %2695 = vmatmul.mubr.bf16.gmra.mxu0 %v2509
        %v2696 = vpop.f32.mrf.mxu0
        %v2697 = vadd.f32 0.0, %v2696
        %v2698 = vpop.f32.mrf.mxu0
        %v2699 = vpop.f32.mrf.mxu0
        %v2700 = vadd.f32 0.0, %v2699
        %v2701 = vpop.f32.mrf.mxu0
        %2702 = vdwg.mxu0
        %v2703 = vrcp.pop %v2431
        %v2704 = vrcp.pop %v2433
        %v2705 = vrcp.pop %v2435
        %v2706 = vrcp.pop %v2437
        %v2707 = vrcp.pop %v2439
        %v2708 = vrcp.pop %v2441
        %v2709 = vrcp.pop %v2443
        %v2710 = vrcp.pop %v2445
        %v2711 = vrcp.pop %v2447
        %v2712 = vrcp.pop %v2449
        %v2713 = vrcp.pop %v2451
        %v2714 = vrcp.pop %v2453
        %v2715 = vrcp.pop %v2455
        %v2716 = vrcp.pop %v2457
        %v2717 = vrcp.pop %v2459
        %v2718 = vrcp.pop %v2461
        %v2719 = vrcp.pop %v2463
        %v2720 = vrcp.pop %v2465
        %v2721 = vrcp.pop %v2467
        %v2722 = vrcp.pop %v2469
        %v2723 = vrcp.pop %v2471
        %v2724 = vrcp.pop %v2473
        %v2725 = vrcp.pop %v2475
        %v2726 = vrcp.pop %v2477
        %v2727 = vrcp.pop %v2479
        %v2728 = vrcp.pop %v2481
        %v2729 = vrcp.pop %v2483
        %v2730 = vrcp.pop %v2485
        %v2731 = vrcp.pop %v2487
        %v2732 = vrcp.pop %v2489
        %v2733 = vrcp.pop %v2491
        %v2734 = vrcp.pop %v2493
        %v2735 = vmul.f32 %v2577, %v2703
        %v2736 = vmul.f32 %v2580, %v2704
        %v2737 = vmul.f32 %v2585, %v2705
        %v2738 = vmul.f32 %v2588, %v2706
        %v2739 = vmul.f32 %v2593, %v2707
        %v2740 = vmul.f32 %v2596, %v2708
        %v2741 = vmul.f32 %v2601, %v2709
        %v2742 = vmul.f32 %v2604, %v2710
        %v2743 = vmul.f32 %v2609, %v2711
        %v2744 = vmul.f32 %v2612, %v2712
        %v2745 = vmul.f32 %v2617, %v2713
        %v2746 = vmul.f32 %v2620, %v2714
        %v2747 = vmul.f32 %v2625, %v2715
        %v2748 = vmul.f32 %v2628, %v2716
        %v2749 = vmul.f32 %v2633, %v2717
        %v2750 = vmul.f32 %v2636, %v2718
        %v2751 = vmul.f32 %v2641, %v2719
        %v2752 = vmul.f32 %v2644, %v2720
        %v2753 = vmul.f32 %v2649, %v2721
        %v2754 = vmul.f32 %v2652, %v2722
        %v2755 = vmul.f32 %v2657, %v2723
        %v2756 = vmul.f32 %v2660, %v2724
        %v2757 = vmul.f32 %v2665, %v2725
        %v2758 = vmul.f32 %v2668, %v2726
        %v2759 = vmul.f32 %v2673, %v2727
        %v2760 = vmul.f32 %v2676, %v2728
        %v2761 = vmul.f32 %v2681, %v2729
        %v2762 = vmul.f32 %v2684, %v2730
        %v2763 = vmul.f32 %v2689, %v2731
        %v2764 = vmul.f32 %v2692, %v2732
        %v2765 = vmul.f32 %v2697, %v2733
        %v2766 = vmul.f32 %v2700, %v2734
        %v2767 = vpack.c.bf16 %v2736, %v2735
        %v2768 = vpack.c.bf16 %v2738, %v2737
        %v2769 = vpack.c.bf16 %v2740, %v2739
        %v2770 = vpack.c.bf16 %v2742, %v2741
        %v2771 = vpack.c.bf16 %v2744, %v2743
        %v2772 = vpack.c.bf16 %v2746, %v2745
        %v2773 = vpack.c.bf16 %v2748, %v2747
        %v2774 = vpack.c.bf16 %v2750, %v2749
        %v2775 = vpack.c.bf16 %v2752, %v2751
        %v2776 = vpack.c.bf16 %v2754, %v2753
        %v2777 = vpack.c.bf16 %v2756, %v2755
        %v2778 = vpack.c.bf16 %v2758, %v2757
        %v2779 = vpack.c.bf16 %v2760, %v2759
        %v2780 = vpack.c.bf16 %v2762, %v2761
        %v2781 = vpack.c.bf16 %v2764, %v2763
        %v2782 = vpack.c.bf16 %v2766, %v2765
        %v2799 = vunpack.c.l.b16 %v2767
        %v2800 = vunpack.c.h.b16 %v2767
        %v2801 = vunpack.c.l.b16 %v2768
        %v2802 = vunpack.c.h.b16 %v2768
        %v2803 = vunpack.c.l.b16 %v2769
        %v2804 = vunpack.c.h.b16 %v2769
        %v2805 = vunpack.c.l.b16 %v2770
        %v2806 = vunpack.c.h.b16 %v2770
        %v2807 = vunpack.c.l.b16 %v2771
        %v2808 = vunpack.c.h.b16 %v2771
        %v2809 = vunpack.c.l.b16 %v2772
        %v2810 = vunpack.c.h.b16 %v2772
        %v2811 = vunpack.c.l.b16 %v2773
        %v2812 = vunpack.c.h.b16 %v2773
        %v2813 = vunpack.c.l.b16 %v2774
        %v2814 = vunpack.c.h.b16 %v2774
        %v2815 = vunpack.c.l.b16 %v2775
        %v2816 = vunpack.c.h.b16 %v2775
        %v2817 = vunpack.c.l.b16 %v2776
        %v2818 = vunpack.c.h.b16 %v2776
        %v2819 = vunpack.c.l.b16 %v2777
        %v2820 = vunpack.c.h.b16 %v2777
        %v2821 = vunpack.c.l.b16 %v2778
        %v2822 = vunpack.c.h.b16 %v2778
        %v2823 = vunpack.c.l.b16 %v2779
        %v2824 = vunpack.c.h.b16 %v2779
        %v2825 = vunpack.c.l.b16 %v2780
        %v2826 = vunpack.c.h.b16 %v2780
        %v2827 = vunpack.c.l.b16 %v2781
        %v2828 = vunpack.c.h.b16 %v2781
        %v2829 = vunpack.c.l.b16 %v2782
        %v2830 = vunpack.c.h.b16 %v2782
        %v2831 = vpack.c.b16 %v2799, %v2799
        %v2832 = vpack.c.b16 %v2800, %v2800
        %v2833 = vpack.c.b16 %v2801, %v2801
        %v2834 = vpack.c.b16 %v2802, %v2802
        %v2835 = vpack.c.b16 %v2803, %v2803
        %v2836 = vpack.c.b16 %v2804, %v2804
        %v2837 = vpack.c.b16 %v2805, %v2805
        %v2838 = vpack.c.b16 %v2806, %v2806
        %v2839 = vpack.c.b16 %v2807, %v2807
        %v2840 = vpack.c.b16 %v2808, %v2808
        %v2841 = vpack.c.b16 %v2809, %v2809
        %v2842 = vpack.c.b16 %v2810, %v2810
        %v2843 = vpack.c.b16 %v2811, %v2811
        %v2844 = vpack.c.b16 %v2812, %v2812
        %v2845 = vpack.c.b16 %v2813, %v2813
        %v2846 = vpack.c.b16 %v2814, %v2814
        %v2847 = vpack.c.b16 %v2815, %v2815
        %v2848 = vpack.c.b16 %v2816, %v2816
        %v2849 = vpack.c.b16 %v2817, %v2817
        %v2850 = vpack.c.b16 %v2818, %v2818
        %v2851 = vpack.c.b16 %v2819, %v2819
        %v2852 = vpack.c.b16 %v2820, %v2820
        %v2853 = vpack.c.b16 %v2821, %v2821
        %v2854 = vpack.c.b16 %v2822, %v2822
        %v2855 = vpack.c.b16 %v2823, %v2823
        %v2856 = vpack.c.b16 %v2824, %v2824
        %v2857 = vpack.c.b16 %v2825, %v2825
        %v2858 = vpack.c.b16 %v2826, %v2826
        %v2859 = vpack.c.b16 %v2827, %v2827
        %v2860 = vpack.c.b16 %v2828, %v2828
        %v2861 = vpack.c.b16 %v2829, %v2829
        %v2862 = vpack.c.b16 %v2830, %v2830
        %2863 = vrot.lane.b32.xlu0 %v2831, 32
        %v2864 = vpop.permute.xlu0 %2863
        %2865 = vrot.lane.b32.xlu0 %v2832, 32
        %v2866 = vpop.permute.xlu0 %2865
        %2867 = vrot.lane.b32.xlu0 %v2833, 32
        %v2868 = vpop.permute.xlu0 %2867
        %2869 = vrot.lane.b32.xlu0 %v2834, 32
        %v2870 = vpop.permute.xlu0 %2869
        %2871 = vrot.lane.b32.xlu0 %v2835, 32
        %v2872 = vpop.permute.xlu0 %2871
        %2873 = vrot.lane.b32.xlu0 %v2836, 32
        %v2874 = vpop.permute.xlu0 %2873
        %2875 = vrot.lane.b32.xlu0 %v2837, 32
        %v2876 = vpop.permute.xlu0 %2875
        %2877 = vrot.lane.b32.xlu0 %v2838, 32
        %v2878 = vpop.permute.xlu0 %2877
        %2879 = vrot.lane.b32.xlu0 %v2839, 32
        %v2880 = vpop.permute.xlu0 %2879
        %2881 = vrot.lane.b32.xlu0 %v2840, 32
        %v2882 = vpop.permute.xlu0 %2881
        %2883 = vrot.lane.b32.xlu0 %v2841, 32
        %v2884 = vpop.permute.xlu0 %2883
        %2885 = vrot.lane.b32.xlu0 %v2842, 32
        %v2886 = vpop.permute.xlu0 %2885
        %2887 = vrot.lane.b32.xlu0 %v2843, 32
        %v2888 = vpop.permute.xlu0 %2887
        %2889 = vrot.lane.b32.xlu0 %v2844, 32
        %v2890 = vpop.permute.xlu0 %2889
        %2891 = vrot.lane.b32.xlu0 %v2845, 32
        %v2892 = vpop.permute.xlu0 %2891
        %2893 = vrot.lane.b32.xlu0 %v2846, 32
        %v2894 = vpop.permute.xlu0 %2893
        %2895 = vrot.lane.b32.xlu0 %v2847, 32
        %v2896 = vpop.permute.xlu0 %2895
        %2897 = vrot.lane.b32.xlu0 %v2848, 32
        %v2898 = vpop.permute.xlu0 %2897
        %2899 = vrot.lane.b32.xlu0 %v2849, 32
        %v2900 = vpop.permute.xlu0 %2899
        %2901 = vrot.lane.b32.xlu0 %v2850, 32
        %v2902 = vpop.permute.xlu0 %2901
        %2903 = vrot.lane.b32.xlu0 %v2851, 32
        %v2904 = vpop.permute.xlu0 %2903
        %2905 = vrot.lane.b32.xlu0 %v2852, 32
        %v2906 = vpop.permute.xlu0 %2905
        %2907 = vrot.lane.b32.xlu0 %v2853, 32
        %v2908 = vpop.permute.xlu0 %2907
        %2909 = vrot.lane.b32.xlu0 %v2854, 32
        %v2910 = vpop.permute.xlu0 %2909
        %2911 = vrot.lane.b32.xlu0 %v2855, 32
        %v2912 = vpop.permute.xlu0 %2911
        %2913 = vrot.lane.b32.xlu0 %v2856, 32
        %v2914 = vpop.permute.xlu0 %2913
        %2915 = vrot.lane.b32.xlu0 %v2857, 32
        %v2916 = vpop.permute.xlu0 %2915
        %2917 = vrot.lane.b32.xlu0 %v2858, 32
        %v2918 = vpop.permute.xlu0 %2917
        %2919 = vrot.lane.b32.xlu0 %v2859, 32
        %v2920 = vpop.permute.xlu0 %2919
        %2921 = vrot.lane.b32.xlu0 %v2860, 32
        %v2922 = vpop.permute.xlu0 %2921
        %2923 = vrot.lane.b32.xlu0 %v2861, 32
        %v2924 = vpop.permute.xlu0 %2923
        %2925 = vrot.lane.b32.xlu0 %v2862, 32
        %v2926 = vpop.permute.xlu0 %2925
        %vm2959 = vcmask 519424
        %2960 = vst.msk [vmem:[#allocation2] sm:$0xf] %vm2959, %v2864
        %2961 = vst.msk [vmem:[#allocation2 + $0x4] sm:$0xf] %vm2959, %v2866
        %2962 = vst.msk [vmem:[#allocation2 + $0x8] sm:$0xf] %vm2959, %v2868
        %2963 = vst.msk [vmem:[#allocation2 + $0xc] sm:$0xf] %vm2959, %v2870
        %2964 = vst.msk [vmem:[#allocation2 + $0x10] sm:$0xf] %vm2959, %v2872
        %2965 = vst.msk [vmem:[#allocation2 + $0x14] sm:$0xf] %vm2959, %v2874
        %2966 = vst.msk [vmem:[#allocation2 + $0x18] sm:$0xf] %vm2959, %v2876
        %2967 = vst.msk [vmem:[#allocation2 + $0x1c] sm:$0xf] %vm2959, %v2878
        %2968 = vst.msk [vmem:[#allocation2 + $0x20] sm:$0xf] %vm2959, %v2880
        %2969 = vst.msk [vmem:[#allocation2 + $0x24] sm:$0xf] %vm2959, %v2882
        %2970 = vst.msk [vmem:[#allocation2 + $0x28] sm:$0xf] %vm2959, %v2884
        %2971 = vst.msk [vmem:[#allocation2 + $0x2c] sm:$0xf] %vm2959, %v2886
        %2972 = vst.msk [vmem:[#allocation2 + $0x30] sm:$0xf] %vm2959, %v2888
        %2973 = vst.msk [vmem:[#allocation2 + $0x34] sm:$0xf] %vm2959, %v2890
        %2974 = vst.msk [vmem:[#allocation2 + $0x38] sm:$0xf] %vm2959, %v2892
        %2975 = vst.msk [vmem:[#allocation2 + $0x3c] sm:$0xf] %vm2959, %v2894
        %2976 = vst.msk [vmem:[#allocation2 + $0x40] sm:$0xf] %vm2959, %v2896
        %2977 = vst.msk [vmem:[#allocation2 + $0x44] sm:$0xf] %vm2959, %v2898
        %2978 = vst.msk [vmem:[#allocation2 + $0x48] sm:$0xf] %vm2959, %v2900
        %2979 = vst.msk [vmem:[#allocation2 + $0x4c] sm:$0xf] %vm2959, %v2902
        %2980 = vst.msk [vmem:[#allocation2 + $0x50] sm:$0xf] %vm2959, %v2904
        %2981 = vst.msk [vmem:[#allocation2 + $0x54] sm:$0xf] %vm2959, %v2906
        %2982 = vst.msk [vmem:[#allocation2 + $0x58] sm:$0xf] %vm2959, %v2908
        %2983 = vst.msk [vmem:[#allocation2 + $0x5c] sm:$0xf] %vm2959, %v2910
        %2984 = vst.msk [vmem:[#allocation2 + $0x60] sm:$0xf] %vm2959, %v2912
        %2985 = vst.msk [vmem:[#allocation2 + $0x64] sm:$0xf] %vm2959, %v2914
        %2986 = vst.msk [vmem:[#allocation2 + $0x68] sm:$0xf] %vm2959, %v2916
        %2987 = vst.msk [vmem:[#allocation2 + $0x6c] sm:$0xf] %vm2959, %v2918
        %2988 = vst.msk [vmem:[#allocation2 + $0x70] sm:$0xf] %vm2959, %v2920
        %2989 = vst.msk [vmem:[#allocation2 + $0x74] sm:$0xf] %vm2959, %v2922
        %2990 = vst.msk [vmem:[#allocation2 + $0x78] sm:$0xf] %vm2959, %v2924
        %2991 = vst.msk [vmem:[#allocation2 + $0x7c] sm:$0xf] %vm2959, %v2926
        %2992 = vrot.lane.b32.xlu0 %v1073, 64
        %v2993 = vpop.permute.xlu0 %2992
        %2994 = vrot.lane.b32.xlu0 %v1074, 64
        %v2995 = vpop.permute.xlu0 %2994
        %2996 = vrot.lane.b32.xlu0 %v1075, 64
        %v2997 = vpop.permute.xlu0 %2996
        %2998 = vrot.lane.b32.xlu0 %v1076, 64
        %v2999 = vpop.permute.xlu0 %2998
        %3000 = vrot.lane.b32.xlu0 %v1077, 64
        %v3001 = vpop.permute.xlu0 %3000
        %3002 = vrot.lane.b32.xlu0 %v1078, 64
        %v3003 = vpop.permute.xlu0 %3002
        %3004 = vrot.lane.b32.xlu0 %v1079, 64
        %v3005 = vpop.permute.xlu0 %3004
        %3006 = vrot.lane.b32.xlu0 %v1080, 64
        %v3007 = vpop.permute.xlu0 %3006
        %3008 = vrot.lane.b32.xlu0 %v1081, 64
        %v3009 = vpop.permute.xlu0 %3008
        %3010 = vrot.lane.b32.xlu0 %v1082, 64
        %v3011 = vpop.permute.xlu0 %3010
        %3012 = vrot.lane.b32.xlu0 %v1083, 64
        %v3013 = vpop.permute.xlu0 %3012
        %3014 = vrot.lane.b32.xlu0 %v1084, 64
        %v3015 = vpop.permute.xlu0 %3014
        %3016 = vrot.lane.b32.xlu0 %v1085, 64
        %v3017 = vpop.permute.xlu0 %3016
        %3018 = vrot.lane.b32.xlu0 %v1086, 64
        %v3019 = vpop.permute.xlu0 %3018
        %3020 = vrot.lane.b32.xlu0 %v1087, 64
        %v3021 = vpop.permute.xlu0 %3020
        %3022 = vrot.lane.b32.xlu0 %v1088, 64
        %v3023 = vpop.permute.xlu0 %3022
        %3024 = vrot.lane.b32.xlu0 %v1089, 64
        %v3025 = vpop.permute.xlu0 %3024
        %3026 = vrot.lane.b32.xlu0 %v1091, 64
        %v3027 = vpop.permute.xlu0 %3026
        %3028 = vrot.lane.b32.xlu0 %v1093, 64
        %v3029 = vpop.permute.xlu0 %3028
        %3030 = vrot.lane.b32.xlu0 %v1095, 64
        %v3031 = vpop.permute.xlu0 %3030
        %3032 = vrot.lane.b32.xlu0 %v1097, 64
        %v3033 = vpop.permute.xlu0 %3032
        %3034 = vrot.lane.b32.xlu0 %v1099, 64
        %v3035 = vpop.permute.xlu0 %3034
        %3036 = vrot.lane.b32.xlu0 %v1101, 64
        %v3037 = vpop.permute.xlu0 %3036
        %3038 = vrot.lane.b32.xlu0 %v1103, 64
        %v3039 = vpop.permute.xlu0 %3038
        %v3041 = vsel %vm1105, %v2993, 0
        %v3044 = vsel %vm1105, %v2995, 0
        %v3047 = vsel %vm1105, %v2997, 0
        %v3050 = vsel %vm1105, %v2999, 0
        %v3053 = vsel %vm1105, %v3001, 0
        %v3056 = vsel %vm1105, %v3003, 0
        %v3059 = vsel %vm1105, %v3005, 0
        %v3062 = vsel %vm1105, %v3007, 0
        %v3065 = vsel %vm1105, %v3009, 0
        %v3068 = vsel %vm1105, %v3011, 0
        %v3071 = vsel %vm1105, %v3013, 0
        %v3074 = vsel %vm1105, %v3015, 0
        %v3077 = vsel %vm1105, %v3017, 0
        %v3080 = vsel %vm1105, %v3019, 0
        %v3083 = vsel %vm1105, %v3021, 0
        %v3086 = vsel %vm1105, %v3023, 0
        %v3089 = vsel %vm1105, %v3025, 0
        %v3092 = vsel %vm1105, %v3027, 0
        %v3095 = vsel %vm1105, %v3029, 0
        %v3098 = vsel %vm1105, %v3031, 0
        %v3101 = vsel %vm1105, %v3033, 0
        %v3104 = vsel %vm1105, %v3035, 0
        %v3107 = vsel %vm1105, %v3037, 0
        %v3110 = vsel %vm1105, %v3039, 0
        %3112 = vmatprep.subr.bf16.mxu0 0
        %3113 = vmatpush1.bf16.xpose.msra.mxu0 %v3110
        %3114 = vmatprep.subr.bf16.mxu0 0
        %3115 = vmatpush1.bf16.xpose.msra.mxu0 %v3107
        %3116 = vmatprep.subr.bf16.mxu0 0
        %3117 = vmatpush1.bf16.xpose.msra.mxu0 %v3104
        %3118 = vmatprep.subr.bf16.mxu0 0
        %3119 = vmatpush1.bf16.xpose.msra.mxu0 %v3101
        %3120 = vmatprep.subr.bf16.mxu0 0
        %3121 = vmatpush1.bf16.xpose.msra.mxu0 %v3098
        %3122 = vmatprep.subr.bf16.mxu0 0
        %3123 = vmatpush1.bf16.xpose.msra.mxu0 %v3095
        %3124 = vmatprep.subr.bf16.mxu0 0
        %3125 = vmatpush1.bf16.xpose.msra.mxu0 %v3092
        %3126 = vmatprep.subr.bf16.mxu0 0
        %3127 = vmatpush1.bf16.xpose.msra.mxu0 %v3089
        %3128 = vmatprep.subr.bf16.mxu0 0
        %3129 = vmatpush2.bf16.xpose.msra.mxu0 0
        %3130 = vmatprep.subr.bf16.mxu0 0
        %3131 = vmatpush2.bf16.xpose.msra.mxu0 0
        %3132 = vmatprep.subr.bf16.mxu0 0
        %3133 = vmatpush2.bf16.xpose.msra.mxu0 0
        %3134 = vmatprep.subr.bf16.mxu0 0
        %3135 = vmatpush2.bf16.xpose.msra.mxu0 0
        %3136 = vmatprep.subr.bf16.mxu0 0
        %3137 = vmatpush2.bf16.xpose.msra.mxu0 0
        %3138 = vmatprep.subr.bf16.mxu0 0
        %3139 = vmatpush2.bf16.xpose.msra.mxu0 0
        %3140 = vmatprep.subr.bf16.mxu0 0
        %3141 = vmatpush2.bf16.xpose.msra.mxu0 0
        %3142 = vmatprep.subr.bf16.mxu0 0
        %3143 = vmatpush2.bf16.xpose.msra.mxu0 0
        %3144 = vmatprep.mubr.bf16.mxu0 0
        %3145 = vmatmul.mubr.bf16.gmra.mxu0 %v3041
        %v3146 = vpop.f32.mrf.mxu0
        %v3147 = vadd.f32 0.0, %v3146
        %v3148 = vpop.f32.mrf.mxu0
        %v3149 = vpop.f32.mrf.mxu0
        %v3150 = vadd.f32 0.0, %v3149
        %v3151 = vpop.f32.mrf.mxu0
        %3152 = vmatprep.mubr.bf16.mxu0 0
        %3153 = vmatmul.mubr.bf16.gmra.mxu0 %v3044
        %v3154 = vpop.f32.mrf.mxu0
        %v3155 = vadd.f32 0.0, %v3154
        %v3156 = vpop.f32.mrf.mxu0
        %v3157 = vpop.f32.mrf.mxu0
        %v3158 = vadd.f32 0.0, %v3157
        %v3159 = vpop.f32.mrf.mxu0
        %3160 = vmatprep.mubr.bf16.mxu0 0
        %3161 = vmatmul.mubr.bf16.gmra.mxu0 %v3047
        %v3162 = vpop.f32.mrf.mxu0
        %v3163 = vadd.f32 0.0, %v3162
        %v3164 = vpop.f32.mrf.mxu0
        %v3165 = vpop.f32.mrf.mxu0
        %v3166 = vadd.f32 0.0, %v3165
        %v3167 = vpop.f32.mrf.mxu0
        %3168 = vmatprep.mubr.bf16.mxu0 0
        %3169 = vmatmul.mubr.bf16.gmra.mxu0 %v3050
        %v3170 = vpop.f32.mrf.mxu0
        %v3171 = vadd.f32 0.0, %v3170
        %v3172 = vpop.f32.mrf.mxu0
        %v3173 = vpop.f32.mrf.mxu0
        %v3174 = vadd.f32 0.0, %v3173
        %v3175 = vpop.f32.mrf.mxu0
        %3176 = vmatprep.mubr.bf16.mxu0 0
        %3177 = vmatmul.mubr.bf16.gmra.mxu0 %v3053
        %v3178 = vpop.f32.mrf.mxu0
        %v3179 = vadd.f32 0.0, %v3178
        %v3180 = vpop.f32.mrf.mxu0
        %v3181 = vpop.f32.mrf.mxu0
        %v3182 = vadd.f32 0.0, %v3181
        %v3183 = vpop.f32.mrf.mxu0
        %3184 = vmatprep.mubr.bf16.mxu0 0
        %3185 = vmatmul.mubr.bf16.gmra.mxu0 %v3056
        %v3186 = vpop.f32.mrf.mxu0
        %v3187 = vadd.f32 0.0, %v3186
        %v3188 = vpop.f32.mrf.mxu0
        %v3189 = vpop.f32.mrf.mxu0
        %v3190 = vadd.f32 0.0, %v3189
        %v3191 = vpop.f32.mrf.mxu0
        %3192 = vmatprep.mubr.bf16.mxu0 0
        %3193 = vmatmul.mubr.bf16.gmra.mxu0 %v3059
        %v3194 = vpop.f32.mrf.mxu0
        %v3195 = vadd.f32 0.0, %v3194
        %v3196 = vpop.f32.mrf.mxu0
        %v3197 = vpop.f32.mrf.mxu0
        %v3198 = vadd.f32 0.0, %v3197
        %v3199 = vpop.f32.mrf.mxu0
        %3200 = vmatprep.mubr.bf16.mxu0 0
        %3201 = vmatmul.mubr.bf16.gmra.mxu0 %v3062
        %v3202 = vpop.f32.mrf.mxu0
        %v3203 = vadd.f32 0.0, %v3202
        %v3204 = vpop.f32.mrf.mxu0
        %v3205 = vpop.f32.mrf.mxu0
        %v3206 = vadd.f32 0.0, %v3205
        %v3207 = vpop.f32.mrf.mxu0
        %3208 = vmatprep.mubr.bf16.mxu0 0
        %3209 = vmatmul.mubr.bf16.gmra.mxu0 %v3065
        %v3210 = vpop.f32.mrf.mxu0
        %v3211 = vadd.f32 0.0, %v3210
        %v3212 = vpop.f32.mrf.mxu0
        %v3213 = vpop.f32.mrf.mxu0
        %v3214 = vadd.f32 0.0, %v3213
        %v3215 = vpop.f32.mrf.mxu0
        %3216 = vmatprep.mubr.bf16.mxu0 0
        %3217 = vmatmul.mubr.bf16.gmra.mxu0 %v3068
        %v3218 = vpop.f32.mrf.mxu0
        %v3219 = vadd.f32 0.0, %v3218
        %v3220 = vpop.f32.mrf.mxu0
        %v3221 = vpop.f32.mrf.mxu0
        %v3222 = vadd.f32 0.0, %v3221
        %v3223 = vpop.f32.mrf.mxu0
        %3224 = vmatprep.mubr.bf16.mxu0 0
        %3225 = vmatmul.mubr.bf16.gmra.mxu0 %v3071
        %v3226 = vpop.f32.mrf.mxu0
        %v3227 = vadd.f32 0.0, %v3226
        %v3228 = vpop.f32.mrf.mxu0
        %v3229 = vpop.f32.mrf.mxu0
        %v3230 = vadd.f32 0.0, %v3229
        %v3231 = vpop.f32.mrf.mxu0
        %3232 = vmatprep.mubr.bf16.mxu0 0
        %3233 = vmatmul.mubr.bf16.gmra.mxu0 %v3074
        %v3234 = vpop.f32.mrf.mxu0
        %v3235 = vadd.f32 0.0, %v3234
        %v3236 = vpop.f32.mrf.mxu0
        %v3237 = vpop.f32.mrf.mxu0
        %v3238 = vadd.f32 0.0, %v3237
        %v3239 = vpop.f32.mrf.mxu0
        %3240 = vmatprep.mubr.bf16.mxu0 0
        %3241 = vmatmul.mubr.bf16.gmra.mxu0 %v3077
        %v3242 = vpop.f32.mrf.mxu0
        %v3243 = vadd.f32 0.0, %v3242
        %v3244 = vpop.f32.mrf.mxu0
        %v3245 = vpop.f32.mrf.mxu0
        %v3246 = vadd.f32 0.0, %v3245
        %v3247 = vpop.f32.mrf.mxu0
        %3248 = vmatprep.mubr.bf16.mxu0 0
        %3249 = vmatmul.mubr.bf16.gmra.mxu0 %v3080
        %v3250 = vpop.f32.mrf.mxu0
        %v3251 = vadd.f32 0.0, %v3250
        %v3252 = vpop.f32.mrf.mxu0
        %v3253 = vpop.f32.mrf.mxu0
        %v3254 = vadd.f32 0.0, %v3253
        %v3255 = vpop.f32.mrf.mxu0
        %3256 = vmatprep.mubr.bf16.mxu0 0
        %3257 = vmatmul.mubr.bf16.gmra.mxu0 %v3083
        %v3258 = vpop.f32.mrf.mxu0
        %v3259 = vadd.f32 0.0, %v3258
        %v3260 = vpop.f32.mrf.mxu0
        %v3261 = vpop.f32.mrf.mxu0
        %v3262 = vadd.f32 0.0, %v3261
        %v3263 = vpop.f32.mrf.mxu0
        %3264 = vmatprep.mubr.bf16.mxu0 0
        %3265 = vmatmul.mubr.bf16.gmra.mxu0 %v3086
        %v3266 = vpop.f32.mrf.mxu0
        %v3267 = vadd.f32 0.0, %v3266
        %v3268 = vpop.f32.mrf.mxu0
        %v3269 = vpop.f32.mrf.mxu0
        %v3270 = vadd.f32 0.0, %v3269
        %v3271 = vpop.f32.mrf.mxu0
        %3272 = vdwg.mxu0
        %3273 = vmax.xlane.f32.xlu0 %v3147
        %v3274 = vpop.xlane.xlu0 %3273
        %3275 = vmax.xlane.f32.xlu0 %v3150
        %v3276 = vpop.xlane.xlu0 %3275
        %3277 = vmax.xlane.f32.xlu0 %v3155
        %v3278 = vpop.xlane.xlu0 %3277
        %3279 = vmax.xlane.f32.xlu0 %v3158
        %v3280 = vpop.xlane.xlu0 %3279
        %3281 = vmax.xlane.f32.xlu0 %v3163
        %v3282 = vpop.xlane.xlu0 %3281
        %3283 = vmax.xlane.f32.xlu0 %v3166
        %v3284 = vpop.xlane.xlu0 %3283
        %3285 = vmax.xlane.f32.xlu0 %v3171
        %v3286 = vpop.xlane.xlu0 %3285
        %3287 = vmax.xlane.f32.xlu0 %v3174
        %v3288 = vpop.xlane.xlu0 %3287
        %3289 = vmax.xlane.f32.xlu0 %v3179
        %v3290 = vpop.xlane.xlu0 %3289
        %3291 = vmax.xlane.f32.xlu0 %v3182
        %v3292 = vpop.xlane.xlu0 %3291
        %3293 = vmax.xlane.f32.xlu0 %v3187
        %v3294 = vpop.xlane.xlu0 %3293
        %3295 = vmax.xlane.f32.xlu0 %v3190
        %v3296 = vpop.xlane.xlu0 %3295
        %3297 = vmax.xlane.f32.xlu0 %v3195
        %v3298 = vpop.xlane.xlu0 %3297
        %3299 = vmax.xlane.f32.xlu0 %v3198
        %v3300 = vpop.xlane.xlu0 %3299
        %3301 = vmax.xlane.f32.xlu0 %v3203
        %v3302 = vpop.xlane.xlu0 %3301
        %3303 = vmax.xlane.f32.xlu0 %v3206
        %v3304 = vpop.xlane.xlu0 %3303
        %3305 = vmax.xlane.f32.xlu0 %v3211
        %v3306 = vpop.xlane.xlu0 %3305
        %3307 = vmax.xlane.f32.xlu0 %v3214
        %v3308 = vpop.xlane.xlu0 %3307
        %3309 = vmax.xlane.f32.xlu0 %v3219
        %v3310 = vpop.xlane.xlu0 %3309
        %3311 = vmax.xlane.f32.xlu0 %v3222
        %v3312 = vpop.xlane.xlu0 %3311
        %3313 = vmax.xlane.f32.xlu0 %v3227
        %v3314 = vpop.xlane.xlu0 %3313
        %3315 = vmax.xlane.f32.xlu0 %v3230
        %v3316 = vpop.xlane.xlu0 %3315
        %3317 = vmax.xlane.f32.xlu0 %v3235
        %v3318 = vpop.xlane.xlu0 %3317
        %3319 = vmax.xlane.f32.xlu0 %v3238
        %v3320 = vpop.xlane.xlu0 %3319
        %3321 = vmax.xlane.f32.xlu0 %v3243
        %v3322 = vpop.xlane.xlu0 %3321
        %3323 = vmax.xlane.f32.xlu0 %v3246
        %v3324 = vpop.xlane.xlu0 %3323
        %3325 = vmax.xlane.f32.xlu0 %v3251
        %v3326 = vpop.xlane.xlu0 %3325
        %3327 = vmax.xlane.f32.xlu0 %v3254
        %v3328 = vpop.xlane.xlu0 %3327
        %3329 = vmax.xlane.f32.xlu0 %v3259
        %v3330 = vpop.xlane.xlu0 %3329
        %3331 = vmax.xlane.f32.xlu0 %v3262
        %v3332 = vpop.xlane.xlu0 %3331
        %3333 = vmax.xlane.f32.xlu0 %v3267
        %v3334 = vpop.xlane.xlu0 %3333
        %3335 = vmax.xlane.f32.xlu0 %v3270
        %v3336 = vpop.xlane.xlu0 %3335
        %v3337 = vsub.f32 %v3147, %v3274
        %v3338 = vsub.f32 %v3150, %v3276
        %v3339 = vsub.f32 %v3155, %v3278
        %v3340 = vsub.f32 %v3158, %v3280
        %v3341 = vsub.f32 %v3163, %v3282
        %v3342 = vsub.f32 %v3166, %v3284
        %v3343 = vsub.f32 %v3171, %v3286
        %v3344 = vsub.f32 %v3174, %v3288
        %v3345 = vsub.f32 %v3179, %v3290
        %v3346 = vsub.f32 %v3182, %v3292
        %v3347 = vsub.f32 %v3187, %v3294
        %v3348 = vsub.f32 %v3190, %v3296
        %v3349 = vsub.f32 %v3195, %v3298
        %v3350 = vsub.f32 %v3198, %v3300
        %v3351 = vsub.f32 %v3203, %v3302
        %v3352 = vsub.f32 %v3206, %v3304
        %v3353 = vsub.f32 %v3211, %v3306
        %v3354 = vsub.f32 %v3214, %v3308
        %v3355 = vsub.f32 %v3219, %v3310
        %v3356 = vsub.f32 %v3222, %v3312
        %v3357 = vsub.f32 %v3227, %v3314
        %v3358 = vsub.f32 %v3230, %v3316
        %v3359 = vsub.f32 %v3235, %v3318
        %v3360 = vsub.f32 %v3238, %v3320
        %v3361 = vsub.f32 %v3243, %v3322
        %v3362 = vsub.f32 %v3246, %v3324
        %v3363 = vsub.f32 %v3251, %v3326
        %v3364 = vsub.f32 %v3254, %v3328
        %v3365 = vsub.f32 %v3259, %v3330
        %v3366 = vsub.f32 %v3262, %v3332
        %v3367 = vsub.f32 %v3267, %v3334
        %v3368 = vsub.f32 %v3270, %v3336
        %v3369 = vmul.f32 %v3337, 1.442695
        %v3370 = vpow.pop %v3369
        %v3371 = vmul.f32 %v3338, 1.442695
        %v3372 = vpow.pop %v3371
        %v3373 = vmul.f32 %v3339, 1.442695
        %v3374 = vpow.pop %v3373
        %v3375 = vmul.f32 %v3340, 1.442695
        %v3376 = vpow.pop %v3375
        %v3377 = vmul.f32 %v3341, 1.442695
        %v3378 = vpow.pop %v3377
        %v3379 = vmul.f32 %v3342, 1.442695
        %v3380 = vpow.pop %v3379
        %v3381 = vmul.f32 %v3343, 1.442695
        %v3382 = vpow.pop %v3381
        %v3383 = vmul.f32 %v3344, 1.442695
        %v3384 = vpow.pop %v3383
        %v3385 = vmul.f32 %v3345, 1.442695
        %v3386 = vpow.pop %v3385
        %v3387 = vmul.f32 %v3346, 1.442695
        %v3388 = vpow.pop %v3387
        %v3389 = vmul.f32 %v3347, 1.442695
        %v3390 = vpow.pop %v3389
        %v3391 = vmul.f32 %v3348, 1.442695
        %v3392 = vpow.pop %v3391
        %v3393 = vmul.f32 %v3349, 1.442695
        %v3394 = vpow.pop %v3393
        %v3395 = vmul.f32 %v3350, 1.442695
        %v3396 = vpow.pop %v3395
        %v3397 = vmul.f32 %v3351, 1.442695
        %v3398 = vpow.pop %v3397
        %v3399 = vmul.f32 %v3352, 1.442695
        %v3400 = vpow.pop %v3399
        %v3401 = vmul.f32 %v3353, 1.442695
        %v3402 = vpow.pop %v3401
        %v3403 = vmul.f32 %v3354, 1.442695
        %v3404 = vpow.pop %v3403
        %v3405 = vmul.f32 %v3355, 1.442695
        %v3406 = vpow.pop %v3405
        %v3407 = vmul.f32 %v3356, 1.442695
        %v3408 = vpow.pop %v3407
        %v3409 = vmul.f32 %v3357, 1.442695
        %v3410 = vpow.pop %v3409
        %v3411 = vmul.f32 %v3358, 1.442695
        %v3412 = vpow.pop %v3411
        %v3413 = vmul.f32 %v3359, 1.442695
        %v3414 = vpow.pop %v3413
        %v3415 = vmul.f32 %v3360, 1.442695
        %v3416 = vpow.pop %v3415
        %v3417 = vmul.f32 %v3361, 1.442695
        %v3418 = vpow.pop %v3417
        %v3419 = vmul.f32 %v3362, 1.442695
        %v3420 = vpow.pop %v3419
        %v3421 = vmul.f32 %v3363, 1.442695
        %v3422 = vpow.pop %v3421
        %v3423 = vmul.f32 %v3364, 1.442695
        %v3424 = vpow.pop %v3423
        %v3425 = vmul.f32 %v3365, 1.442695
        %v3426 = vpow.pop %v3425
        %v3427 = vmul.f32 %v3366, 1.442695
        %v3428 = vpow.pop %v3427
        %v3429 = vmul.f32 %v3367, 1.442695
        %v3430 = vpow.pop %v3429
        %v3431 = vmul.f32 %v3368, 1.442695
        %v3432 = vpow.pop %v3431
        %3433 = vadd.xlane.f32.xlu0 %v3370
        %v3434 = vpop.xlane.xlu0 %3433
        %3435 = vadd.xlane.f32.xlu0 %v3372
        %v3436 = vpop.xlane.xlu0 %3435
        %3437 = vadd.xlane.f32.xlu0 %v3374
        %v3438 = vpop.xlane.xlu0 %3437
        %3439 = vadd.xlane.f32.xlu0 %v3376
        %v3440 = vpop.xlane.xlu0 %3439
        %3441 = vadd.xlane.f32.xlu0 %v3378
        %v3442 = vpop.xlane.xlu0 %3441
        %3443 = vadd.xlane.f32.xlu0 %v3380
        %v3444 = vpop.xlane.xlu0 %3443
        %3445 = vadd.xlane.f32.xlu0 %v3382
        %v3446 = vpop.xlane.xlu0 %3445
        %3447 = vadd.xlane.f32.xlu0 %v3384
        %v3448 = vpop.xlane.xlu0 %3447
        %3449 = vadd.xlane.f32.xlu0 %v3386
        %v3450 = vpop.xlane.xlu0 %3449
        %3451 = vadd.xlane.f32.xlu0 %v3388
        %v3452 = vpop.xlane.xlu0 %3451
        %3453 = vadd.xlane.f32.xlu0 %v3390
        %v3454 = vpop.xlane.xlu0 %3453
        %3455 = vadd.xlane.f32.xlu0 %v3392
        %v3456 = vpop.xlane.xlu0 %3455
        %3457 = vadd.xlane.f32.xlu0 %v3394
        %v3458 = vpop.xlane.xlu0 %3457
        %3459 = vadd.xlane.f32.xlu0 %v3396
        %v3460 = vpop.xlane.xlu0 %3459
        %3461 = vadd.xlane.f32.xlu0 %v3398
        %v3462 = vpop.xlane.xlu0 %3461
        %3463 = vadd.xlane.f32.xlu0 %v3400
        %v3464 = vpop.xlane.xlu0 %3463
        %3465 = vadd.xlane.f32.xlu0 %v3402
        %v3466 = vpop.xlane.xlu0 %3465
        %3467 = vadd.xlane.f32.xlu0 %v3404
        %v3468 = vpop.xlane.xlu0 %3467
        %3469 = vadd.xlane.f32.xlu0 %v3406
        %v3470 = vpop.xlane.xlu0 %3469
        %3471 = vadd.xlane.f32.xlu0 %v3408
        %v3472 = vpop.xlane.xlu0 %3471
        %3473 = vadd.xlane.f32.xlu0 %v3410
        %v3474 = vpop.xlane.xlu0 %3473
        %3475 = vadd.xlane.f32.xlu0 %v3412
        %v3476 = vpop.xlane.xlu0 %3475
        %3477 = vadd.xlane.f32.xlu0 %v3414
        %v3478 = vpop.xlane.xlu0 %3477
        %3479 = vadd.xlane.f32.xlu0 %v3416
        %v3480 = vpop.xlane.xlu0 %3479
        %3481 = vadd.xlane.f32.xlu0 %v3418
        %v3482 = vpop.xlane.xlu0 %3481
        %3483 = vadd.xlane.f32.xlu0 %v3420
        %v3484 = vpop.xlane.xlu0 %3483
        %3485 = vadd.xlane.f32.xlu0 %v3422
        %v3486 = vpop.xlane.xlu0 %3485
        %3487 = vadd.xlane.f32.xlu0 %v3424
        %v3488 = vpop.xlane.xlu0 %3487
        %3489 = vadd.xlane.f32.xlu0 %v3426
        %v3490 = vpop.xlane.xlu0 %3489
        %3491 = vadd.xlane.f32.xlu0 %v3428
        %v3492 = vpop.xlane.xlu0 %3491
        %3493 = vadd.xlane.f32.xlu0 %v3430
        %v3494 = vpop.xlane.xlu0 %3493
        %3495 = vadd.xlane.f32.xlu0 %v3432
        %v3496 = vpop.xlane.xlu0 %3495
        %v3497 = vpack.c.bf16 %v3372, %v3370
        %v3498 = vpack.c.bf16 %v3376, %v3374
        %v3499 = vpack.c.bf16 %v3380, %v3378
        %v3500 = vpack.c.bf16 %v3384, %v3382
        %v3501 = vpack.c.bf16 %v3388, %v3386
        %v3502 = vpack.c.bf16 %v3392, %v3390
        %v3503 = vpack.c.bf16 %v3396, %v3394
        %v3504 = vpack.c.bf16 %v3400, %v3398
        %v3505 = vpack.c.bf16 %v3404, %v3402
        %v3506 = vpack.c.bf16 %v3408, %v3406
        %v3507 = vpack.c.bf16 %v3412, %v3410
        %v3508 = vpack.c.bf16 %v3416, %v3414
        %v3509 = vpack.c.bf16 %v3420, %v3418
        %v3510 = vpack.c.bf16 %v3424, %v3422
        %v3511 = vpack.c.bf16 %v3428, %v3426
        %v3512 = vpack.c.bf16 %v3432, %v3430
        %3513 = vrot.lane.b32.xlu0 %v1090, 64
        %v3514 = vpop.permute.xlu0 %3513
        %3515 = vrot.lane.b32.xlu0 %v1092, 64
        %v3516 = vpop.permute.xlu0 %3515
        %3517 = vrot.lane.b32.xlu0 %v1094, 64
        %v3518 = vpop.permute.xlu0 %3517
        %3519 = vrot.lane.b32.xlu0 %v1096, 64
        %v3520 = vpop.permute.xlu0 %3519
        %3521 = vrot.lane.b32.xlu0 %v1098, 64
        %v3522 = vpop.permute.xlu0 %3521
        %3523 = vrot.lane.b32.xlu0 %v1100, 64
        %v3524 = vpop.permute.xlu0 %3523
        %3525 = vrot.lane.b32.xlu0 %v1102, 64
        %v3526 = vpop.permute.xlu0 %3525
        %3527 = vrot.lane.b32.xlu0 %v1104, 64
        %v3528 = vpop.permute.xlu0 %3527
        %3537 = vmatprep.subr.bf16.mxu0 0
        %3538 = vmatpush1.bf16.msra.mxu0 %v3528
        %3539 = vmatprep.subr.bf16.mxu0 0
        %3540 = vmatpush1.bf16.msra.mxu0 %v3526
        %3541 = vmatprep.subr.bf16.mxu0 0
        %3542 = vmatpush1.bf16.msra.mxu0 %v3524
        %3543 = vmatprep.subr.bf16.mxu0 0
        %3544 = vmatpush1.bf16.msra.mxu0 %v3522
        %3545 = vmatprep.subr.bf16.mxu0 0
        %3546 = vmatpush1.bf16.msra.mxu0 %v3520
        %3547 = vmatprep.subr.bf16.mxu0 0
        %3548 = vmatpush1.bf16.msra.mxu0 %v3518
        %3549 = vmatprep.subr.bf16.mxu0 0
        %3550 = vmatpush1.bf16.msra.mxu0 %v3516
        %3551 = vmatprep.subr.bf16.mxu0 0
        %3552 = vmatpush1.bf16.msra.mxu0 %v3514
        %3553 = vmatprep.subr.bf16.mxu0 0
        %3554 = vmatpush2.bf16.msra.mxu0 0
        %3555 = vmatprep.subr.bf16.mxu0 0
        %3556 = vmatpush2.bf16.msra.mxu0 0
        %3557 = vmatprep.subr.bf16.mxu0 0
        %3558 = vmatpush2.bf16.msra.mxu0 0
        %3559 = vmatprep.subr.bf16.mxu0 0
        %3560 = vmatpush2.bf16.msra.mxu0 0
        %3561 = vmatprep.subr.bf16.mxu0 0
        %3562 = vmatpush2.bf16.msra.mxu0 0
        %3563 = vmatprep.subr.bf16.mxu0 0
        %3564 = vmatpush2.bf16.msra.mxu0 0
        %3565 = vmatprep.subr.bf16.mxu0 0
        %3566 = vmatpush2.bf16.msra.mxu0 0
        %3567 = vmatprep.subr.bf16.mxu0 0
        %3568 = vmatpush2.bf16.msra.mxu0 0
        %3569 = vmatprep.mubr.bf16.mxu0 0
        %3570 = vmatmul.mubr.bf16.gmra.mxu0 %v3497
        %v3571 = vpop.f32.mrf.mxu0
        %v3572 = vadd.f32 0.0, %v3571
        %v3573 = vpop.f32.mrf.mxu0
        %v3574 = vpop.f32.mrf.mxu0
        %v3575 = vadd.f32 0.0, %v3574
        %v3576 = vpop.f32.mrf.mxu0
        %3577 = vmatprep.mubr.bf16.mxu0 0
        %3578 = vmatmul.mubr.bf16.gmra.mxu0 %v3498
        %v3579 = vpop.f32.mrf.mxu0
        %v3580 = vadd.f32 0.0, %v3579
        %v3581 = vpop.f32.mrf.mxu0
        %v3582 = vpop.f32.mrf.mxu0
        %v3583 = vadd.f32 0.0, %v3582
        %v3584 = vpop.f32.mrf.mxu0
        %3585 = vmatprep.mubr.bf16.mxu0 0
        %3586 = vmatmul.mubr.bf16.gmra.mxu0 %v3499
        %v3587 = vpop.f32.mrf.mxu0
        %v3588 = vadd.f32 0.0, %v3587
        %v3589 = vpop.f32.mrf.mxu0
        %v3590 = vpop.f32.mrf.mxu0
        %v3591 = vadd.f32 0.0, %v3590
        %v3592 = vpop.f32.mrf.mxu0
        %3593 = vmatprep.mubr.bf16.mxu0 0
        %3594 = vmatmul.mubr.bf16.gmra.mxu0 %v3500
        %v3595 = vpop.f32.mrf.mxu0
        %v3596 = vadd.f32 0.0, %v3595
        %v3597 = vpop.f32.mrf.mxu0
        %v3598 = vpop.f32.mrf.mxu0
        %v3599 = vadd.f32 0.0, %v3598
        %v3600 = vpop.f32.mrf.mxu0
        %3601 = vmatprep.mubr.bf16.mxu0 0
        %3602 = vmatmul.mubr.bf16.gmra.mxu0 %v3501
        %v3603 = vpop.f32.mrf.mxu0
        %v3604 = vadd.f32 0.0, %v3603
        %v3605 = vpop.f32.mrf.mxu0
        %v3606 = vpop.f32.mrf.mxu0
        %v3607 = vadd.f32 0.0, %v3606
        %v3608 = vpop.f32.mrf.mxu0
        %3609 = vmatprep.mubr.bf16.mxu0 0
        %3610 = vmatmul.mubr.bf16.gmra.mxu0 %v3502
        %v3611 = vpop.f32.mrf.mxu0
        %v3612 = vadd.f32 0.0, %v3611
        %v3613 = vpop.f32.mrf.mxu0
        %v3614 = vpop.f32.mrf.mxu0
        %v3615 = vadd.f32 0.0, %v3614
        %v3616 = vpop.f32.mrf.mxu0
        %3617 = vmatprep.mubr.bf16.mxu0 0
        %3618 = vmatmul.mubr.bf16.gmra.mxu0 %v3503
        %v3619 = vpop.f32.mrf.mxu0
        %v3620 = vadd.f32 0.0, %v3619
        %v3621 = vpop.f32.mrf.mxu0
        %v3622 = vpop.f32.mrf.mxu0
        %v3623 = vadd.f32 0.0, %v3622
        %v3624 = vpop.f32.mrf.mxu0
        %3625 = vmatprep.mubr.bf16.mxu0 0
        %3626 = vmatmul.mubr.bf16.gmra.mxu0 %v3504
        %v3627 = vpop.f32.mrf.mxu0
        %v3628 = vadd.f32 0.0, %v3627
        %v3629 = vpop.f32.mrf.mxu0
        %v3630 = vpop.f32.mrf.mxu0
        %v3631 = vadd.f32 0.0, %v3630
        %v3632 = vpop.f32.mrf.mxu0
        %3633 = vmatprep.mubr.bf16.mxu0 0
        %3634 = vmatmul.mubr.bf16.gmra.mxu0 %v3505
        %v3635 = vpop.f32.mrf.mxu0
        %v3636 = vadd.f32 0.0, %v3635
        %v3637 = vpop.f32.mrf.mxu0
        %v3638 = vpop.f32.mrf.mxu0
        %v3639 = vadd.f32 0.0, %v3638
        %v3640 = vpop.f32.mrf.mxu0
        %3641 = vmatprep.mubr.bf16.mxu0 0
        %3642 = vmatmul.mubr.bf16.gmra.mxu0 %v3506
        %v3643 = vpop.f32.mrf.mxu0
        %v3644 = vadd.f32 0.0, %v3643
        %v3645 = vpop.f32.mrf.mxu0
        %v3646 = vpop.f32.mrf.mxu0
        %v3647 = vadd.f32 0.0, %v3646
        %v3648 = vpop.f32.mrf.mxu0
        %3649 = vmatprep.mubr.bf16.mxu0 0
        %3650 = vmatmul.mubr.bf16.gmra.mxu0 %v3507
        %v3651 = vpop.f32.mrf.mxu0
        %v3652 = vadd.f32 0.0, %v3651
        %v3653 = vpop.f32.mrf.mxu0
        %v3654 = vpop.f32.mrf.mxu0
        %v3655 = vadd.f32 0.0, %v3654
        %v3656 = vpop.f32.mrf.mxu0
        %3657 = vmatprep.mubr.bf16.mxu0 0
        %3658 = vmatmul.mubr.bf16.gmra.mxu0 %v3508
        %v3659 = vpop.f32.mrf.mxu0
        %v3660 = vadd.f32 0.0, %v3659
        %v3661 = vpop.f32.mrf.mxu0
        %v3662 = vpop.f32.mrf.mxu0
        %v3663 = vadd.f32 0.0, %v3662
        %v3664 = vpop.f32.mrf.mxu0
        %3665 = vmatprep.mubr.bf16.mxu0 0
        %3666 = vmatmul.mubr.bf16.gmra.mxu0 %v3509
        %v3667 = vpop.f32.mrf.mxu0
        %v3668 = vadd.f32 0.0, %v3667
        %v3669 = vpop.f32.mrf.mxu0
        %v3670 = vpop.f32.mrf.mxu0
        %v3671 = vadd.f32 0.0, %v3670
        %v3672 = vpop.f32.mrf.mxu0
        %3673 = vmatprep.mubr.bf16.mxu0 0
        %3674 = vmatmul.mubr.bf16.gmra.mxu0 %v3510
        %v3675 = vpop.f32.mrf.mxu0
        %v3676 = vadd.f32 0.0, %v3675
        %v3677 = vpop.f32.mrf.mxu0
        %v3678 = vpop.f32.mrf.mxu0
        %v3679 = vadd.f32 0.0, %v3678
        %v3680 = vpop.f32.mrf.mxu0
        %3681 = vmatprep.mubr.bf16.mxu0 0
        %3682 = vmatmul.mubr.bf16.gmra.mxu0 %v3511
        %v3683 = vpop.f32.mrf.mxu0
        %v3684 = vadd.f32 0.0, %v3683
        %v3685 = vpop.f32.mrf.mxu0
        %v3686 = vpop.f32.mrf.mxu0
        %v3687 = vadd.f32 0.0, %v3686
        %v3688 = vpop.f32.mrf.mxu0
        %3689 = vmatprep.mubr.bf16.mxu0 0
        %3690 = vmatmul.mubr.bf16.gmra.mxu0 %v3512
        %v3691 = vpop.f32.mrf.mxu0
        %v3692 = vadd.f32 0.0, %v3691
        %v3693 = vpop.f32.mrf.mxu0
        %v3694 = vpop.f32.mrf.mxu0
        %v3695 = vadd.f32 0.0, %v3694
        %v3696 = vpop.f32.mrf.mxu0
        %3697 = vdwg.mxu0
        %v3698 = vrcp.pop %v3434
        %v3699 = vrcp.pop %v3436
        %v3700 = vrcp.pop %v3438
        %v3701 = vrcp.pop %v3440
        %v3702 = vrcp.pop %v3442
        %v3703 = vrcp.pop %v3444
        %v3704 = vrcp.pop %v3446
        %v3705 = vrcp.pop %v3448
        %v3706 = vrcp.pop %v3450
        %v3707 = vrcp.pop %v3452
        %v3708 = vrcp.pop %v3454
        %v3709 = vrcp.pop %v3456
        %v3710 = vrcp.pop %v3458
        %v3711 = vrcp.pop %v3460
        %v3712 = vrcp.pop %v3462
        %v3713 = vrcp.pop %v3464
        %v3714 = vrcp.pop %v3466
        %v3715 = vrcp.pop %v3468
        %v3716 = vrcp.pop %v3470
        %v3717 = vrcp.pop %v3472
        %v3718 = vrcp.pop %v3474
        %v3719 = vrcp.pop %v3476
        %v3720 = vrcp.pop %v3478
        %v3721 = vrcp.pop %v3480
        %v3722 = vrcp.pop %v3482
        %v3723 = vrcp.pop %v3484
        %v3724 = vrcp.pop %v3486
        %v3725 = vrcp.pop %v3488
        %v3726 = vrcp.pop %v3490
        %v3727 = vrcp.pop %v3492
        %v3728 = vrcp.pop %v3494
        %v3729 = vrcp.pop %v3496
        %v3730 = vmul.f32 %v3572, %v3698
        %v3731 = vmul.f32 %v3575, %v3699
        %v3732 = vmul.f32 %v3580, %v3700
        %v3733 = vmul.f32 %v3583, %v3701
        %v3734 = vmul.f32 %v3588, %v3702
        %v3735 = vmul.f32 %v3591, %v3703
        %v3736 = vmul.f32 %v3596, %v3704
        %v3737 = vmul.f32 %v3599, %v3705
        %v3738 = vmul.f32 %v3604, %v3706
        %v3739 = vmul.f32 %v3607, %v3707
        %v3740 = vmul.f32 %v3612, %v3708
        %v3741 = vmul.f32 %v3615, %v3709
        %v3742 = vmul.f32 %v3620, %v3710
        %v3743 = vmul.f32 %v3623, %v3711
        %v3744 = vmul.f32 %v3628, %v3712
        %v3745 = vmul.f32 %v3631, %v3713
        %v3746 = vmul.f32 %v3636, %v3714
        %v3747 = vmul.f32 %v3639, %v3715
        %v3748 = vmul.f32 %v3644, %v3716
        %v3749 = vmul.f32 %v3647, %v3717
        %v3750 = vmul.f32 %v3652, %v3718
        %v3751 = vmul.f32 %v3655, %v3719
        %v3752 = vmul.f32 %v3660, %v3720
        %v3753 = vmul.f32 %v3663, %v3721
        %v3754 = vmul.f32 %v3668, %v3722
        %v3755 = vmul.f32 %v3671, %v3723
        %v3756 = vmul.f32 %v3676, %v3724
        %v3757 = vmul.f32 %v3679, %v3725
        %v3758 = vmul.f32 %v3684, %v3726
        %v3759 = vmul.f32 %v3687, %v3727
        %v3760 = vmul.f32 %v3692, %v3728
        %v3761 = vmul.f32 %v3695, %v3729
        %v3762 = vpack.c.bf16 %v3731, %v3730
        %v3763 = vpack.c.bf16 %v3733, %v3732
        %v3764 = vpack.c.bf16 %v3735, %v3734
        %v3765 = vpack.c.bf16 %v3737, %v3736
        %v3766 = vpack.c.bf16 %v3739, %v3738
        %v3767 = vpack.c.bf16 %v3741, %v3740
        %v3768 = vpack.c.bf16 %v3743, %v3742
        %v3769 = vpack.c.bf16 %v3745, %v3744
        %v3770 = vpack.c.bf16 %v3747, %v3746
        %v3771 = vpack.c.bf16 %v3749, %v3748
        %v3772 = vpack.c.bf16 %v3751, %v3750
        %v3773 = vpack.c.bf16 %v3753, %v3752
        %v3774 = vpack.c.bf16 %v3755, %v3754
        %v3775 = vpack.c.bf16 %v3757, %v3756
        %v3776 = vpack.c.bf16 %v3759, %v3758
        %v3777 = vpack.c.bf16 %v3761, %v3760
        %v3794 = vunpack.c.l.b16 %v3762
        %v3795 = vunpack.c.h.b16 %v3762
        %v3796 = vunpack.c.l.b16 %v3763
        %v3797 = vunpack.c.h.b16 %v3763
        %v3798 = vunpack.c.l.b16 %v3764
        %v3799 = vunpack.c.h.b16 %v3764
        %v3800 = vunpack.c.l.b16 %v3765
        %v3801 = vunpack.c.h.b16 %v3765
        %v3802 = vunpack.c.l.b16 %v3766
        %v3803 = vunpack.c.h.b16 %v3766
        %v3804 = vunpack.c.l.b16 %v3767
        %v3805 = vunpack.c.h.b16 %v3767
        %v3806 = vunpack.c.l.b16 %v3768
        %v3807 = vunpack.c.h.b16 %v3768
        %v3808 = vunpack.c.l.b16 %v3769
        %v3809 = vunpack.c.h.b16 %v3769
        %v3810 = vunpack.c.l.b16 %v3770
        %v3811 = vunpack.c.h.b16 %v3770
        %v3812 = vunpack.c.l.b16 %v3771
        %v3813 = vunpack.c.h.b16 %v3771
        %v3814 = vunpack.c.l.b16 %v3772
        %v3815 = vunpack.c.h.b16 %v3772
        %v3816 = vunpack.c.l.b16 %v3773
        %v3817 = vunpack.c.h.b16 %v3773
        %v3818 = vunpack.c.l.b16 %v3774
        %v3819 = vunpack.c.h.b16 %v3774
        %v3820 = vunpack.c.l.b16 %v3775
        %v3821 = vunpack.c.h.b16 %v3775
        %v3822 = vunpack.c.l.b16 %v3776
        %v3823 = vunpack.c.h.b16 %v3776
        %v3824 = vunpack.c.l.b16 %v3777
        %v3825 = vunpack.c.h.b16 %v3777
        %v3826 = vpack.c.b16 %v3794, %v3794
        %v3827 = vpack.c.b16 %v3795, %v3795
        %v3828 = vpack.c.b16 %v3796, %v3796
        %v3829 = vpack.c.b16 %v3797, %v3797
        %v3830 = vpack.c.b16 %v3798, %v3798
        %v3831 = vpack.c.b16 %v3799, %v3799
        %v3832 = vpack.c.b16 %v3800, %v3800
        %v3833 = vpack.c.b16 %v3801, %v3801
        %v3834 = vpack.c.b16 %v3802, %v3802
        %v3835 = vpack.c.b16 %v3803, %v3803
        %v3836 = vpack.c.b16 %v3804, %v3804
        %v3837 = vpack.c.b16 %v3805, %v3805
        %v3838 = vpack.c.b16 %v3806, %v3806
        %v3839 = vpack.c.b16 %v3807, %v3807
        %v3840 = vpack.c.b16 %v3808, %v3808
        %v3841 = vpack.c.b16 %v3809, %v3809
        %v3842 = vpack.c.b16 %v3810, %v3810
        %v3843 = vpack.c.b16 %v3811, %v3811
        %v3844 = vpack.c.b16 %v3812, %v3812
        %v3845 = vpack.c.b16 %v3813, %v3813
        %v3846 = vpack.c.b16 %v3814, %v3814
        %v3847 = vpack.c.b16 %v3815, %v3815
        %v3848 = vpack.c.b16 %v3816, %v3816
        %v3849 = vpack.c.b16 %v3817, %v3817
        %v3850 = vpack.c.b16 %v3818, %v3818
        %v3851 = vpack.c.b16 %v3819, %v3819
        %v3852 = vpack.c.b16 %v3820, %v3820
        %v3853 = vpack.c.b16 %v3821, %v3821
        %v3854 = vpack.c.b16 %v3822, %v3822
        %v3855 = vpack.c.b16 %v3823, %v3823
        %v3856 = vpack.c.b16 %v3824, %v3824
        %v3857 = vpack.c.b16 %v3825, %v3825
        %3858 = vrot.lane.b32.xlu0 %v3826, 64
        %v3859 = vpop.permute.xlu0 %3858
        %3860 = vrot.lane.b32.xlu0 %v3827, 64
        %v3861 = vpop.permute.xlu0 %3860
        %3862 = vrot.lane.b32.xlu0 %v3828, 64
        %v3863 = vpop.permute.xlu0 %3862
        %3864 = vrot.lane.b32.xlu0 %v3829, 64
        %v3865 = vpop.permute.xlu0 %3864
        %3866 = vrot.lane.b32.xlu0 %v3830, 64
        %v3867 = vpop.permute.xlu0 %3866
        %3868 = vrot.lane.b32.xlu0 %v3831, 64
        %v3869 = vpop.permute.xlu0 %3868
        %3870 = vrot.lane.b32.xlu0 %v3832, 64
        %v3871 = vpop.permute.xlu0 %3870
        %3872 = vrot.lane.b32.xlu0 %v3833, 64
        %v3873 = vpop.permute.xlu0 %3872
        %3874 = vrot.lane.b32.xlu0 %v3834, 64
        %v3875 = vpop.permute.xlu0 %3874
        %3876 = vrot.lane.b32.xlu0 %v3835, 64
        %v3877 = vpop.permute.xlu0 %3876
        %3878 = vrot.lane.b32.xlu0 %v3836, 64
        %v3879 = vpop.permute.xlu0 %3878
        %3880 = vrot.lane.b32.xlu0 %v3837, 64
        %v3881 = vpop.permute.xlu0 %3880
        %3882 = vrot.lane.b32.xlu0 %v3838, 64
        %v3883 = vpop.permute.xlu0 %3882
        %3884 = vrot.lane.b32.xlu0 %v3839, 64
        %v3885 = vpop.permute.xlu0 %3884
        %3886 = vrot.lane.b32.xlu0 %v3840, 64
        %v3887 = vpop.permute.xlu0 %3886
        %3888 = vrot.lane.b32.xlu0 %v3841, 64
        %v3889 = vpop.permute.xlu0 %3888
        %3890 = vrot.lane.b32.xlu0 %v3842, 64
        %v3891 = vpop.permute.xlu0 %3890
        %3892 = vrot.lane.b32.xlu0 %v3843, 64
        %v3893 = vpop.permute.xlu0 %3892
        %3894 = vrot.lane.b32.xlu0 %v3844, 64
        %v3895 = vpop.permute.xlu0 %3894
        %3896 = vrot.lane.b32.xlu0 %v3845, 64
        %v3897 = vpop.permute.xlu0 %3896
        %3898 = vrot.lane.b32.xlu0 %v3846, 64
        %v3899 = vpop.permute.xlu0 %3898
        %3900 = vrot.lane.b32.xlu0 %v3847, 64
        %v3901 = vpop.permute.xlu0 %3900
        %3902 = vrot.lane.b32.xlu0 %v3848, 64
        %v3903 = vpop.permute.xlu0 %3902
        %3904 = vrot.lane.b32.xlu0 %v3849, 64
        %v3905 = vpop.permute.xlu0 %3904
        %3906 = vrot.lane.b32.xlu0 %v3850, 64
        %v3907 = vpop.permute.xlu0 %3906
        %3908 = vrot.lane.b32.xlu0 %v3851, 64
        %v3909 = vpop.permute.xlu0 %3908
        %3910 = vrot.lane.b32.xlu0 %v3852, 64
        %v3911 = vpop.permute.xlu0 %3910
        %3912 = vrot.lane.b32.xlu0 %v3853, 64
        %v3913 = vpop.permute.xlu0 %3912
        %3914 = vrot.lane.b32.xlu0 %v3854, 64
        %v3915 = vpop.permute.xlu0 %3914
        %3916 = vrot.lane.b32.xlu0 %v3855, 64
        %v3917 = vpop.permute.xlu0 %3916
        %3918 = vrot.lane.b32.xlu0 %v3856, 64
        %v3919 = vpop.permute.xlu0 %3918
        %3920 = vrot.lane.b32.xlu0 %v3857, 64
        %v3921 = vpop.permute.xlu0 %3920
        %vm3954 = vcmask 781824
        %3955 = vst.msk [vmem:[#allocation2] sm:$0xf] %vm3954, %v3859
        %3956 = vst.msk [vmem:[#allocation2 + $0x4] sm:$0xf] %vm3954, %v3861
        %3957 = vst.msk [vmem:[#allocation2 + $0x8] sm:$0xf] %vm3954, %v3863
        %3958 = vst.msk [vmem:[#allocation2 + $0xc] sm:$0xf] %vm3954, %v3865
        %3959 = vst.msk [vmem:[#allocation2 + $0x10] sm:$0xf] %vm3954, %v3867
        %3960 = vst.msk [vmem:[#allocation2 + $0x14] sm:$0xf] %vm3954, %v3869
        %3961 = vst.msk [vmem:[#allocation2 + $0x18] sm:$0xf] %vm3954, %v3871
        %3962 = vst.msk [vmem:[#allocation2 + $0x1c] sm:$0xf] %vm3954, %v3873
        %3963 = vst.msk [vmem:[#allocation2 + $0x20] sm:$0xf] %vm3954, %v3875
        %3964 = vst.msk [vmem:[#allocation2 + $0x24] sm:$0xf] %vm3954, %v3877
        %3965 = vst.msk [vmem:[#allocation2 + $0x28] sm:$0xf] %vm3954, %v3879
        %3966 = vst.msk [vmem:[#allocation2 + $0x2c] sm:$0xf] %vm3954, %v3881
        %3967 = vst.msk [vmem:[#allocation2 + $0x30] sm:$0xf] %vm3954, %v3883
        %3968 = vst.msk [vmem:[#allocation2 + $0x34] sm:$0xf] %vm3954, %v3885
        %3969 = vst.msk [vmem:[#allocation2 + $0x38] sm:$0xf] %vm3954, %v3887
        %3970 = vst.msk [vmem:[#allocation2 + $0x3c] sm:$0xf] %vm3954, %v3889
        %3971 = vst.msk [vmem:[#allocation2 + $0x40] sm:$0xf] %vm3954, %v3891
        %3972 = vst.msk [vmem:[#allocation2 + $0x44] sm:$0xf] %vm3954, %v3893
        %3973 = vst.msk [vmem:[#allocation2 + $0x48] sm:$0xf] %vm3954, %v3895
        %3974 = vst.msk [vmem:[#allocation2 + $0x4c] sm:$0xf] %vm3954, %v3897
        %3975 = vst.msk [vmem:[#allocation2 + $0x50] sm:$0xf] %vm3954, %v3899
        %3976 = vst.msk [vmem:[#allocation2 + $0x54] sm:$0xf] %vm3954, %v3901
        %3977 = vst.msk [vmem:[#allocation2 + $0x58] sm:$0xf] %vm3954, %v3903
        %3978 = vst.msk [vmem:[#allocation2 + $0x5c] sm:$0xf] %vm3954, %v3905
        %3979 = vst.msk [vmem:[#allocation2 + $0x60] sm:$0xf] %vm3954, %v3907
        %3980 = vst.msk [vmem:[#allocation2 + $0x64] sm:$0xf] %vm3954, %v3909
        %3981 = vst.msk [vmem:[#allocation2 + $0x68] sm:$0xf] %vm3954, %v3911
        %3982 = vst.msk [vmem:[#allocation2 + $0x6c] sm:$0xf] %vm3954, %v3913
        %3983 = vst.msk [vmem:[#allocation2 + $0x70] sm:$0xf] %vm3954, %v3915
        %3984 = vst.msk [vmem:[#allocation2 + $0x74] sm:$0xf] %vm3954, %v3917
        %3985 = vst.msk [vmem:[#allocation2 + $0x78] sm:$0xf] %vm3954, %v3919
        %3986 = vst.msk [vmem:[#allocation2 + $0x7c] sm:$0xf] %vm3954, %v3921
        %3987 = vrot.lane.b32.xlu0 %v1073, 32
        %v3988 = vpop.permute.xlu0 %3987
        %3989 = vrot.lane.b32.xlu0 %v1074, 32
        %v3990 = vpop.permute.xlu0 %3989
        %3991 = vrot.lane.b32.xlu0 %v1075, 32
        %v3992 = vpop.permute.xlu0 %3991
        %3993 = vrot.lane.b32.xlu0 %v1076, 32
        %v3994 = vpop.permute.xlu0 %3993
        %3995 = vrot.lane.b32.xlu0 %v1077, 32
        %v3996 = vpop.permute.xlu0 %3995
        %3997 = vrot.lane.b32.xlu0 %v1078, 32
        %v3998 = vpop.permute.xlu0 %3997
        %3999 = vrot.lane.b32.xlu0 %v1079, 32
        %v4000 = vpop.permute.xlu0 %3999
        %4001 = vrot.lane.b32.xlu0 %v1080, 32
        %v4002 = vpop.permute.xlu0 %4001
        %4003 = vrot.lane.b32.xlu0 %v1081, 32
        %v4004 = vpop.permute.xlu0 %4003
        %4005 = vrot.lane.b32.xlu0 %v1082, 32
        %v4006 = vpop.permute.xlu0 %4005
        %4007 = vrot.lane.b32.xlu0 %v1083, 32
        %v4008 = vpop.permute.xlu0 %4007
        %4009 = vrot.lane.b32.xlu0 %v1084, 32
        %v4010 = vpop.permute.xlu0 %4009
        %4011 = vrot.lane.b32.xlu0 %v1085, 32
        %v4012 = vpop.permute.xlu0 %4011
        %4013 = vrot.lane.b32.xlu0 %v1086, 32
        %v4014 = vpop.permute.xlu0 %4013
        %4015 = vrot.lane.b32.xlu0 %v1087, 32
        %v4016 = vpop.permute.xlu0 %4015
        %4017 = vrot.lane.b32.xlu0 %v1088, 32
        %v4018 = vpop.permute.xlu0 %4017
        %4019 = vrot.lane.b32.xlu0 %v1089, 32
        %v4020 = vpop.permute.xlu0 %4019
        %4021 = vrot.lane.b32.xlu0 %v1091, 32
        %v4022 = vpop.permute.xlu0 %4021
        %4023 = vrot.lane.b32.xlu0 %v1093, 32
        %v4024 = vpop.permute.xlu0 %4023
        %4025 = vrot.lane.b32.xlu0 %v1095, 32
        %v4026 = vpop.permute.xlu0 %4025
        %4027 = vrot.lane.b32.xlu0 %v1097, 32
        %v4028 = vpop.permute.xlu0 %4027
        %4029 = vrot.lane.b32.xlu0 %v1099, 32
        %v4030 = vpop.permute.xlu0 %4029
        %4031 = vrot.lane.b32.xlu0 %v1101, 32
        %v4032 = vpop.permute.xlu0 %4031
        %4033 = vrot.lane.b32.xlu0 %v1103, 32
        %v4034 = vpop.permute.xlu0 %4033
        %v4036 = vsel %vm1105, %v3988, 0
        %v4039 = vsel %vm1105, %v3990, 0
        %v4042 = vsel %vm1105, %v3992, 0
        %v4045 = vsel %vm1105, %v3994, 0
        %v4048 = vsel %vm1105, %v3996, 0
        %v4051 = vsel %vm1105, %v3998, 0
        %v4054 = vsel %vm1105, %v4000, 0
        %v4057 = vsel %vm1105, %v4002, 0
        %v4060 = vsel %vm1105, %v4004, 0
        %v4063 = vsel %vm1105, %v4006, 0
        %v4066 = vsel %vm1105, %v4008, 0
        %v4069 = vsel %vm1105, %v4010, 0
        %v4072 = vsel %vm1105, %v4012, 0
        %v4075 = vsel %vm1105, %v4014, 0
        %v4078 = vsel %vm1105, %v4016, 0
        %v4081 = vsel %vm1105, %v4018, 0
        %v4084 = vsel %vm1105, %v4020, 0
        %v4087 = vsel %vm1105, %v4022, 0
        %v4090 = vsel %vm1105, %v4024, 0
        %v4093 = vsel %vm1105, %v4026, 0
        %v4096 = vsel %vm1105, %v4028, 0
        %v4099 = vsel %vm1105, %v4030, 0
        %v4102 = vsel %vm1105, %v4032, 0
        %v4105 = vsel %vm1105, %v4034, 0
        %4107 = vmatprep.subr.bf16.mxu0 0
        %4108 = vmatpush1.bf16.xpose.msra.mxu0 %v4105
        %4109 = vmatprep.subr.bf16.mxu0 0
        %4110 = vmatpush1.bf16.xpose.msra.mxu0 %v4102
        %4111 = vmatprep.subr.bf16.mxu0 0
        %4112 = vmatpush1.bf16.xpose.msra.mxu0 %v4099
        %4113 = vmatprep.subr.bf16.mxu0 0
        %4114 = vmatpush1.bf16.xpose.msra.mxu0 %v4096
        %4115 = vmatprep.subr.bf16.mxu0 0
        %4116 = vmatpush1.bf16.xpose.msra.mxu0 %v4093
        %4117 = vmatprep.subr.bf16.mxu0 0
        %4118 = vmatpush1.bf16.xpose.msra.mxu0 %v4090
        %4119 = vmatprep.subr.bf16.mxu0 0
        %4120 = vmatpush1.bf16.xpose.msra.mxu0 %v4087
        %4121 = vmatprep.subr.bf16.mxu0 0
        %4122 = vmatpush1.bf16.xpose.msra.mxu0 %v4084
        %4123 = vmatprep.subr.bf16.mxu0 0
        %4124 = vmatpush2.bf16.xpose.msra.mxu0 0
        %4125 = vmatprep.subr.bf16.mxu0 0
        %4126 = vmatpush2.bf16.xpose.msra.mxu0 0
        %4127 = vmatprep.subr.bf16.mxu0 0
        %4128 = vmatpush2.bf16.xpose.msra.mxu0 0
        %4129 = vmatprep.subr.bf16.mxu0 0
        %4130 = vmatpush2.bf16.xpose.msra.mxu0 0
        %4131 = vmatprep.subr.bf16.mxu0 0
        %4132 = vmatpush2.bf16.xpose.msra.mxu0 0
        %4133 = vmatprep.subr.bf16.mxu0 0
        %4134 = vmatpush2.bf16.xpose.msra.mxu0 0
        %4135 = vmatprep.subr.bf16.mxu0 0
        %4136 = vmatpush2.bf16.xpose.msra.mxu0 0
        %4137 = vmatprep.subr.bf16.mxu0 0
        %4138 = vmatpush2.bf16.xpose.msra.mxu0 0
        %4139 = vmatprep.mubr.bf16.mxu0 0
        %4140 = vmatmul.mubr.bf16.gmra.mxu0 %v4036
        %v4141 = vpop.f32.mrf.mxu0
        %v4142 = vadd.f32 0.0, %v4141
        %v4143 = vpop.f32.mrf.mxu0
        %v4144 = vpop.f32.mrf.mxu0
        %v4145 = vadd.f32 0.0, %v4144
        %v4146 = vpop.f32.mrf.mxu0
        %4147 = vmatprep.mubr.bf16.mxu0 0
        %4148 = vmatmul.mubr.bf16.gmra.mxu0 %v4039
        %v4149 = vpop.f32.mrf.mxu0
        %v4150 = vadd.f32 0.0, %v4149
        %v4151 = vpop.f32.mrf.mxu0
        %v4152 = vpop.f32.mrf.mxu0
        %v4153 = vadd.f32 0.0, %v4152
        %v4154 = vpop.f32.mrf.mxu0
        %4155 = vmatprep.mubr.bf16.mxu0 0
        %4156 = vmatmul.mubr.bf16.gmra.mxu0 %v4042
        %v4157 = vpop.f32.mrf.mxu0
        %v4158 = vadd.f32 0.0, %v4157
        %v4159 = vpop.f32.mrf.mxu0
        %v4160 = vpop.f32.mrf.mxu0
        %v4161 = vadd.f32 0.0, %v4160
        %v4162 = vpop.f32.mrf.mxu0
        %4163 = vmatprep.mubr.bf16.mxu0 0
        %4164 = vmatmul.mubr.bf16.gmra.mxu0 %v4045
        %v4165 = vpop.f32.mrf.mxu0
        %v4166 = vadd.f32 0.0, %v4165
        %v4167 = vpop.f32.mrf.mxu0
        %v4168 = vpop.f32.mrf.mxu0
        %v4169 = vadd.f32 0.0, %v4168
        %v4170 = vpop.f32.mrf.mxu0
        %4171 = vmatprep.mubr.bf16.mxu0 0
        %4172 = vmatmul.mubr.bf16.gmra.mxu0 %v4048
        %v4173 = vpop.f32.mrf.mxu0
        %v4174 = vadd.f32 0.0, %v4173
        %v4175 = vpop.f32.mrf.mxu0
        %v4176 = vpop.f32.mrf.mxu0
        %v4177 = vadd.f32 0.0, %v4176
        %v4178 = vpop.f32.mrf.mxu0
        %4179 = vmatprep.mubr.bf16.mxu0 0
        %4180 = vmatmul.mubr.bf16.gmra.mxu0 %v4051
        %v4181 = vpop.f32.mrf.mxu0
        %v4182 = vadd.f32 0.0, %v4181
        %v4183 = vpop.f32.mrf.mxu0
        %v4184 = vpop.f32.mrf.mxu0
        %v4185 = vadd.f32 0.0, %v4184
        %v4186 = vpop.f32.mrf.mxu0
        %4187 = vmatprep.mubr.bf16.mxu0 0
        %4188 = vmatmul.mubr.bf16.gmra.mxu0 %v4054
        %v4189 = vpop.f32.mrf.mxu0
        %v4190 = vadd.f32 0.0, %v4189
        %v4191 = vpop.f32.mrf.mxu0
        %v4192 = vpop.f32.mrf.mxu0
        %v4193 = vadd.f32 0.0, %v4192
        %v4194 = vpop.f32.mrf.mxu0
        %4195 = vmatprep.mubr.bf16.mxu0 0
        %4196 = vmatmul.mubr.bf16.gmra.mxu0 %v4057
        %v4197 = vpop.f32.mrf.mxu0
        %v4198 = vadd.f32 0.0, %v4197
        %v4199 = vpop.f32.mrf.mxu0
        %v4200 = vpop.f32.mrf.mxu0
        %v4201 = vadd.f32 0.0, %v4200
        %v4202 = vpop.f32.mrf.mxu0
        %4203 = vmatprep.mubr.bf16.mxu0 0
        %4204 = vmatmul.mubr.bf16.gmra.mxu0 %v4060
        %v4205 = vpop.f32.mrf.mxu0
        %v4206 = vadd.f32 0.0, %v4205
        %v4207 = vpop.f32.mrf.mxu0
        %v4208 = vpop.f32.mrf.mxu0
        %v4209 = vadd.f32 0.0, %v4208
        %v4210 = vpop.f32.mrf.mxu0
        %4211 = vmatprep.mubr.bf16.mxu0 0
        %4212 = vmatmul.mubr.bf16.gmra.mxu0 %v4063
        %v4213 = vpop.f32.mrf.mxu0
        %v4214 = vadd.f32 0.0, %v4213
        %v4215 = vpop.f32.mrf.mxu0
        %v4216 = vpop.f32.mrf.mxu0
        %v4217 = vadd.f32 0.0, %v4216
        %v4218 = vpop.f32.mrf.mxu0
        %4219 = vmatprep.mubr.bf16.mxu0 0
        %4220 = vmatmul.mubr.bf16.gmra.mxu0 %v4066
        %v4221 = vpop.f32.mrf.mxu0
        %v4222 = vadd.f32 0.0, %v4221
        %v4223 = vpop.f32.mrf.mxu0
        %v4224 = vpop.f32.mrf.mxu0
        %v4225 = vadd.f32 0.0, %v4224
        %v4226 = vpop.f32.mrf.mxu0
        %4227 = vmatprep.mubr.bf16.mxu0 0
        %4228 = vmatmul.mubr.bf16.gmra.mxu0 %v4069
        %v4229 = vpop.f32.mrf.mxu0
        %v4230 = vadd.f32 0.0, %v4229
        %v4231 = vpop.f32.mrf.mxu0
        %v4232 = vpop.f32.mrf.mxu0
        %v4233 = vadd.f32 0.0, %v4232
        %v4234 = vpop.f32.mrf.mxu0
        %4235 = vmatprep.mubr.bf16.mxu0 0
        %4236 = vmatmul.mubr.bf16.gmra.mxu0 %v4072
        %v4237 = vpop.f32.mrf.mxu0
        %v4238 = vadd.f32 0.0, %v4237
        %v4239 = vpop.f32.mrf.mxu0
        %v4240 = vpop.f32.mrf.mxu0
        %v4241 = vadd.f32 0.0, %v4240
        %v4242 = vpop.f32.mrf.mxu0
        %4243 = vmatprep.mubr.bf16.mxu0 0
        %4244 = vmatmul.mubr.bf16.gmra.mxu0 %v4075
        %v4245 = vpop.f32.mrf.mxu0
        %v4246 = vadd.f32 0.0, %v4245
        %v4247 = vpop.f32.mrf.mxu0
        %v4248 = vpop.f32.mrf.mxu0
        %v4249 = vadd.f32 0.0, %v4248
        %v4250 = vpop.f32.mrf.mxu0
        %4251 = vmatprep.mubr.bf16.mxu0 0
        %4252 = vmatmul.mubr.bf16.gmra.mxu0 %v4078
        %v4253 = vpop.f32.mrf.mxu0
        %v4254 = vadd.f32 0.0, %v4253
        %v4255 = vpop.f32.mrf.mxu0
        %v4256 = vpop.f32.mrf.mxu0
        %v4257 = vadd.f32 0.0, %v4256
        %v4258 = vpop.f32.mrf.mxu0
        %4259 = vmatprep.mubr.bf16.mxu0 0
        %4260 = vmatmul.mubr.bf16.gmra.mxu0 %v4081
        %v4261 = vpop.f32.mrf.mxu0
        %v4262 = vadd.f32 0.0, %v4261
        %v4263 = vpop.f32.mrf.mxu0
        %v4264 = vpop.f32.mrf.mxu0
        %v4265 = vadd.f32 0.0, %v4264
        %v4266 = vpop.f32.mrf.mxu0
        %4267 = vdwg.mxu0
        %4268 = vmax.xlane.f32.xlu0 %v4142
        %v4269 = vpop.xlane.xlu0 %4268
        %4270 = vmax.xlane.f32.xlu0 %v4145
        %v4271 = vpop.xlane.xlu0 %4270
        %4272 = vmax.xlane.f32.xlu0 %v4150
        %v4273 = vpop.xlane.xlu0 %4272
        %4274 = vmax.xlane.f32.xlu0 %v4153
        %v4275 = vpop.xlane.xlu0 %4274
        %4276 = vmax.xlane.f32.xlu0 %v4158
        %v4277 = vpop.xlane.xlu0 %4276
        %4278 = vmax.xlane.f32.xlu0 %v4161
        %v4279 = vpop.xlane.xlu0 %4278
        %4280 = vmax.xlane.f32.xlu0 %v4166
        %v4281 = vpop.xlane.xlu0 %4280
        %4282 = vmax.xlane.f32.xlu0 %v4169
        %v4283 = vpop.xlane.xlu0 %4282
        %4284 = vmax.xlane.f32.xlu0 %v4174
        %v4285 = vpop.xlane.xlu0 %4284
        %4286 = vmax.xlane.f32.xlu0 %v4177
        %v4287 = vpop.xlane.xlu0 %4286
        %4288 = vmax.xlane.f32.xlu0 %v4182
        %v4289 = vpop.xlane.xlu0 %4288
        %4290 = vmax.xlane.f32.xlu0 %v4185
        %v4291 = vpop.xlane.xlu0 %4290
        %4292 = vmax.xlane.f32.xlu0 %v4190
        %v4293 = vpop.xlane.xlu0 %4292
        %4294 = vmax.xlane.f32.xlu0 %v4193
        %v4295 = vpop.xlane.xlu0 %4294
        %4296 = vmax.xlane.f32.xlu0 %v4198
        %v4297 = vpop.xlane.xlu0 %4296
        %4298 = vmax.xlane.f32.xlu0 %v4201
        %v4299 = vpop.xlane.xlu0 %4298
        %4300 = vmax.xlane.f32.xlu0 %v4206
        %v4301 = vpop.xlane.xlu0 %4300
        %4302 = vmax.xlane.f32.xlu0 %v4209
        %v4303 = vpop.xlane.xlu0 %4302
        %4304 = vmax.xlane.f32.xlu0 %v4214
        %v4305 = vpop.xlane.xlu0 %4304
        %4306 = vmax.xlane.f32.xlu0 %v4217
        %v4307 = vpop.xlane.xlu0 %4306
        %4308 = vmax.xlane.f32.xlu0 %v4222
        %v4309 = vpop.xlane.xlu0 %4308
        %4310 = vmax.xlane.f32.xlu0 %v4225
        %v4311 = vpop.xlane.xlu0 %4310
        %4312 = vmax.xlane.f32.xlu0 %v4230
        %v4313 = vpop.xlane.xlu0 %4312
        %4314 = vmax.xlane.f32.xlu0 %v4233
        %v4315 = vpop.xlane.xlu0 %4314
        %4316 = vmax.xlane.f32.xlu0 %v4238
        %v4317 = vpop.xlane.xlu0 %4316
        %4318 = vmax.xlane.f32.xlu0 %v4241
        %v4319 = vpop.xlane.xlu0 %4318
        %4320 = vmax.xlane.f32.xlu0 %v4246
        %v4321 = vpop.xlane.xlu0 %4320
        %4322 = vmax.xlane.f32.xlu0 %v4249
        %v4323 = vpop.xlane.xlu0 %4322
        %4324 = vmax.xlane.f32.xlu0 %v4254
        %v4325 = vpop.xlane.xlu0 %4324
        %4326 = vmax.xlane.f32.xlu0 %v4257
        %v4327 = vpop.xlane.xlu0 %4326
        %4328 = vmax.xlane.f32.xlu0 %v4262
        %v4329 = vpop.xlane.xlu0 %4328
        %4330 = vmax.xlane.f32.xlu0 %v4265
        %v4331 = vpop.xlane.xlu0 %4330
        %v4332 = vsub.f32 %v4142, %v4269
        %v4333 = vsub.f32 %v4145, %v4271
        %v4334 = vsub.f32 %v4150, %v4273
        %v4335 = vsub.f32 %v4153, %v4275
        %v4336 = vsub.f32 %v4158, %v4277
        %v4337 = vsub.f32 %v4161, %v4279
        %v4338 = vsub.f32 %v4166, %v4281
        %v4339 = vsub.f32 %v4169, %v4283
        %v4340 = vsub.f32 %v4174, %v4285
        %v4341 = vsub.f32 %v4177, %v4287
        %v4342 = vsub.f32 %v4182, %v4289
        %v4343 = vsub.f32 %v4185, %v4291
        %v4344 = vsub.f32 %v4190, %v4293
        %v4345 = vsub.f32 %v4193, %v4295
        %v4346 = vsub.f32 %v4198, %v4297
        %v4347 = vsub.f32 %v4201, %v4299
        %v4348 = vsub.f32 %v4206, %v4301
        %v4349 = vsub.f32 %v4209, %v4303
        %v4350 = vsub.f32 %v4214, %v4305
        %v4351 = vsub.f32 %v4217, %v4307
        %v4352 = vsub.f32 %v4222, %v4309
        %v4353 = vsub.f32 %v4225, %v4311
        %v4354 = vsub.f32 %v4230, %v4313
        %v4355 = vsub.f32 %v4233, %v4315
        %v4356 = vsub.f32 %v4238, %v4317
        %v4357 = vsub.f32 %v4241, %v4319
        %v4358 = vsub.f32 %v4246, %v4321
        %v4359 = vsub.f32 %v4249, %v4323
        %v4360 = vsub.f32 %v4254, %v4325
        %v4361 = vsub.f32 %v4257, %v4327
        %v4362 = vsub.f32 %v4262, %v4329
        %v4363 = vsub.f32 %v4265, %v4331
        %v4364 = vmul.f32 %v4332, 1.442695
        %v4365 = vpow.pop %v4364
        %v4366 = vmul.f32 %v4333, 1.442695
        %v4367 = vpow.pop %v4366
        %v4368 = vmul.f32 %v4334, 1.442695
        %v4369 = vpow.pop %v4368
        %v4370 = vmul.f32 %v4335, 1.442695
        %v4371 = vpow.pop %v4370
        %v4372 = vmul.f32 %v4336, 1.442695
        %v4373 = vpow.pop %v4372
        %v4374 = vmul.f32 %v4337, 1.442695
        %v4375 = vpow.pop %v4374
        %v4376 = vmul.f32 %v4338, 1.442695
        %v4377 = vpow.pop %v4376
        %v4378 = vmul.f32 %v4339, 1.442695
        %v4379 = vpow.pop %v4378
        %v4380 = vmul.f32 %v4340, 1.442695
        %v4381 = vpow.pop %v4380
        %v4382 = vmul.f32 %v4341, 1.442695
        %v4383 = vpow.pop %v4382
        %v4384 = vmul.f32 %v4342, 1.442695
        %v4385 = vpow.pop %v4384
        %v4386 = vmul.f32 %v4343, 1.442695
        %v4387 = vpow.pop %v4386
        %v4388 = vmul.f32 %v4344, 1.442695
        %v4389 = vpow.pop %v4388
        %v4390 = vmul.f32 %v4345, 1.442695
        %v4391 = vpow.pop %v4390
        %v4392 = vmul.f32 %v4346, 1.442695
        %v4393 = vpow.pop %v4392
        %v4394 = vmul.f32 %v4347, 1.442695
        %v4395 = vpow.pop %v4394
        %v4396 = vmul.f32 %v4348, 1.442695
        %v4397 = vpow.pop %v4396
        %v4398 = vmul.f32 %v4349, 1.442695
        %v4399 = vpow.pop %v4398
        %v4400 = vmul.f32 %v4350, 1.442695
        %v4401 = vpow.pop %v4400
        %v4402 = vmul.f32 %v4351, 1.442695
        %v4403 = vpow.pop %v4402
        %v4404 = vmul.f32 %v4352, 1.442695
        %v4405 = vpow.pop %v4404
        %v4406 = vmul.f32 %v4353, 1.442695
        %v4407 = vpow.pop %v4406
        %v4408 = vmul.f32 %v4354, 1.442695
        %v4409 = vpow.pop %v4408
        %v4410 = vmul.f32 %v4355, 1.442695
        %v4411 = vpow.pop %v4410
        %v4412 = vmul.f32 %v4356, 1.442695
        %v4413 = vpow.pop %v4412
        %v4414 = vmul.f32 %v4357, 1.442695
        %v4415 = vpow.pop %v4414
        %v4416 = vmul.f32 %v4358, 1.442695
        %v4417 = vpow.pop %v4416
        %v4418 = vmul.f32 %v4359, 1.442695
        %v4419 = vpow.pop %v4418
        %v4420 = vmul.f32 %v4360, 1.442695
        %v4421 = vpow.pop %v4420
        %v4422 = vmul.f32 %v4361, 1.442695
        %v4423 = vpow.pop %v4422
        %v4424 = vmul.f32 %v4362, 1.442695
        %v4425 = vpow.pop %v4424
        %v4426 = vmul.f32 %v4363, 1.442695
        %v4427 = vpow.pop %v4426
        %4428 = vadd.xlane.f32.xlu0 %v4365
        %v4429 = vpop.xlane.xlu0 %4428
        %4430 = vadd.xlane.f32.xlu0 %v4367
        %v4431 = vpop.xlane.xlu0 %4430
        %4432 = vadd.xlane.f32.xlu0 %v4369
        %v4433 = vpop.xlane.xlu0 %4432
        %4434 = vadd.xlane.f32.xlu0 %v4371
        %v4435 = vpop.xlane.xlu0 %4434
        %4436 = vadd.xlane.f32.xlu0 %v4373
        %v4437 = vpop.xlane.xlu0 %4436
        %4438 = vadd.xlane.f32.xlu0 %v4375
        %v4439 = vpop.xlane.xlu0 %4438
        %4440 = vadd.xlane.f32.xlu0 %v4377
        %v4441 = vpop.xlane.xlu0 %4440
        %4442 = vadd.xlane.f32.xlu0 %v4379
        %v4443 = vpop.xlane.xlu0 %4442
        %4444 = vadd.xlane.f32.xlu0 %v4381
        %v4445 = vpop.xlane.xlu0 %4444
        %4446 = vadd.xlane.f32.xlu0 %v4383
        %v4447 = vpop.xlane.xlu0 %4446
        %4448 = vadd.xlane.f32.xlu0 %v4385
        %v4449 = vpop.xlane.xlu0 %4448
        %4450 = vadd.xlane.f32.xlu0 %v4387
        %v4451 = vpop.xlane.xlu0 %4450
        %4452 = vadd.xlane.f32.xlu0 %v4389
        %v4453 = vpop.xlane.xlu0 %4452
        %4454 = vadd.xlane.f32.xlu0 %v4391
        %v4455 = vpop.xlane.xlu0 %4454
        %4456 = vadd.xlane.f32.xlu0 %v4393
        %v4457 = vpop.xlane.xlu0 %4456
        %4458 = vadd.xlane.f32.xlu0 %v4395
        %v4459 = vpop.xlane.xlu0 %4458
        %4460 = vadd.xlane.f32.xlu0 %v4397
        %v4461 = vpop.xlane.xlu0 %4460
        %4462 = vadd.xlane.f32.xlu0 %v4399
        %v4463 = vpop.xlane.xlu0 %4462
        %4464 = vadd.xlane.f32.xlu0 %v4401
        %v4465 = vpop.xlane.xlu0 %4464
        %4466 = vadd.xlane.f32.xlu0 %v4403
        %v4467 = vpop.xlane.xlu0 %4466
        %4468 = vadd.xlane.f32.xlu0 %v4405
        %v4469 = vpop.xlane.xlu0 %4468
        %4470 = vadd.xlane.f32.xlu0 %v4407
        %v4471 = vpop.xlane.xlu0 %4470
        %4472 = vadd.xlane.f32.xlu0 %v4409
        %v4473 = vpop.xlane.xlu0 %4472
        %4474 = vadd.xlane.f32.xlu0 %v4411
        %v4475 = vpop.xlane.xlu0 %4474
        %4476 = vadd.xlane.f32.xlu0 %v4413
        %v4477 = vpop.xlane.xlu0 %4476
        %4478 = vadd.xlane.f32.xlu0 %v4415
        %v4479 = vpop.xlane.xlu0 %4478
        %4480 = vadd.xlane.f32.xlu0 %v4417
        %v4481 = vpop.xlane.xlu0 %4480
        %4482 = vadd.xlane.f32.xlu0 %v4419
        %v4483 = vpop.xlane.xlu0 %4482
        %4484 = vadd.xlane.f32.xlu0 %v4421
        %v4485 = vpop.xlane.xlu0 %4484
        %4486 = vadd.xlane.f32.xlu0 %v4423
        %v4487 = vpop.xlane.xlu0 %4486
        %4488 = vadd.xlane.f32.xlu0 %v4425
        %v4489 = vpop.xlane.xlu0 %4488
        %4490 = vadd.xlane.f32.xlu0 %v4427
        %v4491 = vpop.xlane.xlu0 %4490
        %v4492 = vpack.c.bf16 %v4367, %v4365
        %v4493 = vpack.c.bf16 %v4371, %v4369
        %v4494 = vpack.c.bf16 %v4375, %v4373
        %v4495 = vpack.c.bf16 %v4379, %v4377
        %v4496 = vpack.c.bf16 %v4383, %v4381
        %v4497 = vpack.c.bf16 %v4387, %v4385
        %v4498 = vpack.c.bf16 %v4391, %v4389
        %v4499 = vpack.c.bf16 %v4395, %v4393
        %v4500 = vpack.c.bf16 %v4399, %v4397
        %v4501 = vpack.c.bf16 %v4403, %v4401
        %v4502 = vpack.c.bf16 %v4407, %v4405
        %v4503 = vpack.c.bf16 %v4411, %v4409
        %v4504 = vpack.c.bf16 %v4415, %v4413
        %v4505 = vpack.c.bf16 %v4419, %v4417
        %v4506 = vpack.c.bf16 %v4423, %v4421
        %v4507 = vpack.c.bf16 %v4427, %v4425
        %4508 = vrot.lane.b32.xlu0 %v1090, 32
        %v4509 = vpop.permute.xlu0 %4508
        %4510 = vrot.lane.b32.xlu0 %v1092, 32
        %v4511 = vpop.permute.xlu0 %4510
        %4512 = vrot.lane.b32.xlu0 %v1094, 32
        %v4513 = vpop.permute.xlu0 %4512
        %4514 = vrot.lane.b32.xlu0 %v1096, 32
        %v4515 = vpop.permute.xlu0 %4514
        %4516 = vrot.lane.b32.xlu0 %v1098, 32
        %v4517 = vpop.permute.xlu0 %4516
        %4518 = vrot.lane.b32.xlu0 %v1100, 32
        %v4519 = vpop.permute.xlu0 %4518
        %4520 = vrot.lane.b32.xlu0 %v1102, 32
        %v4521 = vpop.permute.xlu0 %4520
        %4522 = vrot.lane.b32.xlu0 %v1104, 32
        %v4523 = vpop.permute.xlu0 %4522
        %4532 = vmatprep.subr.bf16.mxu0 0
        %4533 = vmatpush1.bf16.msra.mxu0 %v4523
        %4534 = vmatprep.subr.bf16.mxu0 0
        %4535 = vmatpush1.bf16.msra.mxu0 %v4521
        %4536 = vmatprep.subr.bf16.mxu0 0
        %4537 = vmatpush1.bf16.msra.mxu0 %v4519
        %4538 = vmatprep.subr.bf16.mxu0 0
        %4539 = vmatpush1.bf16.msra.mxu0 %v4517
        %4540 = vmatprep.subr.bf16.mxu0 0
        %4541 = vmatpush1.bf16.msra.mxu0 %v4515
        %4542 = vmatprep.subr.bf16.mxu0 0
        %4543 = vmatpush1.bf16.msra.mxu0 %v4513
        %4544 = vmatprep.subr.bf16.mxu0 0
        %4545 = vmatpush1.bf16.msra.mxu0 %v4511
        %4546 = vmatprep.subr.bf16.mxu0 0
        %4547 = vmatpush1.bf16.msra.mxu0 %v4509
        %4548 = vmatprep.subr.bf16.mxu0 0
        %4549 = vmatpush2.bf16.msra.mxu0 0
        %4550 = vmatprep.subr.bf16.mxu0 0
        %4551 = vmatpush2.bf16.msra.mxu0 0
        %4552 = vmatprep.subr.bf16.mxu0 0
        %4553 = vmatpush2.bf16.msra.mxu0 0
        %4554 = vmatprep.subr.bf16.mxu0 0
        %4555 = vmatpush2.bf16.msra.mxu0 0
        %4556 = vmatprep.subr.bf16.mxu0 0
        %4557 = vmatpush2.bf16.msra.mxu0 0
        %4558 = vmatprep.subr.bf16.mxu0 0
        %4559 = vmatpush2.bf16.msra.mxu0 0
        %4560 = vmatprep.subr.bf16.mxu0 0
        %4561 = vmatpush2.bf16.msra.mxu0 0
        %4562 = vmatprep.subr.bf16.mxu0 0
        %4563 = vmatpush2.bf16.msra.mxu0 0
        %4564 = vmatprep.mubr.bf16.mxu0 0
        %4565 = vmatmul.mubr.bf16.gmra.mxu0 %v4492
        %v4566 = vpop.f32.mrf.mxu0
        %v4567 = vadd.f32 0.0, %v4566
        %v4568 = vpop.f32.mrf.mxu0
        %v4569 = vpop.f32.mrf.mxu0
        %v4570 = vadd.f32 0.0, %v4569
        %v4571 = vpop.f32.mrf.mxu0
        %4572 = vmatprep.mubr.bf16.mxu0 0
        %4573 = vmatmul.mubr.bf16.gmra.mxu0 %v4493
        %v4574 = vpop.f32.mrf.mxu0
        %v4575 = vadd.f32 0.0, %v4574
        %v4576 = vpop.f32.mrf.mxu0
        %v4577 = vpop.f32.mrf.mxu0
        %v4578 = vadd.f32 0.0, %v4577
        %v4579 = vpop.f32.mrf.mxu0
        %4580 = vmatprep.mubr.bf16.mxu0 0
        %4581 = vmatmul.mubr.bf16.gmra.mxu0 %v4494
        %v4582 = vpop.f32.mrf.mxu0
        %v4583 = vadd.f32 0.0, %v4582
        %v4584 = vpop.f32.mrf.mxu0
        %v4585 = vpop.f32.mrf.mxu0
        %v4586 = vadd.f32 0.0, %v4585
        %v4587 = vpop.f32.mrf.mxu0
        %4588 = vmatprep.mubr.bf16.mxu0 0
        %4589 = vmatmul.mubr.bf16.gmra.mxu0 %v4495
        %v4590 = vpop.f32.mrf.mxu0
        %v4591 = vadd.f32 0.0, %v4590
        %v4592 = vpop.f32.mrf.mxu0
        %v4593 = vpop.f32.mrf.mxu0
        %v4594 = vadd.f32 0.0, %v4593
        %v4595 = vpop.f32.mrf.mxu0
        %4596 = vmatprep.mubr.bf16.mxu0 0
        %4597 = vmatmul.mubr.bf16.gmra.mxu0 %v4496
        %v4598 = vpop.f32.mrf.mxu0
        %v4599 = vadd.f32 0.0, %v4598
        %v4600 = vpop.f32.mrf.mxu0
        %v4601 = vpop.f32.mrf.mxu0
        %v4602 = vadd.f32 0.0, %v4601
        %v4603 = vpop.f32.mrf.mxu0
        %4604 = vmatprep.mubr.bf16.mxu0 0
        %4605 = vmatmul.mubr.bf16.gmra.mxu0 %v4497
        %v4606 = vpop.f32.mrf.mxu0
        %v4607 = vadd.f32 0.0, %v4606
        %v4608 = vpop.f32.mrf.mxu0
        %v4609 = vpop.f32.mrf.mxu0
        %v4610 = vadd.f32 0.0, %v4609
        %v4611 = vpop.f32.mrf.mxu0
        %4612 = vmatprep.mubr.bf16.mxu0 0
        %4613 = vmatmul.mubr.bf16.gmra.mxu0 %v4498
        %v4614 = vpop.f32.mrf.mxu0
        %v4615 = vadd.f32 0.0, %v4614
        %v4616 = vpop.f32.mrf.mxu0
        %v4617 = vpop.f32.mrf.mxu0
        %v4618 = vadd.f32 0.0, %v4617
        %v4619 = vpop.f32.mrf.mxu0
        %4620 = vmatprep.mubr.bf16.mxu0 0
        %4621 = vmatmul.mubr.bf16.gmra.mxu0 %v4499
        %v4622 = vpop.f32.mrf.mxu0
        %v4623 = vadd.f32 0.0, %v4622
        %v4624 = vpop.f32.mrf.mxu0
        %v4625 = vpop.f32.mrf.mxu0
        %v4626 = vadd.f32 0.0, %v4625
        %v4627 = vpop.f32.mrf.mxu0
        %4628 = vmatprep.mubr.bf16.mxu0 0
        %4629 = vmatmul.mubr.bf16.gmra.mxu0 %v4500
        %v4630 = vpop.f32.mrf.mxu0
        %v4631 = vadd.f32 0.0, %v4630
        %v4632 = vpop.f32.mrf.mxu0
        %v4633 = vpop.f32.mrf.mxu0
        %v4634 = vadd.f32 0.0, %v4633
        %v4635 = vpop.f32.mrf.mxu0
        %4636 = vmatprep.mubr.bf16.mxu0 0
        %4637 = vmatmul.mubr.bf16.gmra.mxu0 %v4501
        %v4638 = vpop.f32.mrf.mxu0
        %v4639 = vadd.f32 0.0, %v4638
        %v4640 = vpop.f32.mrf.mxu0
        %v4641 = vpop.f32.mrf.mxu0
        %v4642 = vadd.f32 0.0, %v4641
        %v4643 = vpop.f32.mrf.mxu0
        %4644 = vmatprep.mubr.bf16.mxu0 0
        %4645 = vmatmul.mubr.bf16.gmra.mxu0 %v4502
        %v4646 = vpop.f32.mrf.mxu0
        %v4647 = vadd.f32 0.0, %v4646
        %v4648 = vpop.f32.mrf.mxu0
        %v4649 = vpop.f32.mrf.mxu0
        %v4650 = vadd.f32 0.0, %v4649
        %v4651 = vpop.f32.mrf.mxu0
        %4652 = vmatprep.mubr.bf16.mxu0 0
        %4653 = vmatmul.mubr.bf16.gmra.mxu0 %v4503
        %v4654 = vpop.f32.mrf.mxu0
        %v4655 = vadd.f32 0.0, %v4654
        %v4656 = vpop.f32.mrf.mxu0
        %v4657 = vpop.f32.mrf.mxu0
        %v4658 = vadd.f32 0.0, %v4657
        %v4659 = vpop.f32.mrf.mxu0
        %4660 = vmatprep.mubr.bf16.mxu0 0
        %4661 = vmatmul.mubr.bf16.gmra.mxu0 %v4504
        %v4662 = vpop.f32.mrf.mxu0
        %v4663 = vadd.f32 0.0, %v4662
        %v4664 = vpop.f32.mrf.mxu0
        %v4665 = vpop.f32.mrf.mxu0
        %v4666 = vadd.f32 0.0, %v4665
        %v4667 = vpop.f32.mrf.mxu0
        %4668 = vmatprep.mubr.bf16.mxu0 0
        %4669 = vmatmul.mubr.bf16.gmra.mxu0 %v4505
        %v4670 = vpop.f32.mrf.mxu0
        %v4671 = vadd.f32 0.0, %v4670
        %v4672 = vpop.f32.mrf.mxu0
        %v4673 = vpop.f32.mrf.mxu0
        %v4674 = vadd.f32 0.0, %v4673
        %v4675 = vpop.f32.mrf.mxu0
        %4676 = vmatprep.mubr.bf16.mxu0 0
        %4677 = vmatmul.mubr.bf16.gmra.mxu0 %v4506
        %v4678 = vpop.f32.mrf.mxu0
        %v4679 = vadd.f32 0.0, %v4678
        %v4680 = vpop.f32.mrf.mxu0
        %v4681 = vpop.f32.mrf.mxu0
        %v4682 = vadd.f32 0.0, %v4681
        %v4683 = vpop.f32.mrf.mxu0
        %4684 = vmatprep.mubr.bf16.mxu0 0
        %4685 = vmatmul.mubr.bf16.gmra.mxu0 %v4507
        %v4686 = vpop.f32.mrf.mxu0
        %v4687 = vadd.f32 0.0, %v4686
        %v4688 = vpop.f32.mrf.mxu0
        %v4689 = vpop.f32.mrf.mxu0
        %v4690 = vadd.f32 0.0, %v4689
        %v4691 = vpop.f32.mrf.mxu0
        %4692 = vdwg.mxu0
        %v4693 = vrcp.pop %v4429
        %v4694 = vrcp.pop %v4431
        %v4695 = vrcp.pop %v4433
        %v4696 = vrcp.pop %v4435
        %v4697 = vrcp.pop %v4437
        %v4698 = vrcp.pop %v4439
        %v4699 = vrcp.pop %v4441
        %v4700 = vrcp.pop %v4443
        %v4701 = vrcp.pop %v4445
        %v4702 = vrcp.pop %v4447
        %v4703 = vrcp.pop %v4449
        %v4704 = vrcp.pop %v4451
        %v4705 = vrcp.pop %v4453
        %v4706 = vrcp.pop %v4455
        %v4707 = vrcp.pop %v4457
        %v4708 = vrcp.pop %v4459
        %v4709 = vrcp.pop %v4461
        %v4710 = vrcp.pop %v4463
        %v4711 = vrcp.pop %v4465
        %v4712 = vrcp.pop %v4467
        %v4713 = vrcp.pop %v4469
        %v4714 = vrcp.pop %v4471
        %v4715 = vrcp.pop %v4473
        %v4716 = vrcp.pop %v4475
        %v4717 = vrcp.pop %v4477
        %v4718 = vrcp.pop %v4479
        %v4719 = vrcp.pop %v4481
        %v4720 = vrcp.pop %v4483
        %v4721 = vrcp.pop %v4485
        %v4722 = vrcp.pop %v4487
        %v4723 = vrcp.pop %v4489
        %v4724 = vrcp.pop %v4491
        %v4725 = vmul.f32 %v4567, %v4693
        %v4726 = vmul.f32 %v4570, %v4694
        %v4727 = vmul.f32 %v4575, %v4695
        %v4728 = vmul.f32 %v4578, %v4696
        %v4729 = vmul.f32 %v4583, %v4697
        %v4730 = vmul.f32 %v4586, %v4698
        %v4731 = vmul.f32 %v4591, %v4699
        %v4732 = vmul.f32 %v4594, %v4700
        %v4733 = vmul.f32 %v4599, %v4701
        %v4734 = vmul.f32 %v4602, %v4702
        %v4735 = vmul.f32 %v4607, %v4703
        %v4736 = vmul.f32 %v4610, %v4704
        %v4737 = vmul.f32 %v4615, %v4705
        %v4738 = vmul.f32 %v4618, %v4706
        %v4739 = vmul.f32 %v4623, %v4707
        %v4740 = vmul.f32 %v4626, %v4708
        %v4741 = vmul.f32 %v4631, %v4709
        %v4742 = vmul.f32 %v4634, %v4710
        %v4743 = vmul.f32 %v4639, %v4711
        %v4744 = vmul.f32 %v4642, %v4712
        %v4745 = vmul.f32 %v4647, %v4713
        %v4746 = vmul.f32 %v4650, %v4714
        %v4747 = vmul.f32 %v4655, %v4715
        %v4748 = vmul.f32 %v4658, %v4716
        %v4749 = vmul.f32 %v4663, %v4717
        %v4750 = vmul.f32 %v4666, %v4718
        %v4751 = vmul.f32 %v4671, %v4719
        %v4752 = vmul.f32 %v4674, %v4720
        %v4753 = vmul.f32 %v4679, %v4721
        %v4754 = vmul.f32 %v4682, %v4722
        %v4755 = vmul.f32 %v4687, %v4723
        %v4756 = vmul.f32 %v4690, %v4724
        %v4757 = vpack.c.bf16 %v4726, %v4725
        %v4758 = vpack.c.bf16 %v4728, %v4727
        %v4759 = vpack.c.bf16 %v4730, %v4729
        %v4760 = vpack.c.bf16 %v4732, %v4731
        %v4761 = vpack.c.bf16 %v4734, %v4733
        %v4762 = vpack.c.bf16 %v4736, %v4735
        %v4763 = vpack.c.bf16 %v4738, %v4737
        %v4764 = vpack.c.bf16 %v4740, %v4739
        %v4765 = vpack.c.bf16 %v4742, %v4741
        %v4766 = vpack.c.bf16 %v4744, %v4743
        %v4767 = vpack.c.bf16 %v4746, %v4745
        %v4768 = vpack.c.bf16 %v4748, %v4747
        %v4769 = vpack.c.bf16 %v4750, %v4749
        %v4770 = vpack.c.bf16 %v4752, %v4751
        %v4771 = vpack.c.bf16 %v4754, %v4753
        %v4772 = vpack.c.bf16 %v4756, %v4755
        %v4789 = vunpack.c.l.b16 %v4757
        %v4790 = vunpack.c.h.b16 %v4757
        %v4791 = vunpack.c.l.b16 %v4758
        %v4792 = vunpack.c.h.b16 %v4758
        %v4793 = vunpack.c.l.b16 %v4759
        %v4794 = vunpack.c.h.b16 %v4759
        %v4795 = vunpack.c.l.b16 %v4760
        %v4796 = vunpack.c.h.b16 %v4760
        %v4797 = vunpack.c.l.b16 %v4761
        %v4798 = vunpack.c.h.b16 %v4761
        %v4799 = vunpack.c.l.b16 %v4762
        %v4800 = vunpack.c.h.b16 %v4762
        %v4801 = vunpack.c.l.b16 %v4763
        %v4802 = vunpack.c.h.b16 %v4763
        %v4803 = vunpack.c.l.b16 %v4764
        %v4804 = vunpack.c.h.b16 %v4764
        %v4805 = vunpack.c.l.b16 %v4765
        %v4806 = vunpack.c.h.b16 %v4765
        %v4807 = vunpack.c.l.b16 %v4766
        %v4808 = vunpack.c.h.b16 %v4766
        %v4809 = vunpack.c.l.b16 %v4767
        %v4810 = vunpack.c.h.b16 %v4767
        %v4811 = vunpack.c.l.b16 %v4768
        %v4812 = vunpack.c.h.b16 %v4768
        %v4813 = vunpack.c.l.b16 %v4769
        %v4814 = vunpack.c.h.b16 %v4769
        %v4815 = vunpack.c.l.b16 %v4770
        %v4816 = vunpack.c.h.b16 %v4770
        %v4817 = vunpack.c.l.b16 %v4771
        %v4818 = vunpack.c.h.b16 %v4771
        %v4819 = vunpack.c.l.b16 %v4772
        %v4820 = vunpack.c.h.b16 %v4772
        %v4821 = vpack.c.b16 %v4789, %v4789
        %v4822 = vpack.c.b16 %v4790, %v4790
        %v4823 = vpack.c.b16 %v4791, %v4791
        %v4824 = vpack.c.b16 %v4792, %v4792
        %v4825 = vpack.c.b16 %v4793, %v4793
        %v4826 = vpack.c.b16 %v4794, %v4794
        %v4827 = vpack.c.b16 %v4795, %v4795
        %v4828 = vpack.c.b16 %v4796, %v4796
        %v4829 = vpack.c.b16 %v4797, %v4797
        %v4830 = vpack.c.b16 %v4798, %v4798
        %v4831 = vpack.c.b16 %v4799, %v4799
        %v4832 = vpack.c.b16 %v4800, %v4800
        %v4833 = vpack.c.b16 %v4801, %v4801
        %v4834 = vpack.c.b16 %v4802, %v4802
        %v4835 = vpack.c.b16 %v4803, %v4803
        %v4836 = vpack.c.b16 %v4804, %v4804
        %v4837 = vpack.c.b16 %v4805, %v4805
        %v4838 = vpack.c.b16 %v4806, %v4806
        %v4839 = vpack.c.b16 %v4807, %v4807
        %v4840 = vpack.c.b16 %v4808, %v4808
        %v4841 = vpack.c.b16 %v4809, %v4809
        %v4842 = vpack.c.b16 %v4810, %v4810
        %v4843 = vpack.c.b16 %v4811, %v4811
        %v4844 = vpack.c.b16 %v4812, %v4812
        %v4845 = vpack.c.b16 %v4813, %v4813
        %v4846 = vpack.c.b16 %v4814, %v4814
        %v4847 = vpack.c.b16 %v4815, %v4815
        %v4848 = vpack.c.b16 %v4816, %v4816
        %v4849 = vpack.c.b16 %v4817, %v4817
        %v4850 = vpack.c.b16 %v4818, %v4818
        %v4851 = vpack.c.b16 %v4819, %v4819
        %v4852 = vpack.c.b16 %v4820, %v4820
        %4853 = vrot.lane.b32.xlu0 %v4821, 96
        %v4854 = vpop.permute.xlu0 %4853
        %4855 = vrot.lane.b32.xlu0 %v4822, 96
        %v4856 = vpop.permute.xlu0 %4855
        %4857 = vrot.lane.b32.xlu0 %v4823, 96
        %v4858 = vpop.permute.xlu0 %4857
        %4859 = vrot.lane.b32.xlu0 %v4824, 96
        %v4860 = vpop.permute.xlu0 %4859
        %4861 = vrot.lane.b32.xlu0 %v4825, 96
        %v4862 = vpop.permute.xlu0 %4861
        %4863 = vrot.lane.b32.xlu0 %v4826, 96
        %v4864 = vpop.permute.xlu0 %4863
        %4865 = vrot.lane.b32.xlu0 %v4827, 96
        %v4866 = vpop.permute.xlu0 %4865
        %4867 = vrot.lane.b32.xlu0 %v4828, 96
        %v4868 = vpop.permute.xlu0 %4867
        %4869 = vrot.lane.b32.xlu0 %v4829, 96
        %v4870 = vpop.permute.xlu0 %4869
        %4871 = vrot.lane.b32.xlu0 %v4830, 96
        %v4872 = vpop.permute.xlu0 %4871
        %4873 = vrot.lane.b32.xlu0 %v4831, 96
        %v4874 = vpop.permute.xlu0 %4873
        %4875 = vrot.lane.b32.xlu0 %v4832, 96
        %v4876 = vpop.permute.xlu0 %4875
        %4877 = vrot.lane.b32.xlu0 %v4833, 96
        %v4878 = vpop.permute.xlu0 %4877
        %4879 = vrot.lane.b32.xlu0 %v4834, 96
        %v4880 = vpop.permute.xlu0 %4879
        %4881 = vrot.lane.b32.xlu0 %v4835, 96
        %v4882 = vpop.permute.xlu0 %4881
        %4883 = vrot.lane.b32.xlu0 %v4836, 96
        %v4884 = vpop.permute.xlu0 %4883
        %4885 = vrot.lane.b32.xlu0 %v4837, 96
        %v4886 = vpop.permute.xlu0 %4885
        %4887 = vrot.lane.b32.xlu0 %v4838, 96
        %v4888 = vpop.permute.xlu0 %4887
        %4889 = vrot.lane.b32.xlu0 %v4839, 96
        %v4890 = vpop.permute.xlu0 %4889
        %4891 = vrot.lane.b32.xlu0 %v4840, 96
        %v4892 = vpop.permute.xlu0 %4891
        %4893 = vrot.lane.b32.xlu0 %v4841, 96
        %v4894 = vpop.permute.xlu0 %4893
        %4895 = vrot.lane.b32.xlu0 %v4842, 96
        %v4896 = vpop.permute.xlu0 %4895
        %4897 = vrot.lane.b32.xlu0 %v4843, 96
        %v4898 = vpop.permute.xlu0 %4897
        %4899 = vrot.lane.b32.xlu0 %v4844, 96
        %v4900 = vpop.permute.xlu0 %4899
        %4901 = vrot.lane.b32.xlu0 %v4845, 96
        %v4902 = vpop.permute.xlu0 %4901
        %4903 = vrot.lane.b32.xlu0 %v4846, 96
        %v4904 = vpop.permute.xlu0 %4903
        %4905 = vrot.lane.b32.xlu0 %v4847, 96
        %v4906 = vpop.permute.xlu0 %4905
        %4907 = vrot.lane.b32.xlu0 %v4848, 96
        %v4908 = vpop.permute.xlu0 %4907
        %4909 = vrot.lane.b32.xlu0 %v4849, 96
        %v4910 = vpop.permute.xlu0 %4909
        %4911 = vrot.lane.b32.xlu0 %v4850, 96
        %v4912 = vpop.permute.xlu0 %4911
        %4913 = vrot.lane.b32.xlu0 %v4851, 96
        %v4914 = vpop.permute.xlu0 %4913
        %4915 = vrot.lane.b32.xlu0 %v4852, 96
        %v4916 = vpop.permute.xlu0 %4915
        %vm4949 = vcmask 1044224
        %4950 = vst.msk [vmem:[#allocation2] sm:$0xf] %vm4949, %v4854
        %4951 = vst.msk [vmem:[#allocation2 + $0x4] sm:$0xf] %vm4949, %v4856
        %4952 = vst.msk [vmem:[#allocation2 + $0x8] sm:$0xf] %vm4949, %v4858
        %4953 = vst.msk [vmem:[#allocation2 + $0xc] sm:$0xf] %vm4949, %v4860
        %4954 = vst.msk [vmem:[#allocation2 + $0x10] sm:$0xf] %vm4949, %v4862
        %4955 = vst.msk [vmem:[#allocation2 + $0x14] sm:$0xf] %vm4949, %v4864
        %4956 = vst.msk [vmem:[#allocation2 + $0x18] sm:$0xf] %vm4949, %v4866
        %4957 = vst.msk [vmem:[#allocation2 + $0x1c] sm:$0xf] %vm4949, %v4868
        %4958 = vst.msk [vmem:[#allocation2 + $0x20] sm:$0xf] %vm4949, %v4870
        %4959 = vst.msk [vmem:[#allocation2 + $0x24] sm:$0xf] %vm4949, %v4872
        %4960 = vst.msk [vmem:[#allocation2 + $0x28] sm:$0xf] %vm4949, %v4874
        %4961 = vst.msk [vmem:[#allocation2 + $0x2c] sm:$0xf] %vm4949, %v4876
        %4962 = vst.msk [vmem:[#allocation2 + $0x30] sm:$0xf] %vm4949, %v4878
        %4963 = vst.msk [vmem:[#allocation2 + $0x34] sm:$0xf] %vm4949, %v4880
        %4964 = vst.msk [vmem:[#allocation2 + $0x38] sm:$0xf] %vm4949, %v4882
        %4965 = vst.msk [vmem:[#allocation2 + $0x3c] sm:$0xf] %vm4949, %v4884
        %4966 = vst.msk [vmem:[#allocation2 + $0x40] sm:$0xf] %vm4949, %v4886
        %4967 = vst.msk [vmem:[#allocation2 + $0x44] sm:$0xf] %vm4949, %v4888
        %4968 = vst.msk [vmem:[#allocation2 + $0x48] sm:$0xf] %vm4949, %v4890
        %4969 = vst.msk [vmem:[#allocation2 + $0x4c] sm:$0xf] %vm4949, %v4892
        %4970 = vst.msk [vmem:[#allocation2 + $0x50] sm:$0xf] %vm4949, %v4894
        %4971 = vst.msk [vmem:[#allocation2 + $0x54] sm:$0xf] %vm4949, %v4896
        %4972 = vst.msk [vmem:[#allocation2 + $0x58] sm:$0xf] %vm4949, %v4898
        %4973 = vst.msk [vmem:[#allocation2 + $0x5c] sm:$0xf] %vm4949, %v4900
        %4974 = vst.msk [vmem:[#allocation2 + $0x60] sm:$0xf] %vm4949, %v4902
        %4975 = vst.msk [vmem:[#allocation2 + $0x64] sm:$0xf] %vm4949, %v4904
        %4976 = vst.msk [vmem:[#allocation2 + $0x68] sm:$0xf] %vm4949, %v4906
        %4977 = vst.msk [vmem:[#allocation2 + $0x6c] sm:$0xf] %vm4949, %v4908
        %4978 = vst.msk [vmem:[#allocation2 + $0x70] sm:$0xf] %vm4949, %v4910
        %4979 = vst.msk [vmem:[#allocation2 + $0x74] sm:$0xf] %vm4949, %v4912
        %4980 = vst.msk [vmem:[#allocation2 + $0x78] sm:$0xf] %vm4949, %v4914
        %4981 = vst.msk [vmem:[#allocation2 + $0x7c] sm:$0xf] %vm4949, %v4916
        %v4982 = vld [vmem:[#allocation2] sm:$0xf]
        %v4983 = vld [vmem:[#allocation2 + $0x4] sm:$0xf]
        %v4984 = vld [vmem:[#allocation2 + $0x8] sm:$0xf]
        %v4985 = vld [vmem:[#allocation2 + $0xc] sm:$0xf]
        %v4986 = vld [vmem:[#allocation2 + $0x10] sm:$0xf]
        %v4987 = vld [vmem:[#allocation2 + $0x14] sm:$0xf]
        %v4988 = vld [vmem:[#allocation2 + $0x18] sm:$0xf]
        %v4989 = vld [vmem:[#allocation2 + $0x1c] sm:$0xf]
        %v4990 = vld [vmem:[#allocation2 + $0x20] sm:$0xf]
        %v4991 = vld [vmem:[#allocation2 + $0x24] sm:$0xf]
        %v4992 = vld [vmem:[#allocation2 + $0x28] sm:$0xf]
        %v4993 = vld [vmem:[#allocation2 + $0x2c] sm:$0xf]
        %v4994 = vld [vmem:[#allocation2 + $0x30] sm:$0xf]
        %v4995 = vld [vmem:[#allocation2 + $0x34] sm:$0xf]
        %v4996 = vld [vmem:[#allocation2 + $0x38] sm:$0xf]
        %v4997 = vld [vmem:[#allocation2 + $0x3c] sm:$0xf]
        %v4998 = vld [vmem:[#allocation2 + $0x40] sm:$0xf]
        %v4999 = vld [vmem:[#allocation2 + $0x44] sm:$0xf]
        %v5000 = vld [vmem:[#allocation2 + $0x48] sm:$0xf]
        %v5001 = vld [vmem:[#allocation2 + $0x4c] sm:$0xf]
        %v5002 = vld [vmem:[#allocation2 + $0x50] sm:$0xf]
        %v5003 = vld [vmem:[#allocation2 + $0x54] sm:$0xf]
        %v5004 = vld [vmem:[#allocation2 + $0x58] sm:$0xf]
        %v5005 = vld [vmem:[#allocation2 + $0x5c] sm:$0xf]
        %v5006 = vld [vmem:[#allocation2 + $0x60] sm:$0xf]
        %v5007 = vld [vmem:[#allocation2 + $0x64] sm:$0xf]
        %v5008 = vld [vmem:[#allocation2 + $0x68] sm:$0xf]
        %v5009 = vld [vmem:[#allocation2 + $0x6c] sm:$0xf]
        %v5010 = vld [vmem:[#allocation2 + $0x70] sm:$0xf]
        %v5011 = vld [vmem:[#allocation2 + $0x74] sm:$0xf]
        %v5012 = vld [vmem:[#allocation2 + $0x78] sm:$0xf]
        %v5013 = vld [vmem:[#allocation2 + $0x7c] sm:$0xf]
        %v5014 = vld [vmem:[#allocation11] sm:$0xf]
        %v5015 = vld [vmem:[#allocation11 + $0x4] sm:$0xf]
        %v5016 = vld [vmem:[#allocation11 + $0x8] sm:$0xf]
        %v5017 = vld [vmem:[#allocation11 + $0xc] sm:$0xf]
        %v5018 = vld [vmem:[#allocation11 + $0x10] sm:$0xf]
        %v5019 = vld [vmem:[#allocation11 + $0x14] sm:$0xf]
        %v5020 = vld [vmem:[#allocation11 + $0x18] sm:$0xf]
        %v5021 = vld [vmem:[#allocation11 + $0x1c] sm:$0xf]
        %v5022 = vld [vmem:[#allocation11 + $0x20] sm:$0xf]
        %v5023 = vld [vmem:[#allocation11 + $0x24] sm:$0xf]
        %v5024 = vld [vmem:[#allocation11 + $0x28] sm:$0xf]
        %v5025 = vld [vmem:[#allocation11 + $0x2c] sm:$0xf]
        %v5026 = vld [vmem:[#allocation11 + $0x30] sm:$0xf]
        %v5027 = vld [vmem:[#allocation11 + $0x34] sm:$0xf]
        %v5028 = vld [vmem:[#allocation11 + $0x38] sm:$0xf]
        %v5029 = vld [vmem:[#allocation11 + $0x3c] sm:$0xf]
        %v5030 = vld [vmem:[%s7] sm:$0x1]
        %v5032 = vlaneseq
        %v5033 = vshrl.u32 %v5032, 7
        %v5034 = vsub.s32 0, %v5033
        %v5035 = vrot.slane %v5030, %v5034
        %v5069 = vunpack.c.l.b16 %v4982
        %v5070 = vunpack.c.l.b16 %v4983
        %v5071 = vunpack.c.l.b16 %v4984
        %v5072 = vunpack.c.l.b16 %v4985
        %v5073 = vunpack.c.l.b16 %v4986
        %v5074 = vunpack.c.l.b16 %v4987
        %v5075 = vunpack.c.l.b16 %v4988
        %v5076 = vunpack.c.l.b16 %v4989
        %v5077 = vunpack.c.l.b16 %v4990
        %v5078 = vunpack.c.l.b16 %v4991
        %v5079 = vunpack.c.l.b16 %v4992
        %v5080 = vunpack.c.l.b16 %v4993
        %v5081 = vunpack.c.l.b16 %v4994
        %v5082 = vunpack.c.l.b16 %v4995
        %v5083 = vunpack.c.l.b16 %v4996
        %v5084 = vunpack.c.l.b16 %v4997
        %v5085 = vunpack.c.l.b16 %v4998
        %v5086 = vunpack.c.l.b16 %v4999
        %v5087 = vunpack.c.l.b16 %v5000
        %v5088 = vunpack.c.l.b16 %v5001
        %v5089 = vunpack.c.l.b16 %v5002
        %v5090 = vunpack.c.l.b16 %v5003
        %v5091 = vunpack.c.l.b16 %v5004
        %v5092 = vunpack.c.l.b16 %v5005
        %v5093 = vunpack.c.l.b16 %v5006
        %v5094 = vunpack.c.l.b16 %v5007
        %v5095 = vunpack.c.l.b16 %v5008
        %v5096 = vunpack.c.l.b16 %v5009
        %v5097 = vunpack.c.l.b16 %v5010
        %v5098 = vunpack.c.l.b16 %v5011
        %v5099 = vunpack.c.l.b16 %v5012
        %v5100 = vunpack.c.l.b16 %v5013
        %v5101 = vpack.c.b16 %v5070, %v5069
        %v5102 = vpack.c.b16 %v5072, %v5071
        %v5103 = vpack.c.b16 %v5074, %v5073
        %v5104 = vpack.c.b16 %v5076, %v5075
        %v5105 = vpack.c.b16 %v5078, %v5077
        %v5106 = vpack.c.b16 %v5080, %v5079
        %v5107 = vpack.c.b16 %v5082, %v5081
        %v5108 = vpack.c.b16 %v5084, %v5083
        %v5109 = vpack.c.b16 %v5086, %v5085
        %v5110 = vpack.c.b16 %v5088, %v5087
        %v5111 = vpack.c.b16 %v5090, %v5089
        %v5112 = vpack.c.b16 %v5092, %v5091
        %v5113 = vpack.c.b16 %v5094, %v5093
        %v5114 = vpack.c.b16 %v5096, %v5095
        %v5115 = vpack.c.b16 %v5098, %v5097
        %v5116 = vpack.c.b16 %v5100, %v5099
        %v5149 = vunpack.c.l.b16 %v5014
        %v5150 = vunpack.c.l.b16 %v5015
        %v5151 = vunpack.c.l.b16 %v5016
        %v5152 = vunpack.c.l.b16 %v5017
        %v5153 = vunpack.c.l.b16 %v5018
        %v5154 = vunpack.c.l.b16 %v5019
        %v5155 = vunpack.c.l.b16 %v5020
        %v5156 = vunpack.c.l.b16 %v5021
        %v5157 = vunpack.c.l.b16 %v5022
        %v5158 = vunpack.c.l.b16 %v5023
        %v5159 = vunpack.c.l.b16 %v5024
        %v5160 = vunpack.c.l.b16 %v5025
        %v5161 = vunpack.c.l.b16 %v5026
        %v5162 = vunpack.c.l.b16 %v5027
        %v5163 = vunpack.c.l.b16 %v5028
        %v5164 = vunpack.c.l.b16 %v5029
        %v5165 = vpack.c.b16 %v5150, %v5149
        %v5166 = vpack.c.b16 %v5152, %v5151
        %v5167 = vpack.c.b16 %v5154, %v5153
        %v5168 = vpack.c.b16 %v5156, %v5155
        %v5169 = vpack.c.b16 %v5158, %v5157
        %v5170 = vpack.c.b16 %v5160, %v5159
        %v5171 = vpack.c.b16 %v5162, %v5161
        %v5172 = vpack.c.b16 %v5164, %v5163
        %5181 = vmatprep.subr.bf16.mxu0 0
        %5182 = vmatpush1.bf16.msra.mxu0 %v5172
        %5183 = vmatprep.subr.bf16.mxu0 0
        %5184 = vmatpush1.bf16.msra.mxu0 %v5171
        %5185 = vmatprep.subr.bf16.mxu0 0
        %5186 = vmatpush1.bf16.msra.mxu0 %v5170
        %5187 = vmatprep.subr.bf16.mxu0 0
        %5188 = vmatpush1.bf16.msra.mxu0 %v5169
        %5189 = vmatprep.subr.bf16.mxu0 0
        %5190 = vmatpush1.bf16.msra.mxu0 %v5168
        %5191 = vmatprep.subr.bf16.mxu0 0
        %5192 = vmatpush1.bf16.msra.mxu0 %v5167
        %5193 = vmatprep.subr.bf16.mxu0 0
        %5194 = vmatpush1.bf16.msra.mxu0 %v5166
        %5195 = vmatprep.subr.bf16.mxu0 0
        %5196 = vmatpush1.bf16.msra.mxu0 %v5165
        %5197 = vmatprep.subr.bf16.mxu0 0
        %5198 = vmatpush2.bf16.msra.mxu0 0
        %5199 = vmatprep.subr.bf16.mxu0 0
        %5200 = vmatpush2.bf16.msra.mxu0 0
        %5201 = vmatprep.subr.bf16.mxu0 0
        %5202 = vmatpush2.bf16.msra.mxu0 0
        %5203 = vmatprep.subr.bf16.mxu0 0
        %5204 = vmatpush2.bf16.msra.mxu0 0
        %5205 = vmatprep.subr.bf16.mxu0 0
        %5206 = vmatpush2.bf16.msra.mxu0 0
        %5207 = vmatprep.subr.bf16.mxu0 0
        %5208 = vmatpush2.bf16.msra.mxu0 0
        %5209 = vmatprep.subr.bf16.mxu0 0
        %5210 = vmatpush2.bf16.msra.mxu0 0
        %5211 = vmatprep.subr.bf16.mxu0 0
        %5212 = vmatpush2.bf16.msra.mxu0 0
        %5213 = vmatprep.mubr.bf16.mxu0 0
        %5214 = vmatmul.mubr.bf16.gmra.mxu0 %v5101
        %v5215 = vpop.f32.mrf.mxu0
        %v5216 = vadd.f32 %v5035, %v5215
        %v5217 = vpop.f32.mrf.mxu0
        %v5218 = vpop.f32.mrf.mxu0
        %v5219 = vadd.f32 %v5035, %v5218
        %v5220 = vpop.f32.mrf.mxu0
        %5221 = vmatprep.mubr.bf16.mxu0 0
        %5222 = vmatmul.mubr.bf16.gmra.mxu0 %v5102
        %v5223 = vpop.f32.mrf.mxu0
        %v5224 = vadd.f32 %v5035, %v5223
        %v5225 = vpop.f32.mrf.mxu0
        %v5226 = vpop.f32.mrf.mxu0
        %v5227 = vadd.f32 %v5035, %v5226
        %v5228 = vpop.f32.mrf.mxu0
        %5229 = vmatprep.mubr.bf16.mxu0 0
        %5230 = vmatmul.mubr.bf16.gmra.mxu0 %v5103
        %v5231 = vpop.f32.mrf.mxu0
        %v5232 = vadd.f32 %v5035, %v5231
        %v5233 = vpop.f32.mrf.mxu0
        %v5234 = vpop.f32.mrf.mxu0
        %v5235 = vadd.f32 %v5035, %v5234
        %v5236 = vpop.f32.mrf.mxu0
        %5237 = vmatprep.mubr.bf16.mxu0 0
        %5238 = vmatmul.mubr.bf16.gmra.mxu0 %v5104
        %v5239 = vpop.f32.mrf.mxu0
        %v5240 = vadd.f32 %v5035, %v5239
        %v5241 = vpop.f32.mrf.mxu0
        %v5242 = vpop.f32.mrf.mxu0
        %v5243 = vadd.f32 %v5035, %v5242
        %v5244 = vpop.f32.mrf.mxu0
        %5245 = vmatprep.mubr.bf16.mxu0 0
        %5246 = vmatmul.mubr.bf16.gmra.mxu0 %v5105
        %v5247 = vpop.f32.mrf.mxu0
        %v5248 = vadd.f32 %v5035, %v5247
        %v5249 = vpop.f32.mrf.mxu0
        %v5250 = vpop.f32.mrf.mxu0
        %v5251 = vadd.f32 %v5035, %v5250
        %v5252 = vpop.f32.mrf.mxu0
        %5253 = vmatprep.mubr.bf16.mxu0 0
        %5254 = vmatmul.mubr.bf16.gmra.mxu0 %v5106
        %v5255 = vpop.f32.mrf.mxu0
        %v5256 = vadd.f32 %v5035, %v5255
        %v5257 = vpop.f32.mrf.mxu0
        %v5258 = vpop.f32.mrf.mxu0
        %v5259 = vadd.f32 %v5035, %v5258
        %v5260 = vpop.f32.mrf.mxu0
        %5261 = vmatprep.mubr.bf16.mxu0 0
        %5262 = vmatmul.mubr.bf16.gmra.mxu0 %v5107
        %v5263 = vpop.f32.mrf.mxu0
        %v5264 = vadd.f32 %v5035, %v5263
        %v5265 = vpop.f32.mrf.mxu0
        %v5266 = vpop.f32.mrf.mxu0
        %v5267 = vadd.f32 %v5035, %v5266
        %v5268 = vpop.f32.mrf.mxu0
        %5269 = vmatprep.mubr.bf16.mxu0 0
        %5270 = vmatmul.mubr.bf16.gmra.mxu0 %v5108
        %v5271 = vpop.f32.mrf.mxu0
        %v5272 = vadd.f32 %v5035, %v5271
        %v5273 = vpop.f32.mrf.mxu0
        %v5274 = vpop.f32.mrf.mxu0
        %v5275 = vadd.f32 %v5035, %v5274
        %v5276 = vpop.f32.mrf.mxu0
        %5277 = vmatprep.mubr.bf16.mxu0 0
        %5278 = vmatmul.mubr.bf16.gmra.mxu0 %v5109
        %v5279 = vpop.f32.mrf.mxu0
        %v5280 = vadd.f32 %v5035, %v5279
        %v5281 = vpop.f32.mrf.mxu0
        %v5282 = vpop.f32.mrf.mxu0
        %v5283 = vadd.f32 %v5035, %v5282
        %v5284 = vpop.f32.mrf.mxu0
        %5285 = vmatprep.mubr.bf16.mxu0 0
        %5286 = vmatmul.mubr.bf16.gmra.mxu0 %v5110
        %v5287 = vpop.f32.mrf.mxu0
        %v5288 = vadd.f32 %v5035, %v5287
        %v5289 = vpop.f32.mrf.mxu0
        %v5290 = vpop.f32.mrf.mxu0
        %v5291 = vadd.f32 %v5035, %v5290
        %v5292 = vpop.f32.mrf.mxu0
        %5293 = vmatprep.mubr.bf16.mxu0 0
        %5294 = vmatmul.mubr.bf16.gmra.mxu0 %v5111
        %v5295 = vpop.f32.mrf.mxu0
        %v5296 = vadd.f32 %v5035, %v5295
        %v5297 = vpop.f32.mrf.mxu0
        %v5298 = vpop.f32.mrf.mxu0
        %v5299 = vadd.f32 %v5035, %v5298
        %v5300 = vpop.f32.mrf.mxu0
        %5301 = vmatprep.mubr.bf16.mxu0 0
        %5302 = vmatmul.mubr.bf16.gmra.mxu0 %v5112
        %v5303 = vpop.f32.mrf.mxu0
        %v5304 = vadd.f32 %v5035, %v5303
        %v5305 = vpop.f32.mrf.mxu0
        %v5306 = vpop.f32.mrf.mxu0
        %v5307 = vadd.f32 %v5035, %v5306
        %v5308 = vpop.f32.mrf.mxu0
        %5309 = vmatprep.mubr.bf16.mxu0 0
        %5310 = vmatmul.mubr.bf16.gmra.mxu0 %v5113
        %v5311 = vpop.f32.mrf.mxu0
        %v5312 = vadd.f32 %v5035, %v5311
        %v5313 = vpop.f32.mrf.mxu0
        %v5314 = vpop.f32.mrf.mxu0
        %v5315 = vadd.f32 %v5035, %v5314
        %v5316 = vpop.f32.mrf.mxu0
        %5317 = vmatprep.mubr.bf16.mxu0 0
        %5318 = vmatmul.mubr.bf16.gmra.mxu0 %v5114
        %v5319 = vpop.f32.mrf.mxu0
        %v5320 = vadd.f32 %v5035, %v5319
        %v5321 = vpop.f32.mrf.mxu0
        %v5322 = vpop.f32.mrf.mxu0
        %v5323 = vadd.f32 %v5035, %v5322
        %v5324 = vpop.f32.mrf.mxu0
        %5325 = vmatprep.mubr.bf16.mxu0 0
        %5326 = vmatmul.mubr.bf16.gmra.mxu0 %v5115
        %v5327 = vpop.f32.mrf.mxu0
        %v5328 = vadd.f32 %v5035, %v5327
        %v5329 = vpop.f32.mrf.mxu0
        %v5330 = vpop.f32.mrf.mxu0
        %v5331 = vadd.f32 %v5035, %v5330
        %v5332 = vpop.f32.mrf.mxu0
        %5333 = vmatprep.mubr.bf16.mxu0 0
        %5334 = vmatmul.mubr.bf16.gmra.mxu0 %v5116
        %v5335 = vpop.f32.mrf.mxu0
        %v5336 = vadd.f32 %v5035, %v5335
        %v5337 = vpop.f32.mrf.mxu0
        %v5338 = vpop.f32.mrf.mxu0
        %v5339 = vadd.f32 %v5035, %v5338
        %v5340 = vpop.f32.mrf.mxu0
        %5341 = vdwg.mxu0
        %5342 = vst [vmem:[%s424] sm:$0xff] %v5216
        %5343 = vst [vmem:[%s424 + $0x8] sm:$0xff] %v5219
        %5344 = vst [vmem:[%s424 + $0x10] sm:$0xff] %v5224
        %5345 = vst [vmem:[%s424 + $0x18] sm:$0xff] %v5227
        %5346 = vst [vmem:[%s424 + $0x20] sm:$0xff] %v5232
        %5347 = vst [vmem:[%s424 + $0x28] sm:$0xff] %v5235
        %5348 = vst [vmem:[%s424 + $0x30] sm:$0xff] %v5240
        %5349 = vst [vmem:[%s424 + $0x38] sm:$0xff] %v5243
        %5350 = vst [vmem:[%s424 + $0x40] sm:$0xff] %v5248
        %5351 = vst [vmem:[%s424 + $0x48] sm:$0xff] %v5251
        %5352 = vst [vmem:[%s424 + $0x50] sm:$0xff] %v5256
        %5353 = vst [vmem:[%s424 + $0x58] sm:$0xff] %v5259
        %5354 = vst [vmem:[%s424 + $0x60] sm:$0xff] %v5264
        %5355 = vst [vmem:[%s424 + $0x68] sm:$0xff] %v5267
        %5356 = vst [vmem:[%s424 + $0x70] sm:$0xff] %v5272
        %5357 = vst [vmem:[%s424 + $0x78] sm:$0xff] %v5275
        %5358 = vst [vmem:[%s424 + $0x80] sm:$0xff] %v5280
        %5359 = vst [vmem:[%s424 + $0x88] sm:$0xff] %v5283
        %5360 = vst [vmem:[%s424 + $0x90] sm:$0xff] %v5288
        %5361 = vst [vmem:[%s424 + $0x98] sm:$0xff] %v5291
        %5362 = vst [vmem:[%s424 + $0xa0] sm:$0xff] %v5296
        %5363 = vst [vmem:[%s424 + $0xa8] sm:$0xff] %v5299
        %5364 = vst [vmem:[%s424 + $0xb0] sm:$0xff] %v5304
        %5365 = vst [vmem:[%s424 + $0xb8] sm:$0xff] %v5307
        %5366 = vst [vmem:[%s424 + $0xc0] sm:$0xff] %v5312
        %5367 = vst [vmem:[%s424 + $0xc8] sm:$0xff] %v5315
        %5368 = vst [vmem:[%s424 + $0xd0] sm:$0xff] %v5320
        %5369 = vst [vmem:[%s424 + $0xd8] sm:$0xff] %v5323
        %5370 = vst [vmem:[%s424 + $0xe0] sm:$0xff] %v5328
        %5371 = vst [vmem:[%s424 + $0xe8] sm:$0xff] %v5331
        %5372 = vst [vmem:[%s424 + $0xf0] sm:$0xff] %v5336
        %5373 = vst [vmem:[%s424 + $0xf8] sm:$0xff] %v5339
        %s5374 = sand.u32 %s231, 1
        %s5375 = scalar_lea.sflag [#allocation5], %s5374
        %s5376 = sand.u32 %s231, 1
        %s5377 = smul.addr %s5376, 256
        %s5378 = scalar_lea.vmem [#allocation12], %s5377
        // Predicated region
        $region73: #{tpu_custom_call.1} parent=51 // pred_check
          %p5379 = pneg %p241
        $region74: #{tpu_custom_call.1} parent=51 // pred_check_branch
          %5381 = sbr.rel (%p5379) target = $region76
        $region75: #{tpu_custom_call.1} parent=51 // pred_region
          %s5382 = smul.u32 32, %s34
          %s5384 = ssub.s32 4096, 4096
          %5385 = vsyncadd %s5375, %s5384
          %s5386 = smul.addr %s33, 64
          %s5387 = sadd.s32 %s5382, %s5386
          %s5388 = smul.addr %s5387, 128
          %s5389 = scalar_lea.hbm %s8, %s5388
          %s5390 = sshll.u32 %s5378, 4
          %s5391 = int_to_ptr.vmem [resolvable:$true] %s5390
          %5396 = dma.vmem_to_hbm [thread:$0]  %s5391, 4096, %s5389, %s5375, 128, 128, 8
        $region76: #{tpu_custom_call.1} parent=51 // pred_fallthru
          _
      $region52: #{tpu_custom_call.1} parent=5 // pred_fallthru
        _
      %p5397 = scmp.le.s32.totalorder 2, %s24
      // Predicated region
      $region77: #{tpu_custom_call.1} parent=5 // pred_check
        %p5398 = pneg %p5397
      $region78: #{tpu_custom_call.1} parent=5 // pred_check_branch
        %5400 = sbr.rel (%p5398) target = $region80
      $region79: #{tpu_custom_call.1} parent=5 // pred_region
        %s5401 = ssub.s32 %s24, 2
        // Predicated region
        $region81: #{tpu_custom_call.1} parent=79 // pred_check
          %p5402 = pneg %p247
        $region82: #{tpu_custom_call.1} parent=79 // pred_check_branch
          %5404 = sbr.rel (%p5402) target = $region84
        $region83: #{tpu_custom_call.1} parent=79 // pred_region
          %s5405 = sand.u32 %s232, 1
          %s5406 = scalar_lea.sflag [#allocation5], %s5405
          %s5407 = sand.u32 %s232, 1
          %s5408 = smul.addr %s5407, 256
          %s5409 = scalar_lea.vmem [#allocation12], %s5408
          %5410 = dma.done %s5406, 4096
        $region84: #{tpu_custom_call.1} parent=79 // pred_fallthru
          _
      $region80: #{tpu_custom_call.1} parent=5 // pred_fallthru
        _
    $region6: #{tpu_custom_call.1} parent=1 // loop_footer
      %s28 = sadd.s32 1, %s24
    $region7: #{tpu_custom_call.1} parent=1 // loop_footer_branch
      %23 = sbr.rel target = $region3
    $region8: #{tpu_custom_call.1} parent=1 // loop_exit
      _
    %5411 = vsyncpa [#allocation4], 1
    %s5412 = scalar_lea.sflag [#allocation4], 1
    %5413 = vsyncpa %s5412, 1
    %5414 = vsyncpa [#allocation7], 1
    %s5415 = scalar_lea.sflag [#allocation7], 1
    %5416 = vsyncpa %s5415, 1
    %5417 = vsyncpa [#allocation10], 1
    %5418 = vsyncpa [#allocation5], 1
    %s5419 = scalar_lea.sflag [#allocation5], 1
    %5420 = vsyncpa %s5419, 1

</llo_original>
